<compile_context>
chip_gen: v5e
topology: v5e:2x2
jax: 0.10.0
libtpu: 0.0.40
codegen_flags: <defaults>
</compile_context>

<pallas_src>
import jax
import jax.numpy as jnp
from jax.experimental import pallas as pl
from jax.experimental.pallas import tpu as pltpu

# ---------------- scaled-down model dims (original values in parens) --------
B = 2
H = W = 8              # spatial size of backbone features[-2]
HG = WG = 4            # spatial size of backbone features[-1]
C_L_IN = 32            # backbone.feature_info[-2]['num_chs']
C_G_IN = 32            # backbone.feature_info[-1]['num_chs']
ATROUS = 64            # (512)  channels of each dilated conv in MultiAtrousModule
FEAT_DIM = 128         # (1024) feature_dim_l_g
ATT_MID = FEAT_DIM     # (1024) SpatialAttention2d conv1 channels
EMB = 64               # (512)  embedding_size
N_CLASSES = 256        # (10000)
DILATIONS = (6, 12, 18)
MAXD = max(DILATIONS)
HW = H * W
HWG = HG * WG
KCOL = 9 * len(DILATIONS) * C_L_IN     # 27 taps * C_L_IN = 864

# TODO(synk): the timm CNN backbone (features_only=True) has no clean Pallas equivalent
# here; its last two feature maps are supplied directly as inputs.

_PASSTHROUGH_KEYS = (
    "att_w1", "att_b1", "att_g", "att_beta", "att_rm", "att_rv", "att_w2", "att_b2",
    "convg_w", "convg_b", "bng_g", "bng_beta", "bng_rm", "bng_rv",
    "neck_w", "neck_b", "neck_g", "neck_beta", "neck_rm", "neck_rv", "prelu_w",
)
_KERNEL_PARAM_KEYS = ("w_fold", "b_fold") + _PASSTHROUGH_KEYS + ("head_wn",)


# ---------------- the single fused kernel ------------------------------------
def _dolg_fused_kernel(
    xlp_ref, xg_ref,                                     # activations
    wf_ref, bf_ref,                                      # folded MultiAtrousModule
    aw1_ref, ab1_ref, ag_ref, abe_ref, arm_ref, arv_ref, aw2_ref, ab2_ref,   # attention
    cgw_ref, cgb_ref, bgg_ref, bgbe_ref, bgrm_ref, bgrv_ref,                 # global branch
    nw_ref, nb_ref, ng_ref, nbe_ref, nrm_ref, nrv_ref, pw_ref,               # neck
    hwn_ref,                                             # pre-normalized head weight (EMB, N)
    emb_ref, conf_ref, cls_ref,                          # outputs
    fused_scr,                                           # VMEM scratch (B, 2*FEAT_DIM)
):
    f32 = jnp.float32

    # ---- local branch: MultiAtrousModule (3 dilated 3x3 convs + cat + 1x1 conv) folded
    # into one im2col matmul; the slab is padded once for the max dilation, every window
    # is a static-offset slice of it.
    rows = []
    for b in range(B):
        cols = []
        for d in DILATIONS:
            base = MAXD - d
            for ky in range(3):
                for kx in range(3):
                    win = xlp_ref[b,
                                  base + ky * d: base + ky * d + H,
                                  base + kx * d: base + kx * d + W, :]
                    cols.append(win.reshape(HW, C_L_IN))
        rows.append(jnp.concatenate(cols, axis=-1))               # (HW, KCOL)
    im2col = jnp.concatenate(rows, axis=0)                        # (B*HW, KCOL)
    xl = jnp.dot(im2col, wf_ref[...], preferred_element_type=f32) + bf_ref[...]
    xl = jnp.maximum(xl, 0.0)                                     # MAM ReLU -> (B*HW, FEAT_DIM)

    # ---- SpatialAttention2d
    # TODO(synk): the reference forward overwrites `x`, so F.normalize would be applied to
    # the 1-channel conv2 output, which makes OrthogonalFusion's bmm shape-invalid; the
    # intended DOLG semantics (normalize the BN output) are implemented instead.
    y = jnp.dot(xl, aw1_ref[...], preferred_element_type=f32) + ab1_ref[...]
    y = (y - arm_ref[...]) * jax.lax.rsqrt(arv_ref[...] + 1e-5) * ag_ref[...] + abe_ref[...]
    fmn = y * jax.lax.rsqrt(jnp.maximum(jnp.sum(y * y, axis=-1, keepdims=True), 1e-24))
    yr = jnp.maximum(y, 0.0)                                                   # ReLU
    z = jnp.sum(yr * aw2_ref[...], axis=-1, keepdims=True) + ab2_ref[...]      # conv2 (1x1)
    att = jnp.where(z > 20.0, z, jnp.log(1.0 + jnp.exp(jnp.minimum(z, 20.0)))) # softplus
    fl = att * fmn                                                # (B*HW, FEAT_DIM)

    # ---- global branch: conv_g (1x1) + BatchNorm2d(eps=1e-3, eval) + SiLU + GeM prep
    g = jnp.dot(xg_ref[...], cgw_ref[...], preferred_element_type=f32) + cgb_ref[...]
    g = (g - bgrm_ref[...]) * jax.lax.rsqrt(bgrv_ref[...] + 1e-3) * bgg_ref[...] + bgbe_ref[...]
    g = g * jax.nn.sigmoid(g)                                     # SiLU
    g = jnp.maximum(g, 1e-6)                                      # GeM clamp(min=eps)
    g = g * g * g                                                 # pow(p), p = 3

    # ---- per-image GeM pool + orthogonal fusion + fusion avg-pool (all VMEM resident)
    for b in range(B):
        gb = g[b * HWG:(b + 1) * HWG, :]                          # (HWG, FEAT_DIM)
        fg = jnp.exp(jnp.log(jnp.mean(gb, axis=0, keepdims=True)) / 3.0)    # GeM pow(1/p)
        flb = fl[b * HW:(b + 1) * HW, :]                          # (HW, FEAT_DIM)
        dotp = jnp.sum(flb * fg, axis=-1, keepdims=True)          # bmm(fg, fl) -> (HW, 1)
        fg_norm = jnp.sqrt(jnp.sum(fg * fg, axis=-1, keepdims=True))        # torch.norm(fg)
        proj = dotp * (fg / fg_norm)                              # fl_proj (reference: /norm once)
        orth_mean = jnp.mean(flb - proj, axis=0, keepdims=True)   # avg-pool of fl_orth
        # avg-pool of the broadcast fg half is fg itself
        fused_scr[pl.ds(b, 1), pl.ds(0, FEAT_DIM)] = orth_mean
        fused_scr[pl.ds(b, 1), pl.ds(FEAT_DIM, FEAT_DIM)] = fg
    fused = fused_scr[...]                                        # (B, 2*FEAT_DIM)

    # ---- neck: Linear + BatchNorm1d(eval, eps=1e-5) + PReLU
    e = jnp.dot(fused, nw_ref[...], preferred_element_type=f32) + nb_ref[...]
    e = (e - nrm_ref[...]) * jax.lax.rsqrt(nrv_ref[...] + 1e-5) * ng_ref[...] + nbe_ref[...]
    emb = jnp.where(e >= 0.0, e, pw_ref[...] * e)
    emb_ref[...] = emb

    # ---- ArcMarginProduct head (weight pre-normalized/pre-transposed) + softmax stats
    fn = emb / jnp.maximum(jnp.sqrt(jnp.sum(emb * emb, axis=-1, keepdims=True)), 1e-12)
    logits = jnp.dot(fn, hwn_ref[...], preferred_element_type=f32)           # cosine (B, N)
    m = jnp.max(logits, axis=-1, keepdims=True)
    denom = jnp.sum(jnp.exp(logits - m), axis=-1, keepdims=True)
    conf_ref[...] = 1.0 / denom                                   # max softmax prob
    idx = jax.lax.broadcasted_iota(jnp.int32, logits.shape, 1).astype(f32)
    cls = jnp.min(jnp.where(logits >= m, idx, f32(N_CLASSES)), axis=-1, keepdims=True)
    cls_ref[...] = cls.astype(jnp.int32)                          # argmax(softmax) == argmax(logits)


# ---------------- forward (glue + one pallas_call) ----------------------------
@jax.jit
def dolg_forward(prep, x_l_nchw, x_g_nchw):
    xl = jnp.transpose(x_l_nchw, (0, 2, 3, 1)).astype(jnp.float32)           # NCHW -> NHWC
    xg = jnp.transpose(x_g_nchw, (0, 2, 3, 1)).astype(jnp.float32).reshape(B * HWG, C_G_IN)
    xlp = jnp.pad(xl, ((0, 0), (MAXD, MAXD), (MAXD, MAXD), (0, 0)))          # pad once (max dilation)

    emb, conf, cls = pl.pallas_call(
        _dolg_fused_kernel,
        out_shape=(jax.ShapeDtypeStruct((B, EMB), jnp.float32),
                   jax.ShapeDtypeStruct((B, 1), jnp.float32),
                   jax.ShapeDtypeStruct((B, 1), jnp.int32)),
        scratch_shapes=[pltpu.VMEM((B, 2 * FEAT_DIM), jnp.float32)],
    )(xlp, xg, *[prep[k] for k in _KERNEL_PARAM_KEYS])

    return {"loss": jnp.zeros((1,), jnp.float32), "target": None,
            "preds_conf": conf[:, 0], "preds_cls": cls[:, 0], "embeddings": emb}


# ---------------- parameters ---------------------------------------------------
def init_params(key):
    keys = jax.random.split(key, 10)
    rn = lambda k, shape, s=0.05: s * jax.random.normal(k, shape, dtype=jnp.float32)
    ones = lambda n: jnp.ones((1, n), jnp.float32)
    zeros = lambda n: jnp.zeros((1, n), jnp.float32)
    p = {}
    for i in range(3):                                        # MultiAtrousModule d0..d2
        p[f"d{i}_w"] = rn(keys[i], (3, 3, C_L_IN, ATROUS))
        p[f"d{i}_b"] = zeros(ATROUS)
    p["mam_w"] = rn(keys[3], (3 * ATROUS, FEAT_DIM)); p["mam_b"] = zeros(FEAT_DIM)
    p["att_w1"] = rn(keys[4], (FEAT_DIM, ATT_MID)); p["att_b1"] = zeros(ATT_MID)
    p["att_g"], p["att_beta"] = ones(ATT_MID), zeros(ATT_MID)
    p["att_rm"], p["att_rv"] = zeros(ATT_MID), ones(ATT_MID)
    p["att_w2"] = rn(keys[5], (1, ATT_MID)); p["att_b2"] = jnp.zeros((1, 1), jnp.float32)
    p["convg_w"] = rn(keys[6], (C_G_IN, FEAT_DIM)); p["convg_b"] = zeros(FEAT_DIM)
    p["bng_g"], p["bng_beta"] = ones(FEAT_DIM), zeros(FEAT_DIM)
    p["bng_rm"], p["bng_rv"] = zeros(FEAT_DIM), ones(FEAT_DIM)
    p["neck_w"] = rn(keys[7], (2 * FEAT_DIM, EMB)); p["neck_b"] = zeros(EMB)
    p["neck_g"], p["neck_beta"] = ones(EMB), zeros(EMB)
    p["neck_rm"], p["neck_rv"] = zeros(EMB), ones(EMB)
    p["prelu_w"] = jnp.full((1, 1), 0.25, jnp.float32)        # PReLU default init
    p["head_w"] = rn(keys[8], (N_CLASSES, EMB), 0.08)         # ArcMarginProduct weight
    return p


def prepare_params(p):
    """One-time (eval) precompute: fold MAM convs + 1x1, pre-normalize ArcFace weight."""
    folds, bias = [], p["mam_b"]
    for i in range(3):
        Wi = p["mam_w"][i * ATROUS:(i + 1) * ATROUS, :]                   # (ATROUS, FEAT_DIM)
        folds.append(jnp.einsum("yxca,af->yxcf", p[f"d{i}_w"], Wi).reshape(9 * C_L_IN, FEAT_DIM))
        bias = bias + p[f"d{i}_b"] @ Wi
    hw = p["head_w"]
    hwn = hw / jnp.maximum(jnp.linalg.norm(hw, axis=1, keepdims=True), 1e-12)
    prep = {k: p[k] for k in _PASSTHROUGH_KEYS}
    prep["w_fold"] = jnp.concatenate(folds, axis=0)                       # (27*C_L_IN, FEAT_DIM)
    prep["b_fold"] = bias                                                 # (1, FEAT_DIM)
    prep["head_wn"] = hwn.T                                               # (EMB, N_CLASSES)
    return prep


# ---------------- pure-JAX reference (correctness check) -----------------------
def _reference_forward(p, x_l_nchw, x_g_nchw):
    xl = jnp.transpose(x_l_nchw, (0, 2, 3, 1)).astype(jnp.float32)
    xg = jnp.transpose(x_g_nchw, (0, 2, 3, 1)).astype(jnp.float32)
    dn = jax.lax.conv_dimension_numbers(xl.shape, p["d0_w"].shape, ("NHWC", "HWIO", "NHWC"))
    outs = []
    for i, d in enumerate(DILATIONS):
        o = jax.lax.conv_general_dilated(xl, p[f"d{i}_w"], (1, 1), "SAME",
                                         rhs_dilation=(d, d), dimension_numbers=dn)
        outs.append(o + p[f"d{i}_b"])
    cat = jnp.concatenate(outs, axis=-1).reshape(B * HW, 3 * ATROUS)
    xm = jnp.maximum(cat @ p["mam_w"] + p["mam_b"], 0.0)
    y = xm @ p["att_w1"] + p["att_b1"]
    y = (y - p["att_rm"]) / jnp.sqrt(p["att_rv"] + 1e-5) * p["att_g"] + p["att_beta"]
    fmn = y / jnp.maximum(jnp.linalg.norm(y, axis=-1, keepdims=True), 1e-12)
    z = jnp.maximum(y, 0.0) @ p["att_w2"].T + p["att_b2"]
    att = jnp.where(z > 20.0, z, jnp.log1p(jnp.exp(jnp.minimum(z, 20.0))))
    fl = (att * fmn).reshape(B, HW, FEAT_DIM)
    g = xg.reshape(B * HWG, C_G_IN) @ p["convg_w"] + p["convg_b"]
    g = (g - p["bng_rm"]) / jnp.sqrt(p["bng_rv"] + 1e-3) * p["bng_g"] + p["bng_beta"]
    g = g * jax.nn.sigmoid(g)
    g = jnp.maximum(g, 1e-6) ** 3
    fg = jnp.mean(g.reshape(B, HWG, FEAT_DIM), axis=1) ** (1.0 / 3.0)
    dotp = jnp.sum(fl * fg[:, None, :], axis=-1, keepdims=True)
    fg_norm = jnp.linalg.norm(fg, axis=-1, keepdims=True)
    proj = dotp * (fg[:, None, :] / fg_norm[:, None, :])
    fused = jnp.concatenate([jnp.mean(fl - proj, axis=1), fg], axis=-1)
    e = fused @ p["neck_w"] + p["neck_b"]
    e = (e - p["neck_rm"]) / jnp.sqrt(p["neck_rv"] + 1e-5) * p["neck_g"] + p["neck_beta"]
    emb = jnp.where(e >= 0.0, e, p["prelu_w"] * e)
    fn = emb / jnp.maximum(jnp.linalg.norm(emb, axis=-1, keepdims=True), 1e-12)
    wn = p["head_w"] / jnp.maximum(jnp.linalg.norm(p["head_w"], axis=-1, keepdims=True), 1e-12)
    preds = jax.nn.softmax(fn @ wn.T, axis=-1)
    return emb, jnp.max(preds, axis=1), jnp.argmax(preds, axis=1)


if __name__ == "__main__":
    key = jax.random.PRNGKey(0)
    kp, kl, kg = jax.random.split(key, 3)
    params = init_params(kp)
    prep = prepare_params(params)            # one-time eval-constant precompute

    # synthetic backbone feature maps (PyTorch NCHW convention)
    x_l = jax.random.normal(kl, (B, C_L_IN, H, W), jnp.float32)      # features[-2]
    x_g = jax.random.normal(kg, (B, C_G_IN, HG, WG), jnp.float32)    # features[-1]

    out = jax.block_until_ready(dolg_forward(prep, x_l, x_g))

    assert out["embeddings"].shape == (B, EMB)
    assert out["preds_conf"].shape == (B,) and out["preds_cls"].shape == (B,)
    assert bool(jnp.all(jnp.isfinite(out["embeddings"])))
    assert bool(jnp.all(jnp.isfinite(out["preds_conf"])))

    emb_r, conf_r, cls_r = _reference_forward(params, x_l, x_g)
    assert bool(jnp.max(jnp.abs(out["embeddings"] - emb_r)) < 1e-3)
    assert bool(jnp.max(jnp.abs(out["preds_conf"] - conf_r)) < 1e-4)
    assert bool(jnp.all(out["preds_cls"] == cls_r))

    print("KERNEL_OK")
</pallas_src>

<mosaic_0001>
module attributes {stable_mosaic.version = 11 : i64} {
  func.func @_dolg_fused_kernel(%arg0: memref<2x44x44x32xf32, #tpu.memory_space<vmem>>, %arg1: memref<32x32xf32, #tpu.memory_space<vmem>>, %arg2: memref<864x128xf32, #tpu.memory_space<vmem>>, %arg3: memref<1x128xf32, #tpu.memory_space<vmem>>, %arg4: memref<128x128xf32, #tpu.memory_space<vmem>>, %arg5: memref<1x128xf32, #tpu.memory_space<vmem>>, %arg6: memref<1x128xf32, #tpu.memory_space<vmem>>, %arg7: memref<1x128xf32, #tpu.memory_space<vmem>>, %arg8: memref<1x128xf32, #tpu.memory_space<vmem>>, %arg9: memref<1x128xf32, #tpu.memory_space<vmem>>, %arg10: memref<1x128xf32, #tpu.memory_space<vmem>>, %arg11: memref<1x1xf32, #tpu.memory_space<vmem>>, %arg12: memref<32x128xf32, #tpu.memory_space<vmem>>, %arg13: memref<1x128xf32, #tpu.memory_space<vmem>>, %arg14: memref<1x128xf32, #tpu.memory_space<vmem>>, %arg15: memref<1x128xf32, #tpu.memory_space<vmem>>, %arg16: memref<1x128xf32, #tpu.memory_space<vmem>>, %arg17: memref<1x128xf32, #tpu.memory_space<vmem>>, %arg18: memref<256x64xf32, #tpu.memory_space<vmem>>, %arg19: memref<1x64xf32, #tpu.memory_space<vmem>>, %arg20: memref<1x64xf32, #tpu.memory_space<vmem>>, %arg21: memref<1x64xf32, #tpu.memory_space<vmem>>, %arg22: memref<1x64xf32, #tpu.memory_space<vmem>>, %arg23: memref<1x64xf32, #tpu.memory_space<vmem>>, %arg24: memref<1x1xf32, #tpu.memory_space<vmem>>, %arg25: memref<64x256xf32, #tpu.memory_space<vmem>>, %arg26: memref<2x64xf32, #tpu.memory_space<vmem>>, %arg27: memref<2x1xf32, #tpu.memory_space<vmem>>, %arg28: memref<2x1xi32, #tpu.memory_space<vmem>>, %arg29: memref<2x256xf32, #tpu.memory_space<vmem>>) attributes {dimension_semantics = [], scalar_prefetch = 0 : i64, scratch_operands = 1 : i64, tpu.core_type = #tpu.core_type<tc>} {
    %c0 = arith.constant 0 : index
    %c12 = arith.constant 12 : index
    %c12_0 = arith.constant 12 : index
    %c0_1 = arith.constant 0 : index
    %0 = vector.load %arg0[%c0, %c12, %c12_0, %c0_1] : memref<2x44x44x32xf32, #tpu.memory_space<vmem>>, vector<1x8x8x32xf32>
    %1 = vector.shape_cast %0 : vector<1x8x8x32xf32> to vector<8x8x32xf32>
    %2 = vector.shape_cast %1 : vector<8x8x32xf32> to vector<64x32xf32>
    %c0_2 = arith.constant 0 : index
    %c12_3 = arith.constant 12 : index
    %c18 = arith.constant 18 : index
    %c0_4 = arith.constant 0 : index
    %3 = vector.load %arg0[%c0_2, %c12_3, %c18, %c0_4] : memref<2x44x44x32xf32, #tpu.memory_space<vmem>>, vector<1x8x8x32xf32>
    %4 = vector.shape_cast %3 : vector<1x8x8x32xf32> to vector<8x8x32xf32>
    %5 = vector.shape_cast %4 : vector<8x8x32xf32> to vector<64x32xf32>
    %c0_5 = arith.constant 0 : index
    %c12_6 = arith.constant 12 : index
    %c24 = arith.constant 24 : index
    %c0_7 = arith.constant 0 : index
    %6 = vector.load %arg0[%c0_5, %c12_6, %c24, %c0_7] : memref<2x44x44x32xf32, #tpu.memory_space<vmem>>, vector<1x8x8x32xf32>
    %7 = vector.shape_cast %6 : vector<1x8x8x32xf32> to vector<8x8x32xf32>
    %8 = vector.shape_cast %7 : vector<8x8x32xf32> to vector<64x32xf32>
    %c0_8 = arith.constant 0 : index
    %c18_9 = arith.constant 18 : index
    %c12_10 = arith.constant 12 : index
    %c0_11 = arith.constant 0 : index
    %9 = vector.load %arg0[%c0_8, %c18_9, %c12_10, %c0_11] : memref<2x44x44x32xf32, #tpu.memory_space<vmem>>, vector<1x8x8x32xf32>
    %10 = vector.shape_cast %9 : vector<1x8x8x32xf32> to vector<8x8x32xf32>
    %11 = vector.shape_cast %10 : vector<8x8x32xf32> to vector<64x32xf32>
    %c0_12 = arith.constant 0 : index
    %c18_13 = arith.constant 18 : index
    %c18_14 = arith.constant 18 : index
    %c0_15 = arith.constant 0 : index
    %12 = vector.load %arg0[%c0_12, %c18_13, %c18_14, %c0_15] : memref<2x44x44x32xf32, #tpu.memory_space<vmem>>, vector<1x8x8x32xf32>
    %13 = vector.shape_cast %12 : vector<1x8x8x32xf32> to vector<8x8x32xf32>
    %14 = vector.shape_cast %13 : vector<8x8x32xf32> to vector<64x32xf32>
    %c0_16 = arith.constant 0 : index
    %c18_17 = arith.constant 18 : index
    %c24_18 = arith.constant 24 : index
    %c0_19 = arith.constant 0 : index
    %15 = vector.load %arg0[%c0_16, %c18_17, %c24_18, %c0_19] : memref<2x44x44x32xf32, #tpu.memory_space<vmem>>, vector<1x8x8x32xf32>
    %16 = vector.shape_cast %15 : vector<1x8x8x32xf32> to vector<8x8x32xf32>
    %17 = vector.shape_cast %16 : vector<8x8x32xf32> to vector<64x32xf32>
    %c0_20 = arith.constant 0 : index
    %c24_21 = arith.constant 24 : index
    %c12_22 = arith.constant 12 : index
    %c0_23 = arith.constant 0 : index
    %18 = vector.load %arg0[%c0_20, %c24_21, %c12_22, %c0_23] : memref<2x44x44x32xf32, #tpu.memory_space<vmem>>, vector<1x8x8x32xf32>
    %19 = vector.shape_cast %18 : vector<1x8x8x32xf32> to vector<8x8x32xf32>
    %20 = vector.shape_cast %19 : vector<8x8x32xf32> to vector<64x32xf32>
    %c0_24 = arith.constant 0 : index
    %c24_25 = arith.constant 24 : index
    %c18_26 = arith.constant 18 : index
    %c0_27 = arith.constant 0 : index
    %21 = vector.load %arg0[%c0_24, %c24_25, %c18_26, %c0_27] : memref<2x44x44x32xf32, #tpu.memory_space<vmem>>, vector<1x8x8x32xf32>
    %22 = vector.shape_cast %21 : vector<1x8x8x32xf32> to vector<8x8x32xf32>
    %23 = vector.shape_cast %22 : vector<8x8x32xf32> to vector<64x32xf32>
    %c0_28 = arith.constant 0 : index
    %c24_29 = arith.constant 24 : index
    %c24_30 = arith.constant 24 : index
    %c0_31 = arith.constant 0 : index
    %24 = vector.load %arg0[%c0_28, %c24_29, %c24_30, %c0_31] : memref<2x44x44x32xf32, #tpu.memory_space<vmem>>, vector<1x8x8x32xf32>
    %25 = vector.shape_cast %24 : vector<1x8x8x32xf32> to vector<8x8x32xf32>
    %26 = vector.shape_cast %25 : vector<8x8x32xf32> to vector<64x32xf32>
    %c0_32 = arith.constant 0 : index
    %c6 = arith.constant 6 : index
    %c6_33 = arith.constant 6 : index
    %c0_34 = arith.constant 0 : index
    %27 = vector.load %arg0[%c0_32, %c6, %c6_33, %c0_34] : memref<2x44x44x32xf32, #tpu.memory_space<vmem>>, vector<1x8x8x32xf32>
    %28 = vector.shape_cast %27 : vector<1x8x8x32xf32> to vector<8x8x32xf32>
    %29 = vector.shape_cast %28 : vector<8x8x32xf32> to vector<64x32xf32>
    %c0_35 = arith.constant 0 : index
    %c6_36 = arith.constant 6 : index
    %c18_37 = arith.constant 18 : index
    %c0_38 = arith.constant 0 : index
    %30 = vector.load %arg0[%c0_35, %c6_36, %c18_37, %c0_38] : memref<2x44x44x32xf32, #tpu.memory_space<vmem>>, vector<1x8x8x32xf32>
    %31 = vector.shape_cast %30 : vector<1x8x8x32xf32> to vector<8x8x32xf32>
    %32 = vector.shape_cast %31 : vector<8x8x32xf32> to vector<64x32xf32>
    %c0_39 = arith.constant 0 : index
    %c6_40 = arith.constant 6 : index
    %c30 = arith.constant 30 : index
    %c0_41 = arith.constant 0 : index
    %33 = vector.load %arg0[%c0_39, %c6_40, %c30, %c0_41] : memref<2x44x44x32xf32, #tpu.memory_space<vmem>>, vector<1x8x8x32xf32>
    %34 = vector.shape_cast %33 : vector<1x8x8x32xf32> to vector<8x8x32xf32>
    %35 = vector.shape_cast %34 : vector<8x8x32xf32> to vector<64x32xf32>
    %c0_42 = arith.constant 0 : index
    %c18_43 = arith.constant 18 : index
    %c6_44 = arith.constant 6 : index
    %c0_45 = arith.constant 0 : index
    %36 = vector.load %arg0[%c0_42, %c18_43, %c6_44, %c0_45] : memref<2x44x44x32xf32, #tpu.memory_space<vmem>>, vector<1x8x8x32xf32>
    %37 = vector.shape_cast %36 : vector<1x8x8x32xf32> to vector<8x8x32xf32>
    %38 = vector.shape_cast %37 : vector<8x8x32xf32> to vector<64x32xf32>
    %c0_46 = arith.constant 0 : index
    %c18_47 = arith.constant 18 : index
    %c18_48 = arith.constant 18 : index
    %c0_49 = arith.constant 0 : index
    %39 = vector.load %arg0[%c0_46, %c18_47, %c18_48, %c0_49] : memref<2x44x44x32xf32, #tpu.memory_space<vmem>>, vector<1x8x8x32xf32>
    %40 = vector.shape_cast %39 : vector<1x8x8x32xf32> to vector<8x8x32xf32>
    %41 = vector.shape_cast %40 : vector<8x8x32xf32> to vector<64x32xf32>
    %c0_50 = arith.constant 0 : index
    %c18_51 = arith.constant 18 : index
    %c30_52 = arith.constant 30 : index
    %c0_53 = arith.constant 0 : index
    %42 = vector.load %arg0[%c0_50, %c18_51, %c30_52, %c0_53] : memref<2x44x44x32xf32, #tpu.memory_space<vmem>>, vector<1x8x8x32xf32>
    %43 = vector.shape_cast %42 : vector<1x8x8x32xf32> to vector<8x8x32xf32>
    %44 = vector.shape_cast %43 : vector<8x8x32xf32> to vector<64x32xf32>
    %c0_54 = arith.constant 0 : index
    %c30_55 = arith.constant 30 : index
    %c6_56 = arith.constant 6 : index
    %c0_57 = arith.constant 0 : index
    %45 = vector.load %arg0[%c0_54, %c30_55, %c6_56, %c0_57] : memref<2x44x44x32xf32, #tpu.memory_space<vmem>>, vector<1x8x8x32xf32>
    %46 = vector.shape_cast %45 : vector<1x8x8x32xf32> to vector<8x8x32xf32>
    %47 = vector.shape_cast %46 : vector<8x8x32xf32> to vector<64x32xf32>
    %c0_58 = arith.constant 0 : index
    %c30_59 = arith.constant 30 : index
    %c18_60 = arith.constant 18 : index
    %c0_61 = arith.constant 0 : index
    %48 = vector.load %arg0[%c0_58, %c30_59, %c18_60, %c0_61] : memref<2x44x44x32xf32, #tpu.memory_space<vmem>>, vector<1x8x8x32xf32>
    %49 = vector.shape_cast %48 : vector<1x8x8x32xf32> to vector<8x8x32xf32>
    %50 = vector.shape_cast %49 : vector<8x8x32xf32> to vector<64x32xf32>
    %c0_62 = arith.constant 0 : index
    %c30_63 = arith.constant 30 : index
    %c30_64 = arith.constant 30 : index
    %c0_65 = arith.constant 0 : index
    %51 = vector.load %arg0[%c0_62, %c30_63, %c30_64, %c0_65] : memref<2x44x44x32xf32, #tpu.memory_space<vmem>>, vector<1x8x8x32xf32>
    %52 = vector.shape_cast %51 : vector<1x8x8x32xf32> to vector<8x8x32xf32>
    %53 = vector.shape_cast %52 : vector<8x8x32xf32> to vector<64x32xf32>
    %c0_66 = arith.constant 0 : index
    %c0_67 = arith.constant 0 : index
    %c0_68 = arith.constant 0 : index
    %c0_69 = arith.constant 0 : index
    %54 = vector.load %arg0[%c0_66, %c0_67, %c0_68, %c0_69] : memref<2x44x44x32xf32, #tpu.memory_space<vmem>>, vector<1x8x8x32xf32>
    %55 = vector.shape_cast %54 : vector<1x8x8x32xf32> to vector<8x8x32xf32>
    %56 = vector.shape_cast %55 : vector<8x8x32xf32> to vector<64x32xf32>
    %c0_70 = arith.constant 0 : index
    %c0_71 = arith.constant 0 : index
    %c18_72 = arith.constant 18 : index
    %c0_73 = arith.constant 0 : index
    %57 = vector.load %arg0[%c0_70, %c0_71, %c18_72, %c0_73] : memref<2x44x44x32xf32, #tpu.memory_space<vmem>>, vector<1x8x8x32xf32>
    %58 = vector.shape_cast %57 : vector<1x8x8x32xf32> to vector<8x8x32xf32>
    %59 = vector.shape_cast %58 : vector<8x8x32xf32> to vector<64x32xf32>
    %c0_74 = arith.constant 0 : index
    %c0_75 = arith.constant 0 : index
    %c36 = arith.constant 36 : index
    %c0_76 = arith.constant 0 : index
    %60 = vector.load %arg0[%c0_74, %c0_75, %c36, %c0_76] : memref<2x44x44x32xf32, #tpu.memory_space<vmem>>, vector<1x8x8x32xf32>
    %61 = vector.shape_cast %60 : vector<1x8x8x32xf32> to vector<8x8x32xf32>
    %62 = vector.shape_cast %61 : vector<8x8x32xf32> to vector<64x32xf32>
    %c0_77 = arith.constant 0 : index
    %c18_78 = arith.constant 18 : index
    %c0_79 = arith.constant 0 : index
    %c0_80 = arith.constant 0 : index
    %63 = vector.load %arg0[%c0_77, %c18_78, %c0_79, %c0_80] : memref<2x44x44x32xf32, #tpu.memory_space<vmem>>, vector<1x8x8x32xf32>
    %64 = vector.shape_cast %63 : vector<1x8x8x32xf32> to vector<8x8x32xf32>
    %65 = vector.shape_cast %64 : vector<8x8x32xf32> to vector<64x32xf32>
    %c0_81 = arith.constant 0 : index
    %c18_82 = arith.constant 18 : index
    %c18_83 = arith.constant 18 : index
    %c0_84 = arith.constant 0 : index
    %66 = vector.load %arg0[%c0_81, %c18_82, %c18_83, %c0_84] : memref<2x44x44x32xf32, #tpu.memory_space<vmem>>, vector<1x8x8x32xf32>
    %67 = vector.shape_cast %66 : vector<1x8x8x32xf32> to vector<8x8x32xf32>
    %68 = vector.shape_cast %67 : vector<8x8x32xf32> to vector<64x32xf32>
    %c0_85 = arith.constant 0 : index
    %c18_86 = arith.constant 18 : index
    %c36_87 = arith.constant 36 : index
    %c0_88 = arith.constant 0 : index
    %69 = vector.load %arg0[%c0_85, %c18_86, %c36_87, %c0_88] : memref<2x44x44x32xf32, #tpu.memory_space<vmem>>, vector<1x8x8x32xf32>
    %70 = vector.shape_cast %69 : vector<1x8x8x32xf32> to vector<8x8x32xf32>
    %71 = vector.shape_cast %70 : vector<8x8x32xf32> to vector<64x32xf32>
    %c0_89 = arith.constant 0 : index
    %c36_90 = arith.constant 36 : index
    %c0_91 = arith.constant 0 : index
    %c0_92 = arith.constant 0 : index
    %72 = vector.load %arg0[%c0_89, %c36_90, %c0_91, %c0_92] : memref<2x44x44x32xf32, #tpu.memory_space<vmem>>, vector<1x8x8x32xf32>
    %73 = vector.shape_cast %72 : vector<1x8x8x32xf32> to vector<8x8x32xf32>
    %74 = vector.shape_cast %73 : vector<8x8x32xf32> to vector<64x32xf32>
    %c0_93 = arith.constant 0 : index
    %c36_94 = arith.constant 36 : index
    %c18_95 = arith.constant 18 : index
    %c0_96 = arith.constant 0 : index
    %75 = vector.load %arg0[%c0_93, %c36_94, %c18_95, %c0_96] : memref<2x44x44x32xf32, #tpu.memory_space<vmem>>, vector<1x8x8x32xf32>
    %76 = vector.shape_cast %75 : vector<1x8x8x32xf32> to vector<8x8x32xf32>
    %77 = vector.shape_cast %76 : vector<8x8x32xf32> to vector<64x32xf32>
    %c0_97 = arith.constant 0 : index
    %c36_98 = arith.constant 36 : index
    %c36_99 = arith.constant 36 : index
    %c0_100 = arith.constant 0 : index
    %78 = vector.load %arg0[%c0_97, %c36_98, %c36_99, %c0_100] : memref<2x44x44x32xf32, #tpu.memory_space<vmem>>, vector<1x8x8x32xf32>
    %79 = vector.shape_cast %78 : vector<1x8x8x32xf32> to vector<8x8x32xf32>
    %80 = vector.shape_cast %79 : vector<8x8x32xf32> to vector<64x32xf32>
    %81 = tpu.concatenate %2, %5, %8, %11, %14, %17, %20, %23, %26, %29, %32, %35, %38, %41, %44, %47 in 1 : vector<64x32xf32>, vector<64x32xf32>, vector<64x32xf32>, vector<64x32xf32>, vector<64x32xf32>, vector<64x32xf32>, vector<64x32xf32>, vector<64x32xf32>, vector<64x32xf32>, vector<64x32xf32>, vector<64x32xf32>, vector<64x32xf32>, vector<64x32xf32>, vector<64x32xf32>, vector<64x32xf32>, vector<64x32xf32> -> vector<64x512xf32>
    %82 = tpu.concatenate %50, %53, %56, %59, %62, %65, %68, %71, %74, %77, %80 in 1 : vector<64x32xf32>, vector<64x32xf32>, vector<64x32xf32>, vector<64x32xf32>, vector<64x32xf32>, vector<64x32xf32>, vector<64x32xf32>, vector<64x32xf32>, vector<64x32xf32>, vector<64x32xf32>, vector<64x32xf32> -> vector<64x352xf32>
    %83 = tpu.concatenate %81, %82 in 1 : vector<64x512xf32>, vector<64x352xf32> -> vector<64x864xf32>
    %c1 = arith.constant 1 : index
    %c12_101 = arith.constant 12 : index
    %c12_102 = arith.constant 12 : index
    %c0_103 = arith.constant 0 : index
    %84 = vector.load %arg0[%c1, %c12_101, %c12_102, %c0_103] : memref<2x44x44x32xf32, #tpu.memory_space<vmem>>, vector<1x8x8x32xf32>
    %85 = vector.shape_cast %84 : vector<1x8x8x32xf32> to vector<8x8x32xf32>
    %86 = vector.shape_cast %85 : vector<8x8x32xf32> to vector<64x32xf32>
    %c1_104 = arith.constant 1 : index
    %c12_105 = arith.constant 12 : index
    %c18_106 = arith.constant 18 : index
    %c0_107 = arith.constant 0 : index
    %87 = vector.load %arg0[%c1_104, %c12_105, %c18_106, %c0_107] : memref<2x44x44x32xf32, #tpu.memory_space<vmem>>, vector<1x8x8x32xf32>
    %88 = vector.shape_cast %87 : vector<1x8x8x32xf32> to vector<8x8x32xf32>
    %89 = vector.shape_cast %88 : vector<8x8x32xf32> to vector<64x32xf32>
    %c1_108 = arith.constant 1 : index
    %c12_109 = arith.constant 12 : index
    %c24_110 = arith.constant 24 : index
    %c0_111 = arith.constant 0 : index
    %90 = vector.load %arg0[%c1_108, %c12_109, %c24_110, %c0_111] : memref<2x44x44x32xf32, #tpu.memory_space<vmem>>, vector<1x8x8x32xf32>
    %91 = vector.shape_cast %90 : vector<1x8x8x32xf32> to vector<8x8x32xf32>
    %92 = vector.shape_cast %91 : vector<8x8x32xf32> to vector<64x32xf32>
    %c1_112 = arith.constant 1 : index
    %c18_113 = arith.constant 18 : index
    %c12_114 = arith.constant 12 : index
    %c0_115 = arith.constant 0 : index
    %93 = vector.load %arg0[%c1_112, %c18_113, %c12_114, %c0_115] : memref<2x44x44x32xf32, #tpu.memory_space<vmem>>, vector<1x8x8x32xf32>
    %94 = vector.shape_cast %93 : vector<1x8x8x32xf32> to vector<8x8x32xf32>
    %95 = vector.shape_cast %94 : vector<8x8x32xf32> to vector<64x32xf32>
    %c1_116 = arith.constant 1 : index
    %c18_117 = arith.constant 18 : index
    %c18_118 = arith.constant 18 : index
    %c0_119 = arith.constant 0 : index
    %96 = vector.load %arg0[%c1_116, %c18_117, %c18_118, %c0_119] : memref<2x44x44x32xf32, #tpu.memory_space<vmem>>, vector<1x8x8x32xf32>
    %97 = vector.shape_cast %96 : vector<1x8x8x32xf32> to vector<8x8x32xf32>
    %98 = vector.shape_cast %97 : vector<8x8x32xf32> to vector<64x32xf32>
    %c1_120 = arith.constant 1 : index
    %c18_121 = arith.constant 18 : index
    %c24_122 = arith.constant 24 : index
    %c0_123 = arith.constant 0 : index
    %99 = vector.load %arg0[%c1_120, %c18_121, %c24_122, %c0_123] : memref<2x44x44x32xf32, #tpu.memory_space<vmem>>, vector<1x8x8x32xf32>
    %100 = vector.shape_cast %99 : vector<1x8x8x32xf32> to vector<8x8x32xf32>
    %101 = vector.shape_cast %100 : vector<8x8x32xf32> to vector<64x32xf32>
    %c1_124 = arith.constant 1 : index
    %c24_125 = arith.constant 24 : index
    %c12_126 = arith.constant 12 : index
    %c0_127 = arith.constant 0 : index
    %102 = vector.load %arg0[%c1_124, %c24_125, %c12_126, %c0_127] : memref<2x44x44x32xf32, #tpu.memory_space<vmem>>, vector<1x8x8x32xf32>
    %103 = vector.shape_cast %102 : vector<1x8x8x32xf32> to vector<8x8x32xf32>
    %104 = vector.shape_cast %103 : vector<8x8x32xf32> to vector<64x32xf32>
    %c1_128 = arith.constant 1 : index
    %c24_129 = arith.constant 24 : index
    %c18_130 = arith.constant 18 : index
    %c0_131 = arith.constant 0 : index
    %105 = vector.load %arg0[%c1_128, %c24_129, %c18_130, %c0_131] : memref<2x44x44x32xf32, #tpu.memory_space<vmem>>, vector<1x8x8x32xf32>
    %106 = vector.shape_cast %105 : vector<1x8x8x32xf32> to vector<8x8x32xf32>
    %107 = vector.shape_cast %106 : vector<8x8x32xf32> to vector<64x32xf32>
    %c1_132 = arith.constant 1 : index
    %c24_133 = arith.constant 24 : index
    %c24_134 = arith.constant 24 : index
    %c0_135 = arith.constant 0 : index
    %108 = vector.load %arg0[%c1_132, %c24_133, %c24_134, %c0_135] : memref<2x44x44x32xf32, #tpu.memory_space<vmem>>, vector<1x8x8x32xf32>
    %109 = vector.shape_cast %108 : vector<1x8x8x32xf32> to vector<8x8x32xf32>
    %110 = vector.shape_cast %109 : vector<8x8x32xf32> to vector<64x32xf32>
    %c1_136 = arith.constant 1 : index
    %c6_137 = arith.constant 6 : index
    %c6_138 = arith.constant 6 : index
    %c0_139 = arith.constant 0 : index
    %111 = vector.load %arg0[%c1_136, %c6_137, %c6_138, %c0_139] : memref<2x44x44x32xf32, #tpu.memory_space<vmem>>, vector<1x8x8x32xf32>
    %112 = vector.shape_cast %111 : vector<1x8x8x32xf32> to vector<8x8x32xf32>
    %113 = vector.shape_cast %112 : vector<8x8x32xf32> to vector<64x32xf32>
    %c1_140 = arith.constant 1 : index
    %c6_141 = arith.constant 6 : index
    %c18_142 = arith.constant 18 : index
    %c0_143 = arith.constant 0 : index
    %114 = vector.load %arg0[%c1_140, %c6_141, %c18_142, %c0_143] : memref<2x44x44x32xf32, #tpu.memory_space<vmem>>, vector<1x8x8x32xf32>
    %115 = vector.shape_cast %114 : vector<1x8x8x32xf32> to vector<8x8x32xf32>
    %116 = vector.shape_cast %115 : vector<8x8x32xf32> to vector<64x32xf32>
    %c1_144 = arith.constant 1 : index
    %c6_145 = arith.constant 6 : index
    %c30_146 = arith.constant 30 : index
    %c0_147 = arith.constant 0 : index
    %117 = vector.load %arg0[%c1_144, %c6_145, %c30_146, %c0_147] : memref<2x44x44x32xf32, #tpu.memory_space<vmem>>, vector<1x8x8x32xf32>
    %118 = vector.shape_cast %117 : vector<1x8x8x32xf32> to vector<8x8x32xf32>
    %119 = vector.shape_cast %118 : vector<8x8x32xf32> to vector<64x32xf32>
    %c1_148 = arith.constant 1 : index
    %c18_149 = arith.constant 18 : index
    %c6_150 = arith.constant 6 : index
    %c0_151 = arith.constant 0 : index
    %120 = vector.load %arg0[%c1_148, %c18_149, %c6_150, %c0_151] : memref<2x44x44x32xf32, #tpu.memory_space<vmem>>, vector<1x8x8x32xf32>
    %121 = vector.shape_cast %120 : vector<1x8x8x32xf32> to vector<8x8x32xf32>
    %122 = vector.shape_cast %121 : vector<8x8x32xf32> to vector<64x32xf32>
    %c1_152 = arith.constant 1 : index
    %c18_153 = arith.constant 18 : index
    %c18_154 = arith.constant 18 : index
    %c0_155 = arith.constant 0 : index
    %123 = vector.load %arg0[%c1_152, %c18_153, %c18_154, %c0_155] : memref<2x44x44x32xf32, #tpu.memory_space<vmem>>, vector<1x8x8x32xf32>
    %124 = vector.shape_cast %123 : vector<1x8x8x32xf32> to vector<8x8x32xf32>
    %125 = vector.shape_cast %124 : vector<8x8x32xf32> to vector<64x32xf32>
    %c1_156 = arith.constant 1 : index
    %c18_157 = arith.constant 18 : index
    %c30_158 = arith.constant 30 : index
    %c0_159 = arith.constant 0 : index
    %126 = vector.load %arg0[%c1_156, %c18_157, %c30_158, %c0_159] : memref<2x44x44x32xf32, #tpu.memory_space<vmem>>, vector<1x8x8x32xf32>
    %127 = vector.shape_cast %126 : vector<1x8x8x32xf32> to vector<8x8x32xf32>
    %128 = vector.shape_cast %127 : vector<8x8x32xf32> to vector<64x32xf32>
    %c1_160 = arith.constant 1 : index
    %c30_161 = arith.constant 30 : index
    %c6_162 = arith.constant 6 : index
    %c0_163 = arith.constant 0 : index
    %129 = vector.load %arg0[%c1_160, %c30_161, %c6_162, %c0_163] : memref<2x44x44x32xf32, #tpu.memory_space<vmem>>, vector<1x8x8x32xf32>
    %130 = vector.shape_cast %129 : vector<1x8x8x32xf32> to vector<8x8x32xf32>
    %131 = vector.shape_cast %130 : vector<8x8x32xf32> to vector<64x32xf32>
    %c1_164 = arith.constant 1 : index
    %c30_165 = arith.constant 30 : index
    %c18_166 = arith.constant 18 : index
    %c0_167 = arith.constant 0 : index
    %132 = vector.load %arg0[%c1_164, %c30_165, %c18_166, %c0_167] : memref<2x44x44x32xf32, #tpu.memory_space<vmem>>, vector<1x8x8x32xf32>
    %133 = vector.shape_cast %132 : vector<1x8x8x32xf32> to vector<8x8x32xf32>
    %134 = vector.shape_cast %133 : vector<8x8x32xf32> to vector<64x32xf32>
    %c1_168 = arith.constant 1 : index
    %c30_169 = arith.constant 30 : index
    %c30_170 = arith.constant 30 : index
    %c0_171 = arith.constant 0 : index
    %135 = vector.load %arg0[%c1_168, %c30_169, %c30_170, %c0_171] : memref<2x44x44x32xf32, #tpu.memory_space<vmem>>, vector<1x8x8x32xf32>
    %136 = vector.shape_cast %135 : vector<1x8x8x32xf32> to vector<8x8x32xf32>
    %137 = vector.shape_cast %136 : vector<8x8x32xf32> to vector<64x32xf32>
    %c1_172 = arith.constant 1 : index
    %c0_173 = arith.constant 0 : index
    %c0_174 = arith.constant 0 : index
    %c0_175 = arith.constant 0 : index
    %138 = vector.load %arg0[%c1_172, %c0_173, %c0_174, %c0_175] : memref<2x44x44x32xf32, #tpu.memory_space<vmem>>, vector<1x8x8x32xf32>
    %139 = vector.shape_cast %138 : vector<1x8x8x32xf32> to vector<8x8x32xf32>
    %140 = vector.shape_cast %139 : vector<8x8x32xf32> to vector<64x32xf32>
    %c1_176 = arith.constant 1 : index
    %c0_177 = arith.constant 0 : index
    %c18_178 = arith.constant 18 : index
    %c0_179 = arith.constant 0 : index
    %141 = vector.load %arg0[%c1_176, %c0_177, %c18_178, %c0_179] : memref<2x44x44x32xf32, #tpu.memory_space<vmem>>, vector<1x8x8x32xf32>
    %142 = vector.shape_cast %141 : vector<1x8x8x32xf32> to vector<8x8x32xf32>
    %143 = vector.shape_cast %142 : vector<8x8x32xf32> to vector<64x32xf32>
    %c1_180 = arith.constant 1 : index
    %c0_181 = arith.constant 0 : index
    %c36_182 = arith.constant 36 : index
    %c0_183 = arith.constant 0 : index
    %144 = vector.load %arg0[%c1_180, %c0_181, %c36_182, %c0_183] : memref<2x44x44x32xf32, #tpu.memory_space<vmem>>, vector<1x8x8x32xf32>
    %145 = vector.shape_cast %144 : vector<1x8x8x32xf32> to vector<8x8x32xf32>
    %146 = vector.shape_cast %145 : vector<8x8x32xf32> to vector<64x32xf32>
    %c1_184 = arith.constant 1 : index
    %c18_185 = arith.constant 18 : index
    %c0_186 = arith.constant 0 : index
    %c0_187 = arith.constant 0 : index
    %147 = vector.load %arg0[%c1_184, %c18_185, %c0_186, %c0_187] : memref<2x44x44x32xf32, #tpu.memory_space<vmem>>, vector<1x8x8x32xf32>
    %148 = vector.shape_cast %147 : vector<1x8x8x32xf32> to vector<8x8x32xf32>
    %149 = vector.shape_cast %148 : vector<8x8x32xf32> to vector<64x32xf32>
    %c1_188 = arith.constant 1 : index
    %c18_189 = arith.constant 18 : index
    %c18_190 = arith.constant 18 : index
    %c0_191 = arith.constant 0 : index
    %150 = vector.load %arg0[%c1_188, %c18_189, %c18_190, %c0_191] : memref<2x44x44x32xf32, #tpu.memory_space<vmem>>, vector<1x8x8x32xf32>
    %151 = vector.shape_cast %150 : vector<1x8x8x32xf32> to vector<8x8x32xf32>
    %152 = vector.shape_cast %151 : vector<8x8x32xf32> to vector<64x32xf32>
    %c1_192 = arith.constant 1 : index
    %c18_193 = arith.constant 18 : index
    %c36_194 = arith.constant 36 : index
    %c0_195 = arith.constant 0 : index
    %153 = vector.load %arg0[%c1_192, %c18_193, %c36_194, %c0_195] : memref<2x44x44x32xf32, #tpu.memory_space<vmem>>, vector<1x8x8x32xf32>
    %154 = vector.shape_cast %153 : vector<1x8x8x32xf32> to vector<8x8x32xf32>
    %155 = vector.shape_cast %154 : vector<8x8x32xf32> to vector<64x32xf32>
    %c1_196 = arith.constant 1 : index
    %c36_197 = arith.constant 36 : index
    %c0_198 = arith.constant 0 : index
    %c0_199 = arith.constant 0 : index
    %156 = vector.load %arg0[%c1_196, %c36_197, %c0_198, %c0_199] : memref<2x44x44x32xf32, #tpu.memory_space<vmem>>, vector<1x8x8x32xf32>
    %157 = vector.shape_cast %156 : vector<1x8x8x32xf32> to vector<8x8x32xf32>
    %158 = vector.shape_cast %157 : vector<8x8x32xf32> to vector<64x32xf32>
    %c1_200 = arith.constant 1 : index
    %c36_201 = arith.constant 36 : index
    %c18_202 = arith.constant 18 : index
    %c0_203 = arith.constant 0 : index
    %159 = vector.load %arg0[%c1_200, %c36_201, %c18_202, %c0_203] : memref<2x44x44x32xf32, #tpu.memory_space<vmem>>, vector<1x8x8x32xf32>
    %160 = vector.shape_cast %159 : vector<1x8x8x32xf32> to vector<8x8x32xf32>
    %161 = vector.shape_cast %160 : vector<8x8x32xf32> to vector<64x32xf32>
    %c1_204 = arith.constant 1 : index
    %c36_205 = arith.constant 36 : index
    %c36_206 = arith.constant 36 : index
    %c0_207 = arith.constant 0 : index
    %162 = vector.load %arg0[%c1_204, %c36_205, %c36_206, %c0_207] : memref<2x44x44x32xf32, #tpu.memory_space<vmem>>, vector<1x8x8x32xf32>
    %163 = vector.shape_cast %162 : vector<1x8x8x32xf32> to vector<8x8x32xf32>
    %164 = vector.shape_cast %163 : vector<8x8x32xf32> to vector<64x32xf32>
    %165 = tpu.concatenate %86, %89, %92, %95, %98, %101, %104, %107, %110, %113, %116, %119, %122, %125, %128, %131 in 1 : vector<64x32xf32>, vector<64x32xf32>, vector<64x32xf32>, vector<64x32xf32>, vector<64x32xf32>, vector<64x32xf32>, vector<64x32xf32>, vector<64x32xf32>, vector<64x32xf32>, vector<64x32xf32>, vector<64x32xf32>, vector<64x32xf32>, vector<64x32xf32>, vector<64x32xf32>, vector<64x32xf32>, vector<64x32xf32> -> vector<64x512xf32>
    %166 = tpu.concatenate %134, %137, %140, %143, %146, %149, %152, %155, %158, %161, %164 in 1 : vector<64x32xf32>, vector<64x32xf32>, vector<64x32xf32>, vector<64x32xf32>, vector<64x32xf32>, vector<64x32xf32>, vector<64x32xf32>, vector<64x32xf32>, vector<64x32xf32>, vector<64x32xf32>, vector<64x32xf32> -> vector<64x352xf32>
    %167 = tpu.concatenate %165, %166 in 1 : vector<64x512xf32>, vector<64x352xf32> -> vector<64x864xf32>
    %168 = tpu.concatenate %83, %167 in 0 : vector<64x864xf32>, vector<64x864xf32> -> vector<128x864xf32>
    %c0_208 = arith.constant 0 : index
    %c0_209 = arith.constant 0 : index
    %169 = vector.load %arg2[%c0_208, %c0_209] : memref<864x128xf32, #tpu.memory_space<vmem>>, vector<864x128xf32>
    %cst = arith.constant dense<0.000000e+00> : vector<128x128xf32>
    %170 = tpu.matmul %168, %169, %cst {dimension_numbers = #tpu.dot_dimension_numbers<[1], [0], [0], [1], [0, 0, 1, 1], [], []>} : vector<128x864xf32>, vector<864x128xf32>, vector<128x128xf32> -> vector<128x128xf32>
    %c0_210 = arith.constant 0 : index
    %c0_211 = arith.constant 0 : index
    %171 = vector.load %arg3[%c0_210, %c0_211] : memref<1x128xf32, #tpu.memory_space<vmem>>, vector<1x128xf32>
    %172 = vector.broadcast %171 : vector<1x128xf32> to vector<128x128xf32>
    %173 = arith.addf %170, %172 : vector<128x128xf32>
    %cst_212 = arith.constant 0.000000e+00 : f32
    %174 = vector.broadcast %cst_212 : f32 to vector<128x128xf32>
    %175 = arith.maximumf %173, %174 : vector<128x128xf32>
    %c0_213 = arith.constant 0 : index
    %c0_214 = arith.constant 0 : index
    %176 = vector.load %arg4[%c0_213, %c0_214] : memref<128x128xf32, #tpu.memory_space<vmem>>, vector<128x128xf32>
    %cst_215 = arith.constant dense<0.000000e+00> : vector<128x128xf32>
    %177 = tpu.matmul %175, %176, %cst_215 {dimension_numbers = #tpu.dot_dimension_numbers<[1], [0], [0], [1], [0, 0, 1, 1], [], []>} : vector<128x128xf32>, vector<128x128xf32>, vector<128x128xf32> -> vector<128x128xf32>
    %c0_216 = arith.constant 0 : index
    %c0_217 = arith.constant 0 : index
    %178 = vector.load %arg5[%c0_216, %c0_217] : memref<1x128xf32, #tpu.memory_space<vmem>>, vector<1x128xf32>
    %179 = vector.broadcast %178 : vector<1x128xf32> to vector<128x128xf32>
    %180 = arith.addf %177, %179 : vector<128x128xf32>
    %c0_218 = arith.constant 0 : index
    %c0_219 = arith.constant 0 : index
    %181 = vector.load %arg8[%c0_218, %c0_219] : memref<1x128xf32, #tpu.memory_space<vmem>>, vector<1x128xf32>
    %182 = vector.broadcast %181 : vector<1x128xf32> to vector<128x128xf32>
    %183 = arith.subf %180, %182 : vector<128x128xf32>
    %c0_220 = arith.constant 0 : index
    %c0_221 = arith.constant 0 : index
    %184 = vector.load %arg9[%c0_220, %c0_221] : memref<1x128xf32, #tpu.memory_space<vmem>>, vector<1x128xf32>
    %cst_222 = arith.constant 9.99999974E-6 : f32
    %185 = vector.broadcast %cst_222 : f32 to vector<1x128xf32>
    %186 = arith.addf %184, %185 : vector<1x128xf32>
    %187 = math.rsqrt %186 : vector<1x128xf32>
    %188 = vector.broadcast %187 : vector<1x128xf32> to vector<128x128xf32>
    %189 = arith.mulf %183, %188 : vector<128x128xf32>
    %c0_223 = arith.constant 0 : index
    %c0_224 = arith.constant 0 : index
    %190 = vector.load %arg6[%c0_223, %c0_224] : memref<1x128xf32, #tpu.memory_space<vmem>>, vector<1x128xf32>
    %191 = vector.broadcast %190 : vector<1x128xf32> to vector<128x128xf32>
    %192 = arith.mulf %189, %191 : vector<128x128xf32>
    %c0_225 = arith.constant 0 : index
    %c0_226 = arith.constant 0 : index
    %193 = vector.load %arg7[%c0_225, %c0_226] : memref<1x128xf32, #tpu.memory_space<vmem>>, vector<1x128xf32>
    %194 = vector.broadcast %193 : vector<1x128xf32> to vector<128x128xf32>
    %195 = arith.addf %192, %194 : vector<128x128xf32>
    %196 = arith.mulf %195, %195 : vector<128x128xf32>
    %cst_227 = arith.constant dense<0.000000e+00> : vector<128xf32>
    %197 = vector.multi_reduction <add>, %196, %cst_227 [1] : vector<128x128xf32> to vector<128xf32>
    %198 = vector.shape_cast %197 : vector<128xf32> to vector<128x1xf32>
    %cst_228 = arith.constant 1.000000e-24 : f32
    %199 = vector.broadcast %cst_228 : f32 to vector<128x1xf32>
    %200 = arith.maximumf %198, %199 : vector<128x1xf32>
    %201 = math.rsqrt %200 : vector<128x1xf32>
    %202 = vector.broadcast %201 : vector<128x1xf32> to vector<128x128xf32>
    %203 = arith.mulf %195, %202 : vector<128x128xf32>
    %cst_229 = arith.constant 0.000000e+00 : f32
    %204 = vector.broadcast %cst_229 : f32 to vector<128x128xf32>
    %205 = arith.maximumf %195, %204 : vector<128x128xf32>
    %c0_230 = arith.constant 0 : index
    %c0_231 = arith.constant 0 : index
    %206 = vector.load %arg10[%c0_230, %c0_231] : memref<1x128xf32, #tpu.memory_space<vmem>>, vector<1x128xf32>
    %207 = vector.broadcast %206 : vector<1x128xf32> to vector<128x128xf32>
    %208 = arith.mulf %205, %207 : vector<128x128xf32>
    %cst_232 = arith.constant dense<0.000000e+00> : vector<128xf32>
    %209 = vector.multi_reduction <add>, %208, %cst_232 [1] : vector<128x128xf32> to vector<128xf32>
    %210 = vector.shape_cast %209 : vector<128xf32> to vector<128x1xf32>
    %c0_233 = arith.constant 0 : index
    %c0_234 = arith.constant 0 : index
    %211 = vector.load %arg11[%c0_233, %c0_234] : memref<1x1xf32, #tpu.memory_space<vmem>>, vector<1x1xf32>
    %212 = vector.broadcast %211 : vector<1x1xf32> to vector<128x1xf32>
    %213 = arith.addf %210, %212 : vector<128x1xf32>
    %cst_235 = arith.constant 2.000000e+01 : f32
    %214 = vector.broadcast %cst_235 : f32 to vector<128x1xf32>
    %215 = arith.cmpf ogt, %213, %214 : vector<128x1xf32>
    %cst_236 = arith.constant 2.000000e+01 : f32
    %216 = vector.broadcast %cst_236 : f32 to vector<128x1xf32>
    %217 = arith.minimumf %213, %216 : vector<128x1xf32>
    %218 = math.exp %217 : vector<128x1xf32>
    %cst_237 = arith.constant 1.000000e+00 : f32
    %219 = vector.broadcast %cst_237 : f32 to vector<128x1xf32>
    %220 = arith.addf %219, %218 : vector<128x1xf32>
    %221 = math.log %220 : vector<128x1xf32>
    %222 = arith.select %215, %213, %221 : vector<128x1xi1>, vector<128x1xf32>
    %223 = vector.broadcast %222 : vector<128x1xf32> to vector<128x128xf32>
    %224 = arith.mulf %223, %203 : vector<128x128xf32>
    %c0_238 = arith.constant 0 : index
    %c0_239 = arith.constant 0 : index
    %225 = vector.load %arg1[%c0_238, %c0_239] : memref<32x32xf32, #tpu.memory_space<vmem>>, vector<32x32xf32>
    %c0_240 = arith.constant 0 : index
    %c0_241 = arith.constant 0 : index
    %226 = vector.load %arg12[%c0_240, %c0_241] : memref<32x128xf32, #tpu.memory_space<vmem>>, vector<32x128xf32>
    %cst_242 = arith.constant dense<0.000000e+00> : vector<32x128xf32>
    %227 = tpu.matmul %225, %226, %cst_242 {dimension_numbers = #tpu.dot_dimension_numbers<[1], [0], [0], [1], [0, 0, 1, 1], [], []>} : vector<32x32xf32>, vector<32x128xf32>, vector<32x128xf32> -> vector<32x128xf32>
    %c0_243 = arith.constant 0 : index
    %c0_244 = arith.constant 0 : index
    %228 = vector.load %arg13[%c0_243, %c0_244] : memref<1x128xf32, #tpu.memory_space<vmem>>, vector<1x128xf32>
    %229 = vector.broadcast %228 : vector<1x128xf32> to vector<32x128xf32>
    %230 = arith.addf %227, %229 : vector<32x128xf32>
    %c0_245 = arith.constant 0 : index
    %c0_246 = arith.constant 0 : index
    %231 = vector.load %arg16[%c0_245, %c0_246] : memref<1x128xf32, #tpu.memory_space<vmem>>, vector<1x128xf32>
    %232 = vector.broadcast %231 : vector<1x128xf32> to vector<32x128xf32>
    %233 = arith.subf %230, %232 : vector<32x128xf32>
    %c0_247 = arith.constant 0 : index
    %c0_248 = arith.constant 0 : index
    %234 = vector.load %arg17[%c0_247, %c0_248] : memref<1x128xf32, #tpu.memory_space<vmem>>, vector<1x128xf32>
    %cst_249 = arith.constant 1.000000e-03 : f32
    %235 = vector.broadcast %cst_249 : f32 to vector<1x128xf32>
    %236 = arith.addf %234, %235 : vector<1x128xf32>
    %237 = math.rsqrt %236 : vector<1x128xf32>
    %238 = vector.broadcast %237 : vector<1x128xf32> to vector<32x128xf32>
    %239 = arith.mulf %233, %238 : vector<32x128xf32>
    %c0_250 = arith.constant 0 : index
    %c0_251 = arith.constant 0 : index
    %240 = vector.load %arg14[%c0_250, %c0_251] : memref<1x128xf32, #tpu.memory_space<vmem>>, vector<1x128xf32>
    %241 = vector.broadcast %240 : vector<1x128xf32> to vector<32x128xf32>
    %242 = arith.mulf %239, %241 : vector<32x128xf32>
    %c0_252 = arith.constant 0 : index
    %c0_253 = arith.constant 0 : index
    %243 = vector.load %arg15[%c0_252, %c0_253] : memref<1x128xf32, #tpu.memory_space<vmem>>, vector<1x128xf32>
    %244 = vector.broadcast %243 : vector<1x128xf32> to vector<32x128xf32>
    %245 = arith.addf %242, %244 : vector<32x128xf32>
    %246 = arith.negf %245 : vector<32x128xf32>
    %247 = math.exp %246 : vector<32x128xf32>
    %cst_254 = arith.constant 1.000000e+00 : f32
    %248 = vector.broadcast %cst_254 : f32 to vector<32x128xf32>
    %249 = arith.addf %248, %247 : vector<32x128xf32>
    %250 = arith.divf %248, %249 : vector<32x128xf32>
    %251 = arith.mulf %245, %250 : vector<32x128xf32>
    %cst_255 = arith.constant 9.99999997E-7 : f32
    %252 = vector.broadcast %cst_255 : f32 to vector<32x128xf32>
    %253 = arith.maximumf %251, %252 : vector<32x128xf32>
    %254 = arith.mulf %253, %253 : vector<32x128xf32>
    %255 = arith.mulf %254, %253 : vector<32x128xf32>
    %256 = vector.extract_strided_slice %255 {offsets = [0, 0], sizes = [16, 128], strides = [1, 1]} : vector<32x128xf32> to vector<16x128xf32>
    %cst_256 = arith.constant dense<0.000000e+00> : vector<128xf32>
    %257 = vector.multi_reduction <add>, %256, %cst_256 [0] : vector<16x128xf32> to vector<128xf32>
    %258 = vector.shape_cast %257 : vector<128xf32> to vector<1x128xf32>
    %cst_257 = arith.constant 1.600000e+01 : f32
    %259 = vector.broadcast %cst_257 : f32 to vector<1x128xf32>
    %260 = arith.divf %258, %259 : vector<1x128xf32>
    %261 = math.log %260 : vector<1x128xf32>
    %cst_258 = arith.constant 3.000000e+00 : f32
    %262 = vector.broadcast %cst_258 : f32 to vector<1x128xf32>
    %263 = arith.divf %261, %262 : vector<1x128xf32>
    %264 = math.exp %263 : vector<1x128xf32>
    %265 = vector.extract_strided_slice %224 {offsets = [0, 0], sizes = [64, 128], strides = [1, 1]} : vector<128x128xf32> to vector<64x128xf32>
    %266 = vector.broadcast %264 : vector<1x128xf32> to vector<64x128xf32>
    %267 = arith.mulf %265, %266 : vector<64x128xf32>
    %cst_259 = arith.constant dense<0.000000e+00> : vector<64xf32>
    %268 = vector.multi_reduction <add>, %267, %cst_259 [1] : vector<64x128xf32> to vector<64xf32>
    %269 = vector.shape_cast %268 : vector<64xf32> to vector<64x1xf32>
    %270 = arith.mulf %264, %264 : vector<1x128xf32>
    %cst_260 = arith.constant dense<0.000000e+00> : vector<1xf32>
    %271 = vector.multi_reduction <add>, %270, %cst_260 [1] : vector<1x128xf32> to vector<1xf32>
    %272 = vector.shape_cast %271 : vector<1xf32> to vector<1x1xf32>
    %273 = math.sqrt %272 : vector<1x1xf32>
    %274 = vector.broadcast %273 : vector<1x1xf32> to vector<1x128xf32>
    %275 = arith.divf %264, %274 : vector<1x128xf32>
    %276 = vector.broadcast %269 : vector<64x1xf32> to vector<64x128xf32>
    %277 = vector.broadcast %275 : vector<1x128xf32> to vector<64x128xf32>
    %278 = arith.mulf %276, %277 : vector<64x128xf32>
    %279 = arith.subf %265, %278 : vector<64x128xf32>
    %cst_261 = arith.constant dense<0.000000e+00> : vector<128xf32>
    %280 = vector.multi_reduction <add>, %279, %cst_261 [0] : vector<64x128xf32> to vector<128xf32>
    %281 = vector.shape_cast %280 : vector<128xf32> to vector<1x128xf32>
    %cst_262 = arith.constant 6.400000e+01 : f32
    %282 = vector.broadcast %cst_262 : f32 to vector<1x128xf32>
    %283 = arith.divf %281, %282 : vector<1x128xf32>
    %c0_263 = arith.constant 0 : index
    %c0_264 = arith.constant 0 : index
    %284 = vector.load %arg29[%c0_263, %c0_264] : memref<2x256xf32, #tpu.memory_space<vmem>>, vector<1x128xf32>
    tpu.vector_store %arg29[%c0_263, %c0_264], %283 {strides = array<i32>} : memref<2x256xf32, #tpu.memory_space<vmem>>, vector<1x128xf32>,
    %c0_265 = arith.constant 0 : index
    %c128 = arith.constant 128 : index
    %285 = vector.load %arg29[%c0_265, %c128] : memref<2x256xf32, #tpu.memory_space<vmem>>, vector<1x128xf32>
    tpu.vector_store %arg29[%c0_265, %c128], %264 {strides = array<i32>} : memref<2x256xf32, #tpu.memory_space<vmem>>, vector<1x128xf32>,
    %286 = vector.extract_strided_slice %255 {offsets = [16, 0], sizes = [16, 128], strides = [1, 1]} : vector<32x128xf32> to vector<16x128xf32>
    %cst_266 = arith.constant dense<0.000000e+00> : vector<128xf32>
    %287 = vector.multi_reduction <add>, %286, %cst_266 [0] : vector<16x128xf32> to vector<128xf32>
    %288 = vector.shape_cast %287 : vector<128xf32> to vector<1x128xf32>
    %cst_267 = arith.constant 1.600000e+01 : f32
    %289 = vector.broadcast %cst_267 : f32 to vector<1x128xf32>
    %290 = arith.divf %288, %289 : vector<1x128xf32>
    %291 = math.log %290 : vector<1x128xf32>
    %cst_268 = arith.constant 3.000000e+00 : f32
    %292 = vector.broadcast %cst_268 : f32 to vector<1x128xf32>
    %293 = arith.divf %291, %292 : vector<1x128xf32>
    %294 = math.exp %293 : vector<1x128xf32>
    %295 = vector.extract_strided_slice %224 {offsets = [64, 0], sizes = [64, 128], strides = [1, 1]} : vector<128x128xf32> to vector<64x128xf32>
    %296 = vector.broadcast %294 : vector<1x128xf32> to vector<64x128xf32>
    %297 = arith.mulf %295, %296 : vector<64x128xf32>
    %cst_269 = arith.constant dense<0.000000e+00> : vector<64xf32>
    %298 = vector.multi_reduction <add>, %297, %cst_269 [1] : vector<64x128xf32> to vector<64xf32>
    %299 = vector.shape_cast %298 : vector<64xf32> to vector<64x1xf32>
    %300 = arith.mulf %294, %294 : vector<1x128xf32>
    %cst_270 = arith.constant dense<0.000000e+00> : vector<1xf32>
    %301 = vector.multi_reduction <add>, %300, %cst_270 [1] : vector<1x128xf32> to vector<1xf32>
    %302 = vector.shape_cast %301 : vector<1xf32> to vector<1x1xf32>
    %303 = math.sqrt %302 : vector<1x1xf32>
    %304 = vector.broadcast %303 : vector<1x1xf32> to vector<1x128xf32>
    %305 = arith.divf %294, %304 : vector<1x128xf32>
    %306 = vector.broadcast %299 : vector<64x1xf32> to vector<64x128xf32>
    %307 = vector.broadcast %305 : vector<1x128xf32> to vector<64x128xf32>
    %308 = arith.mulf %306, %307 : vector<64x128xf32>
    %309 = arith.subf %295, %308 : vector<64x128xf32>
    %cst_271 = arith.constant dense<0.000000e+00> : vector<128xf32>
    %310 = vector.multi_reduction <add>, %309, %cst_271 [0] : vector<64x128xf32> to vector<128xf32>
    %311 = vector.shape_cast %310 : vector<128xf32> to vector<1x128xf32>
    %cst_272 = arith.constant 6.400000e+01 : f32
    %312 = vector.broadcast %cst_272 : f32 to vector<1x128xf32>
    %313 = arith.divf %311, %312 : vector<1x128xf32>
    %c1_273 = arith.constant 1 : index
    %c0_274 = arith.constant 0 : index
    %314 = vector.load %arg29[%c1_273, %c0_274] : memref<2x256xf32, #tpu.memory_space<vmem>>, vector<1x128xf32>
    tpu.vector_store %arg29[%c1_273, %c0_274], %313 {strides = array<i32>} : memref<2x256xf32, #tpu.memory_space<vmem>>, vector<1x128xf32>,
    %c1_275 = arith.constant 1 : index
    %c128_276 = arith.constant 128 : index
    %315 = vector.load %arg29[%c1_275, %c128_276] : memref<2x256xf32, #tpu.memory_space<vmem>>, vector<1x128xf32>
    tpu.vector_store %arg29[%c1_275, %c128_276], %294 {strides = array<i32>} : memref<2x256xf32, #tpu.memory_space<vmem>>, vector<1x128xf32>,
    %c0_277 = arith.constant 0 : index
    %c0_278 = arith.constant 0 : index
    %316 = vector.load %arg29[%c0_277, %c0_278] : memref<2x256xf32, #tpu.memory_space<vmem>>, vector<2x256xf32>
    %c0_279 = arith.constant 0 : index
    %c0_280 = arith.constant 0 : index
    %317 = vector.load %arg18[%c0_279, %c0_280] : memref<256x64xf32, #tpu.memory_space<vmem>>, vector<256x64xf32>
    %cst_281 = arith.constant dense<0.000000e+00> : vector<2x64xf32>
    %318 = tpu.matmul %316, %317, %cst_281 {dimension_numbers = #tpu.dot_dimension_numbers<[1], [0], [0], [1], [0, 0, 1, 1], [], []>} : vector<2x256xf32>, vector<256x64xf32>, vector<2x64xf32> -> vector<2x64xf32>
    %c0_282 = arith.constant 0 : index
    %c0_283 = arith.constant 0 : index
    %319 = vector.load %arg19[%c0_282, %c0_283] : memref<1x64xf32, #tpu.memory_space<vmem>>, vector<1x64xf32>
    %320 = vector.broadcast %319 : vector<1x64xf32> to vector<2x64xf32>
    %321 = arith.addf %318, %320 : vector<2x64xf32>
    %c0_284 = arith.constant 0 : index
    %c0_285 = arith.constant 0 : index
    %322 = vector.load %arg22[%c0_284, %c0_285] : memref<1x64xf32, #tpu.memory_space<vmem>>, vector<1x64xf32>
    %323 = vector.broadcast %322 : vector<1x64xf32> to vector<2x64xf32>
    %324 = arith.subf %321, %323 : vector<2x64xf32>
    %c0_286 = arith.constant 0 : index
    %c0_287 = arith.constant 0 : index
    %325 = vector.load %arg23[%c0_286, %c0_287] : memref<1x64xf32, #tpu.memory_space<vmem>>, vector<1x64xf32>
    %cst_288 = arith.constant 9.99999974E-6 : f32
    %326 = vector.broadcast %cst_288 : f32 to vector<1x64xf32>
    %327 = arith.addf %325, %326 : vector<1x64xf32>
    %328 = math.rsqrt %327 : vector<1x64xf32>
    %329 = vector.broadcast %328 : vector<1x64xf32> to vector<2x64xf32>
    %330 = arith.mulf %324, %329 : vector<2x64xf32>
    %c0_289 = arith.constant 0 : index
    %c0_290 = arith.constant 0 : index
    %331 = vector.load %arg20[%c0_289, %c0_290] : memref<1x64xf32, #tpu.memory_space<vmem>>, vector<1x64xf32>
    %332 = vector.broadcast %331 : vector<1x64xf32> to vector<2x64xf32>
    %333 = arith.mulf %330, %332 : vector<2x64xf32>
    %c0_291 = arith.constant 0 : index
    %c0_292 = arith.constant 0 : index
    %334 = vector.load %arg21[%c0_291, %c0_292] : memref<1x64xf32, #tpu.memory_space<vmem>>, vector<1x64xf32>
    %335 = vector.broadcast %334 : vector<1x64xf32> to vector<2x64xf32>
    %336 = arith.addf %333, %335 : vector<2x64xf32>
    %cst_293 = arith.constant 0.000000e+00 : f32
    %337 = vector.broadcast %cst_293 : f32 to vector<2x64xf32>
    %338 = arith.cmpf oge, %336, %337 : vector<2x64xf32>
    %c0_294 = arith.constant 0 : index
    %c0_295 = arith.constant 0 : index
    %339 = vector.load %arg24[%c0_294, %c0_295] : memref<1x1xf32, #tpu.memory_space<vmem>>, vector<1x1xf32>
    %340 = vector.broadcast %339 : vector<1x1xf32> to vector<2x64xf32>
    %341 = arith.mulf %340, %336 : vector<2x64xf32>
    %342 = arith.select %338, %336, %341 : vector<2x64xi1>, vector<2x64xf32>
    %c0_296 = arith.constant 0 : index
    %c0_297 = arith.constant 0 : index
    %343 = vector.load %arg26[%c0_296, %c0_297] : memref<2x64xf32, #tpu.memory_space<vmem>>, vector<2x64xf32>
    tpu.vector_store %arg26[%c0_296, %c0_297], %342 {strides = array<i32>} : memref<2x64xf32, #tpu.memory_space<vmem>>, vector<2x64xf32>,
    %344 = arith.mulf %342, %342 : vector<2x64xf32>
    %cst_298 = arith.constant dense<0.000000e+00> : vector<2xf32>
    %345 = vector.multi_reduction <add>, %344, %cst_298 [1] : vector<2x64xf32> to vector<2xf32>
    %346 = vector.shape_cast %345 : vector<2xf32> to vector<2x1xf32>
    %347 = math.sqrt %346 : vector<2x1xf32>
    %cst_299 = arith.constant 9.99999996E-13 : f32
    %348 = vector.broadcast %cst_299 : f32 to vector<2x1xf32>
    %349 = arith.maximumf %347, %348 : vector<2x1xf32>
    %350 = vector.broadcast %349 : vector<2x1xf32> to vector<2x64xf32>
    %351 = arith.divf %342, %350 : vector<2x64xf32>
    %c0_300 = arith.constant 0 : index
    %c0_301 = arith.constant 0 : index
    %352 = vector.load %arg25[%c0_300, %c0_301] : memref<64x256xf32, #tpu.memory_space<vmem>>, vector<64x256xf32>
    %cst_302 = arith.constant dense<0.000000e+00> : vector<2x256xf32>
    %353 = tpu.matmul %351, %352, %cst_302 {dimension_numbers = #tpu.dot_dimension_numbers<[1], [0], [0], [1], [0, 0, 1, 1], [], []>} : vector<2x64xf32>, vector<64x256xf32>, vector<2x256xf32> -> vector<2x256xf32>
    %cst_303 = arith.constant dense<0xFF800000> : vector<2xf32>
    %354 = vector.multi_reduction <maximumf>, %353, %cst_303 [1] : vector<2x256xf32> to vector<2xf32>
    %355 = vector.shape_cast %354 : vector<2xf32> to vector<2x1xf32>
    %356 = vector.broadcast %355 : vector<2x1xf32> to vector<2x256xf32>
    %357 = arith.subf %353, %356 : vector<2x256xf32>
    %358 = math.exp %357 : vector<2x256xf32>
    %cst_304 = arith.constant dense<0.000000e+00> : vector<2xf32>
    %359 = vector.multi_reduction <add>, %358, %cst_304 [1] : vector<2x256xf32> to vector<2xf32>
    %360 = vector.shape_cast %359 : vector<2xf32> to vector<2x1xf32>
    %cst_305 = arith.constant 1.000000e+00 : f32
    %361 = vector.broadcast %cst_305 : f32 to vector<2x1xf32>
    %362 = arith.divf %361, %360 : vector<2x1xf32>
    %c0_306 = arith.constant 0 : index
    %c0_307 = arith.constant 0 : index
    %363 = vector.load %arg27[%c0_306, %c0_307] : memref<2x1xf32, #tpu.memory_space<vmem>>, vector<2x1xf32>
    tpu.vector_store %arg27[%c0_306, %c0_307], %362 {strides = array<i32>} : memref<2x1xf32, #tpu.memory_space<vmem>>, vector<2x1xf32>,
    %364 = tpu.iota {dimensions = array<i32: 1>} : vector<2x256xi32>
    %365 = arith.sitofp %364 : vector<2x256xi32> to vector<2x256xf32>
    %366 = vector.broadcast %355 : vector<2x1xf32> to vector<2x256xf32>
    %367 = arith.cmpf oge, %353, %366 : vector<2x256xf32>
    %cst_308 = arith.constant 2.560000e+02 : f32
    %368 = vector.broadcast %cst_308 : f32 to vector<2x256xf32>
    %369 = arith.select %367, %365, %368 : vector<2x256xi1>, vector<2x256xf32>
    %cst_309 = arith.constant dense<0x7F800000> : vector<2xf32>
    %370 = vector.multi_reduction <minimumf>, %369, %cst_309 [1] : vector<2x256xf32> to vector<2xf32>
    %371 = vector.shape_cast %370 : vector<2xf32> to vector<2x1xf32>
    %372 = arith.fptosi %371 : vector<2x1xf32> to vector<2x1xi32>
    %c0_310 = arith.constant 0 : index
    %c0_311 = arith.constant 0 : index
    %373 = vector.load %arg28[%c0_310, %c0_311] : memref<2x1xi32, #tpu.memory_space<vmem>>, vector<2x1xi32>
    tpu.vector_store %arg28[%c0_310, %c0_311], %372 {strides = array<i32>} : memref<2x1xi32, #tpu.memory_space<vmem>>, vector<2x1xi32>,
    return
  }
}

</mosaic_0001>

<llo_original>
// kernel: dolg_forward.1
$region0: #{dolg_forward.1}
  #allocation0 [shape = 'u32[]', space=smem, size = 0x4, offset = 0x4, fixed_abs, tag = 'smem constant byte address 0x4 - core index']
  #allocation1 [shape = 'u32[72,128]{1,0:T(1,128)}', space=vmem, size = 0x9000, scoped, tag = 'internal scratch']
  #allocation2 [shape = 'f32[2,256]{1,0:T(2,128)}', space=vmem, size = 0x800, scoped, tag = 'scratch operand']
  #allocation3 [shape = 'f32[1,1]{1,0:T(1,128)S(1)}', space=vmem, size = 0x200, scoped, tag = 'scoped memory for dolg_forward.1']
  #allocation4 [shape = 'f32[1,1]{1,0:T(1,128)S(1)}', space=vmem, size = 0x200, scoped, tag = 'scoped memory for dolg_forward.1']
  %s0 = inlined_call_operand.vmem [shape: f32[2,44,44,32], index: 0, kind: input, shape index: {}]
  %s1 = inlined_call_operand.vmem [shape: f32[32,32], index: 1, kind: input, shape index: {}]
  %s2 = inlined_call_operand.vmem [shape: f32[864,128], index: 2, kind: input, shape index: {}]
  %s3 = inlined_call_operand.vmem [shape: f32[1,128], index: 3, kind: input, shape index: {}]
  %s4 = inlined_call_operand.vmem [shape: f32[128,128], index: 4, kind: input, shape index: {}]
  %s5 = inlined_call_operand.vmem [shape: f32[1,128], index: 5, kind: input, shape index: {}]
  %s6 = inlined_call_operand.vmem [shape: f32[1,128], index: 6, kind: input, shape index: {}]
  %s7 = inlined_call_operand.vmem [shape: f32[1,128], index: 7, kind: input, shape index: {}]
  %s8 = inlined_call_operand.vmem [shape: f32[1,128], index: 8, kind: input, shape index: {}]
  %s9 = inlined_call_operand.vmem [shape: f32[1,128], index: 9, kind: input, shape index: {}]
  %s10 = inlined_call_operand.vmem [shape: f32[1,128], index: 10, kind: input, shape index: {}]
  %s11 = inlined_call_operand.<no memory space> [shape: f32[1,1], index: 11, kind: input, shape index: {}]
  %s12 = inlined_call_operand.vmem [shape: f32[32,128], index: 12, kind: input, shape index: {}]
  %s13 = inlined_call_operand.vmem [shape: f32[1,128], index: 13, kind: input, shape index: {}]
  %s14 = inlined_call_operand.vmem [shape: f32[1,128], index: 14, kind: input, shape index: {}]
  %s15 = inlined_call_operand.vmem [shape: f32[1,128], index: 15, kind: input, shape index: {}]
  %s16 = inlined_call_operand.vmem [shape: f32[1,128], index: 16, kind: input, shape index: {}]
  %s17 = inlined_call_operand.vmem [shape: f32[1,128], index: 17, kind: input, shape index: {}]
  %s18 = inlined_call_operand.vmem [shape: f32[256,64], index: 18, kind: input, shape index: {}]
  %s19 = inlined_call_operand.vmem [shape: f32[1,64], index: 19, kind: input, shape index: {}]
  %s20 = inlined_call_operand.vmem [shape: f32[1,64], index: 20, kind: input, shape index: {}]
  %s21 = inlined_call_operand.vmem [shape: f32[1,64], index: 21, kind: input, shape index: {}]
  %s22 = inlined_call_operand.vmem [shape: f32[1,64], index: 22, kind: input, shape index: {}]
  %s23 = inlined_call_operand.vmem [shape: f32[1,64], index: 23, kind: input, shape index: {}]
  %s24 = inlined_call_operand.<no memory space> [shape: f32[1,1], index: 24, kind: input, shape index: {}]
  %s25 = inlined_call_operand.vmem [shape: f32[64,256], index: 25, kind: input, shape index: {}]
  %s26 = inlined_call_operand.hbm [shape: f32[2,64], index: 26, kind: output, shape index: {0}]
  %s27 = inlined_call_operand.vmem [shape: f32[2,1], index: 27, kind: output, shape index: {1}]
  %s28 = inlined_call_operand.vmem [shape: s32[2,1], index: 28, kind: output, shape index: {2}]
  %29 = xla_tuple %s26, %s27, %s28
  %s30 = sld [smem:[#allocation0]]
  $region130: #{dolg_forward.1} parent=0
    _
  %s32 = ssub.s32 1, %s30
  %s33 = scalar_select 0, %s32, %s30
  %v34 = vstv %s11
  %35 = vst [vmem:[#allocation3] sm:$0x1] %v34
  %v36 = vstv %s24
  %37 = vst [vmem:[#allocation4] sm:$0x1] %v36
  $region1: #{dolg_forward.1} parent=0
    #allocation5 [shape = 'u8[1024]{0}', space=vmem, size = 0x400, scoped, tag = 'output window, operand 0, single buffered']
    #allocation6 [shape = 's32[1]{0}', space=sflag, size = 0x4, scoped, tag = 'scoped memory for dolg_forward.1']
    %38 = vsyncpa [#allocation6], 0
    // Predicated region
    $region2: #{dolg_forward.1} parent=1 // pred_check
      _
    $region3: #{dolg_forward.1} parent=1 // pred_check_branch
      %40 = sbr.rel (0) target = $region5
    $region4: #{dolg_forward.1} parent=1 // pred_region
      _
    $region5: #{dolg_forward.1} parent=1 // pred_fallthru
      _
    // Predicated region
    $region6: #{dolg_forward.1} parent=1 // pred_check
      _
    $region7: #{dolg_forward.1} parent=1 // pred_check_branch
      %42 = sbr.rel (0) target = $region9
    $region8: #{dolg_forward.1} parent=1 // pred_region
      _
    $region9: #{dolg_forward.1} parent=1 // pred_fallthru
      _
    // Predicated region
    $region10: #{dolg_forward.1} parent=1 // pred_check
      _
    $region11: #{dolg_forward.1} parent=1 // pred_check_branch
      %44 = sbr.rel (0) target = $region13
    $region12: #{dolg_forward.1} parent=1 // pred_region
      _
    $region13: #{dolg_forward.1} parent=1 // pred_fallthru
      _
    // Predicated region
    $region14: #{dolg_forward.1} parent=1 // pred_check
      _
    $region15: #{dolg_forward.1} parent=1 // pred_check_branch
      %46 = sbr.rel (0) target = $region17
    $region16: #{dolg_forward.1} parent=1 // pred_region
      _
    $region17: #{dolg_forward.1} parent=1 // pred_fallthru
      _
    // Predicated region
    $region18: #{dolg_forward.1} parent=1 // pred_check
      _
    $region19: #{dolg_forward.1} parent=1 // pred_check_branch
      %48 = sbr.rel (0) target = $region21
    $region20: #{dolg_forward.1} parent=1 // pred_region
      _
    $region21: #{dolg_forward.1} parent=1 // pred_fallthru
      _
    // Predicated region
    $region22: #{dolg_forward.1} parent=1 // pred_check
      _
    $region23: #{dolg_forward.1} parent=1 // pred_check_branch
      %50 = sbr.rel (0) target = $region25
    $region24: #{dolg_forward.1} parent=1 // pred_region
      _
    $region25: #{dolg_forward.1} parent=1 // pred_fallthru
      _
    // Predicated region
    $region26: #{dolg_forward.1} parent=1 // pred_check
      _
    $region27: #{dolg_forward.1} parent=1 // pred_check_branch
      %52 = sbr.rel (0) target = $region29
    $region28: #{dolg_forward.1} parent=1 // pred_region
      _
    $region29: #{dolg_forward.1} parent=1 // pred_fallthru
      _
    // Predicated region
    $region30: #{dolg_forward.1} parent=1 // pred_check
      _
    $region31: #{dolg_forward.1} parent=1 // pred_check_branch
      %54 = sbr.rel (0) target = $region33
    $region32: #{dolg_forward.1} parent=1 // pred_region
      _
    $region33: #{dolg_forward.1} parent=1 // pred_fallthru
      _
    // Predicated region
    $region34: #{dolg_forward.1} parent=1 // pred_check
      _
    $region35: #{dolg_forward.1} parent=1 // pred_check_branch
      %56 = sbr.rel (0) target = $region37
    $region36: #{dolg_forward.1} parent=1 // pred_region
      _
    $region37: #{dolg_forward.1} parent=1 // pred_fallthru
      _
    // Predicated region
    $region38: #{dolg_forward.1} parent=1 // pred_check
      _
    $region39: #{dolg_forward.1} parent=1 // pred_check_branch
      %58 = sbr.rel (0) target = $region41
    $region40: #{dolg_forward.1} parent=1 // pred_region
      _
    $region41: #{dolg_forward.1} parent=1 // pred_fallthru
      _
    // Predicated region
    $region42: #{dolg_forward.1} parent=1 // pred_check
      _
    $region43: #{dolg_forward.1} parent=1 // pred_check_branch
      %60 = sbr.rel (0) target = $region45
    $region44: #{dolg_forward.1} parent=1 // pred_region
      _
    $region45: #{dolg_forward.1} parent=1 // pred_fallthru
      _
    // Predicated region
    $region46: #{dolg_forward.1} parent=1 // pred_check
      _
    $region47: #{dolg_forward.1} parent=1 // pred_check_branch
      %62 = sbr.rel (0) target = $region49
    $region48: #{dolg_forward.1} parent=1 // pred_region
      _
    $region49: #{dolg_forward.1} parent=1 // pred_fallthru
      _
    // Predicated region
    $region50: #{dolg_forward.1} parent=1 // pred_check
      _
    $region51: #{dolg_forward.1} parent=1 // pred_check_branch
      %64 = sbr.rel (0) target = $region53
    $region52: #{dolg_forward.1} parent=1 // pred_region
      _
    $region53: #{dolg_forward.1} parent=1 // pred_fallthru
      _
    // Predicated region
    $region54: #{dolg_forward.1} parent=1 // pred_check
      _
    $region55: #{dolg_forward.1} parent=1 // pred_check_branch
      %66 = sbr.rel (0) target = $region57
    $region56: #{dolg_forward.1} parent=1 // pred_region
      _
    $region57: #{dolg_forward.1} parent=1 // pred_fallthru
      _
    // Predicated region
    $region58: #{dolg_forward.1} parent=1 // pred_check
      _
    $region59: #{dolg_forward.1} parent=1 // pred_check_branch
      %68 = sbr.rel (0) target = $region61
    $region60: #{dolg_forward.1} parent=1 // pred_region
      _
    $region61: #{dolg_forward.1} parent=1 // pred_fallthru
      _
    // Predicated region
    $region62: #{dolg_forward.1} parent=1 // pred_check
      _
    $region63: #{dolg_forward.1} parent=1 // pred_check_branch
      %70 = sbr.rel (0) target = $region65
    $region64: #{dolg_forward.1} parent=1 // pred_region
      _
    $region65: #{dolg_forward.1} parent=1 // pred_fallthru
      _
    // Predicated region
    $region66: #{dolg_forward.1} parent=1 // pred_check
      _
    $region67: #{dolg_forward.1} parent=1 // pred_check_branch
      %72 = sbr.rel (0) target = $region69
    $region68: #{dolg_forward.1} parent=1 // pred_region
      _
    $region69: #{dolg_forward.1} parent=1 // pred_fallthru
      _
    // Predicated region
    $region70: #{dolg_forward.1} parent=1 // pred_check
      _
    $region71: #{dolg_forward.1} parent=1 // pred_check_branch
      %74 = sbr.rel (0) target = $region73
    $region72: #{dolg_forward.1} parent=1 // pred_region
      _
    $region73: #{dolg_forward.1} parent=1 // pred_fallthru
      _
    // Predicated region
    $region74: #{dolg_forward.1} parent=1 // pred_check
      _
    $region75: #{dolg_forward.1} parent=1 // pred_check_branch
      %76 = sbr.rel (0) target = $region77
    $region76: #{dolg_forward.1} parent=1 // pred_region
      _
    $region77: #{dolg_forward.1} parent=1 // pred_fallthru
      _
    // Predicated region
    $region78: #{dolg_forward.1} parent=1 // pred_check
      _
    $region79: #{dolg_forward.1} parent=1 // pred_check_branch
      %78 = sbr.rel (0) target = $region81
    $region80: #{dolg_forward.1} parent=1 // pred_region
      _
    $region81: #{dolg_forward.1} parent=1 // pred_fallthru
      _
    // Predicated region
    $region82: #{dolg_forward.1} parent=1 // pred_check
      _
    $region83: #{dolg_forward.1} parent=1 // pred_check_branch
      %80 = sbr.rel (0) target = $region85
    $region84: #{dolg_forward.1} parent=1 // pred_region
      _
    $region85: #{dolg_forward.1} parent=1 // pred_fallthru
      _
    // Predicated region
    $region86: #{dolg_forward.1} parent=1 // pred_check
      _
    $region87: #{dolg_forward.1} parent=1 // pred_check_branch
      %82 = sbr.rel (0) target = $region89
    $region88: #{dolg_forward.1} parent=1 // pred_region
      _
    $region89: #{dolg_forward.1} parent=1 // pred_fallthru
      _
    // Predicated region
    $region90: #{dolg_forward.1} parent=1 // pred_check
      _
    $region91: #{dolg_forward.1} parent=1 // pred_check_branch
      %84 = sbr.rel (0) target = $region93
    $region92: #{dolg_forward.1} parent=1 // pred_region
      _
    $region93: #{dolg_forward.1} parent=1 // pred_fallthru
      _
    // Predicated region
    $region94: #{dolg_forward.1} parent=1 // pred_check
      _
    $region95: #{dolg_forward.1} parent=1 // pred_check_branch
      %86 = sbr.rel (0) target = $region97
    $region96: #{dolg_forward.1} parent=1 // pred_region
      _
    $region97: #{dolg_forward.1} parent=1 // pred_fallthru
      _
    // Predicated region
    $region98: #{dolg_forward.1} parent=1 // pred_check
      _
    $region99: #{dolg_forward.1} parent=1 // pred_check_branch
      %88 = sbr.rel (0) target = $region101
    $region100: #{dolg_forward.1} parent=1 // pred_region
      _
    $region101: #{dolg_forward.1} parent=1 // pred_fallthru
      _
    // Predicated region
    $region102: #{dolg_forward.1} parent=1 // pred_check
      _
    $region103: #{dolg_forward.1} parent=1 // pred_check_branch
      %90 = sbr.rel (0) target = $region105
    $region104: #{dolg_forward.1} parent=1 // pred_region
      _
    $region105: #{dolg_forward.1} parent=1 // pred_fallthru
      _
    %s91 = scalar_lea.vmem %s0, 576
    %v92 = vld [vmem:[%s91 + $0xc] sm:$0xff]
    %v93 = vld [vmem:[%s91 + $0x3c] sm:$0xff]
    %v94 = vld [vmem:[%s91 + $0x6c] sm:$0xff]
    %v95 = vld [vmem:[%s91 + $0x9c] sm:$0xff]
    %v96 = vld [vmem:[%s91 + $0xcc] sm:$0xff]
    %v97 = vld [vmem:[%s91 + $0xfc] sm:$0xff]
    %v98 = vld [vmem:[%s91 + $0x12c] sm:$0xff]
    %v99 = vld [vmem:[%s91 + $0x15c] sm:$0xff]
    %v100 = vld [vmem:[%s91 + $0x12] sm:$0xff]
    %v101 = vld [vmem:[%s91 + $0x42] sm:$0xff]
    %v102 = vld [vmem:[%s91 + $0x72] sm:$0xff]
    %v103 = vld [vmem:[%s91 + $0xa2] sm:$0xff]
    %v104 = vld [vmem:[%s91 + $0xd2] sm:$0xff]
    %v105 = vld [vmem:[%s91 + $0x102] sm:$0xff]
    %v106 = vld [vmem:[%s91 + $0x132] sm:$0xff]
    %v107 = vld [vmem:[%s91 + $0x162] sm:$0xff]
    %v108 = vld [vmem:[%s91 + $0x18] sm:$0xff]
    %v109 = vld [vmem:[%s91 + $0x48] sm:$0xff]
    %v110 = vld [vmem:[%s91 + $0x78] sm:$0xff]
    %v111 = vld [vmem:[%s91 + $0xa8] sm:$0xff]
    %v112 = vld [vmem:[%s91 + $0xd8] sm:$0xff]
    %v113 = vld [vmem:[%s91 + $0x108] sm:$0xff]
    %v114 = vld [vmem:[%s91 + $0x138] sm:$0xff]
    %v115 = vld [vmem:[%s91 + $0x168] sm:$0xff]
    %s116 = scalar_lea.vmem %s0, 864
    %v117 = vld [vmem:[%s116 + $0xc] sm:$0xff]
    %v118 = vld [vmem:[%s116 + $0x3c] sm:$0xff]
    %v119 = vld [vmem:[%s116 + $0x6c] sm:$0xff]
    %v120 = vld [vmem:[%s116 + $0x9c] sm:$0xff]
    %v121 = vld [vmem:[%s116 + $0xcc] sm:$0xff]
    %v122 = vld [vmem:[%s116 + $0xfc] sm:$0xff]
    %v123 = vld [vmem:[%s116 + $0x12c] sm:$0xff]
    %v124 = vld [vmem:[%s116 + $0x15c] sm:$0xff]
    %v125 = vld [vmem:[%s116 + $0x12] sm:$0xff]
    %v126 = vld [vmem:[%s116 + $0x42] sm:$0xff]
    %v127 = vld [vmem:[%s116 + $0x72] sm:$0xff]
    %v128 = vld [vmem:[%s116 + $0xa2] sm:$0xff]
    %v129 = vld [vmem:[%s116 + $0xd2] sm:$0xff]
    %v130 = vld [vmem:[%s116 + $0x102] sm:$0xff]
    %v131 = vld [vmem:[%s116 + $0x132] sm:$0xff]
    %v132 = vld [vmem:[%s116 + $0x162] sm:$0xff]
    %v133 = vld [vmem:[%s116 + $0x18] sm:$0xff]
    %v134 = vld [vmem:[%s116 + $0x48] sm:$0xff]
    %v135 = vld [vmem:[%s116 + $0x78] sm:$0xff]
    %v136 = vld [vmem:[%s116 + $0xa8] sm:$0xff]
    %v137 = vld [vmem:[%s116 + $0xd8] sm:$0xff]
    %v138 = vld [vmem:[%s116 + $0x108] sm:$0xff]
    %v139 = vld [vmem:[%s116 + $0x138] sm:$0xff]
    %v140 = vld [vmem:[%s116 + $0x168] sm:$0xff]
    %s141 = scalar_lea.vmem %s0, 1152
    %v142 = vld [vmem:[%s141 + $0xc] sm:$0xff]
    %v143 = vld [vmem:[%s141 + $0x3c] sm:$0xff]
    %v144 = vld [vmem:[%s141 + $0x6c] sm:$0xff]
    %v145 = vld [vmem:[%s141 + $0x9c] sm:$0xff]
    %v146 = vld [vmem:[%s141 + $0xcc] sm:$0xff]
    %v147 = vld [vmem:[%s141 + $0xfc] sm:$0xff]
    %v148 = vld [vmem:[%s141 + $0x12c] sm:$0xff]
    %v149 = vld [vmem:[%s141 + $0x15c] sm:$0xff]
    %v150 = vld [vmem:[%s141 + $0x12] sm:$0xff]
    %v151 = vld [vmem:[%s141 + $0x42] sm:$0xff]
    %v152 = vld [vmem:[%s141 + $0x72] sm:$0xff]
    %v153 = vld [vmem:[%s141 + $0xa2] sm:$0xff]
    %v154 = vld [vmem:[%s141 + $0xd2] sm:$0xff]
    %v155 = vld [vmem:[%s141 + $0x102] sm:$0xff]
    %v156 = vld [vmem:[%s141 + $0x132] sm:$0xff]
    %v157 = vld [vmem:[%s141 + $0x162] sm:$0xff]
    %v158 = vld [vmem:[%s141 + $0x18] sm:$0xff]
    %v159 = vld [vmem:[%s141 + $0x48] sm:$0xff]
    %v160 = vld [vmem:[%s141 + $0x78] sm:$0xff]
    %v161 = vld [vmem:[%s141 + $0xa8] sm:$0xff]
    %v162 = vld [vmem:[%s141 + $0xd8] sm:$0xff]
    %v163 = vld [vmem:[%s141 + $0x108] sm:$0xff]
    %v164 = vld [vmem:[%s141 + $0x138] sm:$0xff]
    %v165 = vld [vmem:[%s141 + $0x168] sm:$0xff]
    %s166 = scalar_lea.vmem %s0, 288
    %v167 = vld [vmem:[%s166 + $0x6] sm:$0xff]
    %v168 = vld [vmem:[%s166 + $0x36] sm:$0xff]
    %v169 = vld [vmem:[%s166 + $0x66] sm:$0xff]
    %v170 = vld [vmem:[%s166 + $0x96] sm:$0xff]
    %v171 = vld [vmem:[%s166 + $0xc6] sm:$0xff]
    %v172 = vld [vmem:[%s166 + $0xf6] sm:$0xff]
    %v173 = vld [vmem:[%s166 + $0x126] sm:$0xff]
    %v174 = vld [vmem:[%s166 + $0x156] sm:$0xff]
    %v175 = vld [vmem:[%s166 + $0x12] sm:$0xff]
    %v176 = vld [vmem:[%s166 + $0x42] sm:$0xff]
    %v177 = vld [vmem:[%s166 + $0x72] sm:$0xff]
    %v178 = vld [vmem:[%s166 + $0xa2] sm:$0xff]
    %v179 = vld [vmem:[%s166 + $0xd2] sm:$0xff]
    %v180 = vld [vmem:[%s166 + $0x102] sm:$0xff]
    %v181 = vld [vmem:[%s166 + $0x132] sm:$0xff]
    %v182 = vld [vmem:[%s166 + $0x162] sm:$0xff]
    %v183 = vld [vmem:[%s166 + $0x1e] sm:$0xff]
    %v184 = vld [vmem:[%s166 + $0x4e] sm:$0xff]
    %v185 = vld [vmem:[%s166 + $0x7e] sm:$0xff]
    %v186 = vld [vmem:[%s166 + $0xae] sm:$0xff]
    %v187 = vld [vmem:[%s166 + $0xde] sm:$0xff]
    %v188 = vld [vmem:[%s166 + $0x10e] sm:$0xff]
    %v189 = vld [vmem:[%s166 + $0x13e] sm:$0xff]
    %v190 = vld [vmem:[%s166 + $0x16e] sm:$0xff]
    %v191 = vld [vmem:[%s116 + $0x6] sm:$0xff]
    %v192 = vld [vmem:[%s116 + $0x36] sm:$0xff]
    %v193 = vld [vmem:[%s116 + $0x66] sm:$0xff]
    %v194 = vld [vmem:[%s116 + $0x96] sm:$0xff]
    %v195 = vld [vmem:[%s116 + $0xc6] sm:$0xff]
    %v196 = vld [vmem:[%s116 + $0xf6] sm:$0xff]
    %v197 = vld [vmem:[%s116 + $0x126] sm:$0xff]
    %v198 = vld [vmem:[%s116 + $0x156] sm:$0xff]
    %v199 = vld [vmem:[%s116 + $0x1e] sm:$0xff]
    %v200 = vld [vmem:[%s116 + $0x4e] sm:$0xff]
    %v201 = vld [vmem:[%s116 + $0x7e] sm:$0xff]
    %v202 = vld [vmem:[%s116 + $0xae] sm:$0xff]
    %v203 = vld [vmem:[%s116 + $0xde] sm:$0xff]
    %v204 = vld [vmem:[%s116 + $0x10e] sm:$0xff]
    %v205 = vld [vmem:[%s116 + $0x13e] sm:$0xff]
    %v206 = vld [vmem:[%s116 + $0x16e] sm:$0xff]
    %s207 = scalar_lea.vmem %s0, 1440
    %v208 = vld [vmem:[%s207 + $0x6] sm:$0xff]
    %v209 = vld [vmem:[%s207 + $0x36] sm:$0xff]
    %v210 = vld [vmem:[%s207 + $0x66] sm:$0xff]
    %v211 = vld [vmem:[%s207 + $0x96] sm:$0xff]
    %v212 = vld [vmem:[%s207 + $0xc6] sm:$0xff]
    %v213 = vld [vmem:[%s207 + $0xf6] sm:$0xff]
    %v214 = vld [vmem:[%s207 + $0x126] sm:$0xff]
    %v215 = vld [vmem:[%s207 + $0x156] sm:$0xff]
    %v216 = vld [vmem:[%s207 + $0x12] sm:$0xff]
    %v217 = vld [vmem:[%s207 + $0x42] sm:$0xff]
    %v218 = vld [vmem:[%s207 + $0x72] sm:$0xff]
    %v219 = vld [vmem:[%s207 + $0xa2] sm:$0xff]
    %v220 = vld [vmem:[%s207 + $0xd2] sm:$0xff]
    %v221 = vld [vmem:[%s207 + $0x102] sm:$0xff]
    %v222 = vld [vmem:[%s207 + $0x132] sm:$0xff]
    %v223 = vld [vmem:[%s207 + $0x162] sm:$0xff]
    %v224 = vld [vmem:[%s207 + $0x1e] sm:$0xff]
    %v225 = vld [vmem:[%s207 + $0x4e] sm:$0xff]
    %v226 = vld [vmem:[%s207 + $0x7e] sm:$0xff]
    %v227 = vld [vmem:[%s207 + $0xae] sm:$0xff]
    %v228 = vld [vmem:[%s207 + $0xde] sm:$0xff]
    %v229 = vld [vmem:[%s207 + $0x10e] sm:$0xff]
    %v230 = vld [vmem:[%s207 + $0x13e] sm:$0xff]
    %v231 = vld [vmem:[%s207 + $0x16e] sm:$0xff]
    %v232 = vld [vmem:[%s0] sm:$0xff]
    %v233 = vld [vmem:[%s0 + $0x30] sm:$0xff]
    %v234 = vld [vmem:[%s0 + $0x60] sm:$0xff]
    %v235 = vld [vmem:[%s0 + $0x90] sm:$0xff]
    %v236 = vld [vmem:[%s0 + $0xc0] sm:$0xff]
    %v237 = vld [vmem:[%s0 + $0xf0] sm:$0xff]
    %v238 = vld [vmem:[%s0 + $0x120] sm:$0xff]
    %v239 = vld [vmem:[%s0 + $0x150] sm:$0xff]
    %v240 = vld [vmem:[%s0 + $0x12] sm:$0xff]
    %v241 = vld [vmem:[%s0 + $0x42] sm:$0xff]
    %v242 = vld [vmem:[%s0 + $0x72] sm:$0xff]
    %v243 = vld [vmem:[%s0 + $0xa2] sm:$0xff]
    %v244 = vld [vmem:[%s0 + $0xd2] sm:$0xff]
    %v245 = vld [vmem:[%s0 + $0x102] sm:$0xff]
    %v246 = vld [vmem:[%s0 + $0x132] sm:$0xff]
    %v247 = vld [vmem:[%s0 + $0x162] sm:$0xff]
    %v248 = vld [vmem:[%s0 + $0x24] sm:$0xff]
    %v249 = vld [vmem:[%s0 + $0x54] sm:$0xff]
    %v250 = vld [vmem:[%s0 + $0x84] sm:$0xff]
    %v251 = vld [vmem:[%s0 + $0xb4] sm:$0xff]
    %v252 = vld [vmem:[%s0 + $0xe4] sm:$0xff]
    %v253 = vld [vmem:[%s0 + $0x114] sm:$0xff]
    %v254 = vld [vmem:[%s0 + $0x144] sm:$0xff]
    %v255 = vld [vmem:[%s0 + $0x174] sm:$0xff]
    %v256 = vld [vmem:[%s116] sm:$0xff]
    %v257 = vld [vmem:[%s116 + $0x30] sm:$0xff]
    %v258 = vld [vmem:[%s116 + $0x60] sm:$0xff]
    %v259 = vld [vmem:[%s116 + $0x90] sm:$0xff]
    %v260 = vld [vmem:[%s116 + $0xc0] sm:$0xff]
    %v261 = vld [vmem:[%s116 + $0xf0] sm:$0xff]
    %v262 = vld [vmem:[%s116 + $0x120] sm:$0xff]
    %v263 = vld [vmem:[%s116 + $0x150] sm:$0xff]
    %v264 = vld [vmem:[%s116 + $0x24] sm:$0xff]
    %v265 = vld [vmem:[%s116 + $0x54] sm:$0xff]
    %v266 = vld [vmem:[%s116 + $0x84] sm:$0xff]
    %v267 = vld [vmem:[%s116 + $0xb4] sm:$0xff]
    %v268 = vld [vmem:[%s116 + $0xe4] sm:$0xff]
    %v269 = vld [vmem:[%s116 + $0x114] sm:$0xff]
    %v270 = vld [vmem:[%s116 + $0x144] sm:$0xff]
    %v271 = vld [vmem:[%s116 + $0x174] sm:$0xff]
    %s272 = scalar_lea.vmem %s0, 1728
    %v273 = vld [vmem:[%s272] sm:$0xff]
    %v274 = vld [vmem:[%s272 + $0x30] sm:$0xff]
    %v275 = vld [vmem:[%s272 + $0x60] sm:$0xff]
    %v276 = vld [vmem:[%s272 + $0x90] sm:$0xff]
    %v277 = vld [vmem:[%s272 + $0xc0] sm:$0xff]
    %v278 = vld [vmem:[%s272 + $0xf0] sm:$0xff]
    %v279 = vld [vmem:[%s272 + $0x120] sm:$0xff]
    %v280 = vld [vmem:[%s272 + $0x150] sm:$0xff]
    %v281 = vld [vmem:[%s272 + $0x12] sm:$0xff]
    %v282 = vld [vmem:[%s272 + $0x42] sm:$0xff]
    %v283 = vld [vmem:[%s272 + $0x72] sm:$0xff]
    %v284 = vld [vmem:[%s272 + $0xa2] sm:$0xff]
    %v285 = vld [vmem:[%s272 + $0xd2] sm:$0xff]
    %v286 = vld [vmem:[%s272 + $0x102] sm:$0xff]
    %v287 = vld [vmem:[%s272 + $0x132] sm:$0xff]
    %v288 = vld [vmem:[%s272 + $0x162] sm:$0xff]
    %v289 = vld [vmem:[%s272 + $0x24] sm:$0xff]
    %v290 = vld [vmem:[%s272 + $0x54] sm:$0xff]
    %v291 = vld [vmem:[%s272 + $0x84] sm:$0xff]
    %v292 = vld [vmem:[%s272 + $0xb4] sm:$0xff]
    %v293 = vld [vmem:[%s272 + $0xe4] sm:$0xff]
    %v294 = vld [vmem:[%s272 + $0x114] sm:$0xff]
    %v295 = vld [vmem:[%s272 + $0x144] sm:$0xff]
    %v296 = vld [vmem:[%s272 + $0x174] sm:$0xff]
    %305 = vrot.lane.b32.xlu0 %v100, 32
    %v306 = vpop.permute.xlu0 %305
    %307 = vrot.lane.b32.xlu0 %v101, 32
    %v308 = vpop.permute.xlu0 %307
    %309 = vrot.lane.b32.xlu0 %v102, 32
    %v310 = vpop.permute.xlu0 %309
    %311 = vrot.lane.b32.xlu0 %v103, 32
    %v312 = vpop.permute.xlu0 %311
    %313 = vrot.lane.b32.xlu0 %v104, 32
    %v314 = vpop.permute.xlu0 %313
    %315 = vrot.lane.b32.xlu0 %v105, 32
    %v316 = vpop.permute.xlu0 %315
    %317 = vrot.lane.b32.xlu0 %v106, 32
    %v318 = vpop.permute.xlu0 %317
    %319 = vrot.lane.b32.xlu0 %v107, 32
    %v320 = vpop.permute.xlu0 %319
    %337 = vrot.lane.b32.xlu0 %v108, 64
    %v338 = vpop.permute.xlu0 %337
    %339 = vrot.lane.b32.xlu0 %v109, 64
    %v340 = vpop.permute.xlu0 %339
    %341 = vrot.lane.b32.xlu0 %v110, 64
    %v342 = vpop.permute.xlu0 %341
    %343 = vrot.lane.b32.xlu0 %v111, 64
    %v344 = vpop.permute.xlu0 %343
    %345 = vrot.lane.b32.xlu0 %v112, 64
    %v346 = vpop.permute.xlu0 %345
    %347 = vrot.lane.b32.xlu0 %v113, 64
    %v348 = vpop.permute.xlu0 %347
    %349 = vrot.lane.b32.xlu0 %v114, 64
    %v350 = vpop.permute.xlu0 %349
    %351 = vrot.lane.b32.xlu0 %v115, 64
    %v352 = vpop.permute.xlu0 %351
    %369 = vrot.lane.b32.xlu0 %v117, 96
    %v370 = vpop.permute.xlu0 %369
    %371 = vrot.lane.b32.xlu0 %v118, 96
    %v372 = vpop.permute.xlu0 %371
    %373 = vrot.lane.b32.xlu0 %v119, 96
    %v374 = vpop.permute.xlu0 %373
    %375 = vrot.lane.b32.xlu0 %v120, 96
    %v376 = vpop.permute.xlu0 %375
    %377 = vrot.lane.b32.xlu0 %v121, 96
    %v378 = vpop.permute.xlu0 %377
    %379 = vrot.lane.b32.xlu0 %v122, 96
    %v380 = vpop.permute.xlu0 %379
    %381 = vrot.lane.b32.xlu0 %v123, 96
    %v382 = vpop.permute.xlu0 %381
    %383 = vrot.lane.b32.xlu0 %v124, 96
    %v384 = vpop.permute.xlu0 %383
    %401 = vrot.lane.b32.xlu0 %v133, 32
    %v402 = vpop.permute.xlu0 %401
    %403 = vrot.lane.b32.xlu0 %v134, 32
    %v404 = vpop.permute.xlu0 %403
    %405 = vrot.lane.b32.xlu0 %v135, 32
    %v406 = vpop.permute.xlu0 %405
    %407 = vrot.lane.b32.xlu0 %v136, 32
    %v408 = vpop.permute.xlu0 %407
    %409 = vrot.lane.b32.xlu0 %v137, 32
    %v410 = vpop.permute.xlu0 %409
    %411 = vrot.lane.b32.xlu0 %v138, 32
    %v412 = vpop.permute.xlu0 %411
    %413 = vrot.lane.b32.xlu0 %v139, 32
    %v414 = vpop.permute.xlu0 %413
    %415 = vrot.lane.b32.xlu0 %v140, 32
    %v416 = vpop.permute.xlu0 %415
    %433 = vrot.lane.b32.xlu0 %v142, 64
    %v434 = vpop.permute.xlu0 %433
    %435 = vrot.lane.b32.xlu0 %v143, 64
    %v436 = vpop.permute.xlu0 %435
    %437 = vrot.lane.b32.xlu0 %v144, 64
    %v438 = vpop.permute.xlu0 %437
    %439 = vrot.lane.b32.xlu0 %v145, 64
    %v440 = vpop.permute.xlu0 %439
    %441 = vrot.lane.b32.xlu0 %v146, 64
    %v442 = vpop.permute.xlu0 %441
    %443 = vrot.lane.b32.xlu0 %v147, 64
    %v444 = vpop.permute.xlu0 %443
    %445 = vrot.lane.b32.xlu0 %v148, 64
    %v446 = vpop.permute.xlu0 %445
    %447 = vrot.lane.b32.xlu0 %v149, 64
    %v448 = vpop.permute.xlu0 %447
    %465 = vrot.lane.b32.xlu0 %v150, 96
    %v466 = vpop.permute.xlu0 %465
    %467 = vrot.lane.b32.xlu0 %v151, 96
    %v468 = vpop.permute.xlu0 %467
    %469 = vrot.lane.b32.xlu0 %v152, 96
    %v470 = vpop.permute.xlu0 %469
    %471 = vrot.lane.b32.xlu0 %v153, 96
    %v472 = vpop.permute.xlu0 %471
    %473 = vrot.lane.b32.xlu0 %v154, 96
    %v474 = vpop.permute.xlu0 %473
    %475 = vrot.lane.b32.xlu0 %v155, 96
    %v476 = vpop.permute.xlu0 %475
    %477 = vrot.lane.b32.xlu0 %v156, 96
    %v478 = vpop.permute.xlu0 %477
    %479 = vrot.lane.b32.xlu0 %v157, 96
    %v480 = vpop.permute.xlu0 %479
    %497 = vrot.lane.b32.xlu0 %v167, 32
    %v498 = vpop.permute.xlu0 %497
    %499 = vrot.lane.b32.xlu0 %v168, 32
    %v500 = vpop.permute.xlu0 %499
    %501 = vrot.lane.b32.xlu0 %v169, 32
    %v502 = vpop.permute.xlu0 %501
    %503 = vrot.lane.b32.xlu0 %v170, 32
    %v504 = vpop.permute.xlu0 %503
    %505 = vrot.lane.b32.xlu0 %v171, 32
    %v506 = vpop.permute.xlu0 %505
    %507 = vrot.lane.b32.xlu0 %v172, 32
    %v508 = vpop.permute.xlu0 %507
    %509 = vrot.lane.b32.xlu0 %v173, 32
    %v510 = vpop.permute.xlu0 %509
    %511 = vrot.lane.b32.xlu0 %v174, 32
    %v512 = vpop.permute.xlu0 %511
    %529 = vrot.lane.b32.xlu0 %v175, 64
    %v530 = vpop.permute.xlu0 %529
    %531 = vrot.lane.b32.xlu0 %v176, 64
    %v532 = vpop.permute.xlu0 %531
    %533 = vrot.lane.b32.xlu0 %v177, 64
    %v534 = vpop.permute.xlu0 %533
    %535 = vrot.lane.b32.xlu0 %v178, 64
    %v536 = vpop.permute.xlu0 %535
    %537 = vrot.lane.b32.xlu0 %v179, 64
    %v538 = vpop.permute.xlu0 %537
    %539 = vrot.lane.b32.xlu0 %v180, 64
    %v540 = vpop.permute.xlu0 %539
    %541 = vrot.lane.b32.xlu0 %v181, 64
    %v542 = vpop.permute.xlu0 %541
    %543 = vrot.lane.b32.xlu0 %v182, 64
    %v544 = vpop.permute.xlu0 %543
    %561 = vrot.lane.b32.xlu0 %v183, 96
    %v562 = vpop.permute.xlu0 %561
    %563 = vrot.lane.b32.xlu0 %v184, 96
    %v564 = vpop.permute.xlu0 %563
    %565 = vrot.lane.b32.xlu0 %v185, 96
    %v566 = vpop.permute.xlu0 %565
    %567 = vrot.lane.b32.xlu0 %v186, 96
    %v568 = vpop.permute.xlu0 %567
    %569 = vrot.lane.b32.xlu0 %v187, 96
    %v570 = vpop.permute.xlu0 %569
    %571 = vrot.lane.b32.xlu0 %v188, 96
    %v572 = vpop.permute.xlu0 %571
    %573 = vrot.lane.b32.xlu0 %v189, 96
    %v574 = vpop.permute.xlu0 %573
    %575 = vrot.lane.b32.xlu0 %v190, 96
    %v576 = vpop.permute.xlu0 %575
    %593 = vrot.lane.b32.xlu0 %v125, 32
    %v594 = vpop.permute.xlu0 %593
    %595 = vrot.lane.b32.xlu0 %v126, 32
    %v596 = vpop.permute.xlu0 %595
    %597 = vrot.lane.b32.xlu0 %v127, 32
    %v598 = vpop.permute.xlu0 %597
    %599 = vrot.lane.b32.xlu0 %v128, 32
    %v600 = vpop.permute.xlu0 %599
    %601 = vrot.lane.b32.xlu0 %v129, 32
    %v602 = vpop.permute.xlu0 %601
    %603 = vrot.lane.b32.xlu0 %v130, 32
    %v604 = vpop.permute.xlu0 %603
    %605 = vrot.lane.b32.xlu0 %v131, 32
    %v606 = vpop.permute.xlu0 %605
    %607 = vrot.lane.b32.xlu0 %v132, 32
    %v608 = vpop.permute.xlu0 %607
    %625 = vrot.lane.b32.xlu0 %v199, 64
    %v626 = vpop.permute.xlu0 %625
    %627 = vrot.lane.b32.xlu0 %v200, 64
    %v628 = vpop.permute.xlu0 %627
    %629 = vrot.lane.b32.xlu0 %v201, 64
    %v630 = vpop.permute.xlu0 %629
    %631 = vrot.lane.b32.xlu0 %v202, 64
    %v632 = vpop.permute.xlu0 %631
    %633 = vrot.lane.b32.xlu0 %v203, 64
    %v634 = vpop.permute.xlu0 %633
    %635 = vrot.lane.b32.xlu0 %v204, 64
    %v636 = vpop.permute.xlu0 %635
    %637 = vrot.lane.b32.xlu0 %v205, 64
    %v638 = vpop.permute.xlu0 %637
    %639 = vrot.lane.b32.xlu0 %v206, 64
    %v640 = vpop.permute.xlu0 %639
    %657 = vrot.lane.b32.xlu0 %v208, 96
    %v658 = vpop.permute.xlu0 %657
    %659 = vrot.lane.b32.xlu0 %v209, 96
    %v660 = vpop.permute.xlu0 %659
    %661 = vrot.lane.b32.xlu0 %v210, 96
    %v662 = vpop.permute.xlu0 %661
    %663 = vrot.lane.b32.xlu0 %v211, 96
    %v664 = vpop.permute.xlu0 %663
    %665 = vrot.lane.b32.xlu0 %v212, 96
    %v666 = vpop.permute.xlu0 %665
    %667 = vrot.lane.b32.xlu0 %v213, 96
    %v668 = vpop.permute.xlu0 %667
    %669 = vrot.lane.b32.xlu0 %v214, 96
    %v670 = vpop.permute.xlu0 %669
    %671 = vrot.lane.b32.xlu0 %v215, 96
    %v672 = vpop.permute.xlu0 %671
    %vm681 = vcmask 261120
    %v682 = vsel %vm681, %v92, %v306
    %v683 = vsel %vm681, %v93, %v308
    %v684 = vsel %vm681, %v94, %v310
    %v685 = vsel %vm681, %v95, %v312
    %v686 = vsel %vm681, %v96, %v314
    %v687 = vsel %vm681, %v97, %v316
    %v688 = vsel %vm681, %v98, %v318
    %v689 = vsel %vm681, %v99, %v320
    %vm690 = vcmask 523264
    %v691 = vsel %vm690, %v682, %v338
    %v692 = vsel %vm690, %v683, %v340
    %v693 = vsel %vm690, %v684, %v342
    %v694 = vsel %vm690, %v685, %v344
    %v695 = vsel %vm690, %v686, %v346
    %v696 = vsel %vm690, %v687, %v348
    %v697 = vsel %vm690, %v688, %v350
    %v698 = vsel %vm690, %v689, %v352
    %vm699 = vcmask 785408
    %v700 = vsel %vm699, %v691, %v370
    %v701 = vsel %vm699, %v692, %v372
    %v702 = vsel %vm699, %v693, %v374
    %v703 = vsel %vm699, %v694, %v376
    %v704 = vsel %vm699, %v695, %v378
    %v705 = vsel %vm699, %v696, %v380
    %v706 = vsel %vm699, %v697, %v382
    %v707 = vsel %vm699, %v698, %v384
    %v708 = vsel %vm681, %v125, %v402
    %v709 = vsel %vm681, %v126, %v404
    %v710 = vsel %vm681, %v127, %v406
    %v711 = vsel %vm681, %v128, %v408
    %v712 = vsel %vm681, %v129, %v410
    %v713 = vsel %vm681, %v130, %v412
    %v714 = vsel %vm681, %v131, %v414
    %v715 = vsel %vm681, %v132, %v416
    %v716 = vsel %vm690, %v708, %v434
    %v717 = vsel %vm690, %v709, %v436
    %v718 = vsel %vm690, %v710, %v438
    %v719 = vsel %vm690, %v711, %v440
    %v720 = vsel %vm690, %v712, %v442
    %v721 = vsel %vm690, %v713, %v444
    %v722 = vsel %vm690, %v714, %v446
    %v723 = vsel %vm690, %v715, %v448
    %v724 = vsel %vm699, %v716, %v466
    %v725 = vsel %vm699, %v717, %v468
    %v726 = vsel %vm699, %v718, %v470
    %v727 = vsel %vm699, %v719, %v472
    %v728 = vsel %vm699, %v720, %v474
    %v729 = vsel %vm699, %v721, %v476
    %v730 = vsel %vm699, %v722, %v478
    %v731 = vsel %vm699, %v723, %v480
    %v732 = vsel %vm681, %v158, %v498
    %v733 = vsel %vm681, %v159, %v500
    %v734 = vsel %vm681, %v160, %v502
    %v735 = vsel %vm681, %v161, %v504
    %v736 = vsel %vm681, %v162, %v506
    %v737 = vsel %vm681, %v163, %v508
    %v738 = vsel %vm681, %v164, %v510
    %v739 = vsel %vm681, %v165, %v512
    %v740 = vsel %vm690, %v732, %v530
    %v741 = vsel %vm690, %v733, %v532
    %v742 = vsel %vm690, %v734, %v534
    %v743 = vsel %vm690, %v735, %v536
    %v744 = vsel %vm690, %v736, %v538
    %v745 = vsel %vm690, %v737, %v540
    %v746 = vsel %vm690, %v738, %v542
    %v747 = vsel %vm690, %v739, %v544
    %v748 = vsel %vm699, %v740, %v562
    %v749 = vsel %vm699, %v741, %v564
    %v750 = vsel %vm699, %v742, %v566
    %v751 = vsel %vm699, %v743, %v568
    %v752 = vsel %vm699, %v744, %v570
    %v753 = vsel %vm699, %v745, %v572
    %v754 = vsel %vm699, %v746, %v574
    %v755 = vsel %vm699, %v747, %v576
    %v756 = vsel %vm681, %v191, %v594
    %v757 = vsel %vm681, %v192, %v596
    %v758 = vsel %vm681, %v193, %v598
    %v759 = vsel %vm681, %v194, %v600
    %v760 = vsel %vm681, %v195, %v602
    %v761 = vsel %vm681, %v196, %v604
    %v762 = vsel %vm681, %v197, %v606
    %v763 = vsel %vm681, %v198, %v608
    %v764 = vsel %vm690, %v756, %v626
    %v765 = vsel %vm690, %v757, %v628
    %v766 = vsel %vm690, %v758, %v630
    %v767 = vsel %vm690, %v759, %v632
    %v768 = vsel %vm690, %v760, %v634
    %v769 = vsel %vm690, %v761, %v636
    %v770 = vsel %vm690, %v762, %v638
    %v771 = vsel %vm690, %v763, %v640
    %v772 = vsel %vm699, %v764, %v658
    %v773 = vsel %vm699, %v765, %v660
    %v774 = vsel %vm699, %v766, %v662
    %v775 = vsel %vm699, %v767, %v664
    %v776 = vsel %vm699, %v768, %v666
    %v777 = vsel %vm699, %v769, %v668
    %v778 = vsel %vm699, %v770, %v670
    %v779 = vsel %vm699, %v771, %v672
    %788 = vrot.lane.b32.xlu0 %v224, 32
    %v789 = vpop.permute.xlu0 %788
    %790 = vrot.lane.b32.xlu0 %v225, 32
    %v791 = vpop.permute.xlu0 %790
    %792 = vrot.lane.b32.xlu0 %v226, 32
    %v793 = vpop.permute.xlu0 %792
    %794 = vrot.lane.b32.xlu0 %v227, 32
    %v795 = vpop.permute.xlu0 %794
    %796 = vrot.lane.b32.xlu0 %v228, 32
    %v797 = vpop.permute.xlu0 %796
    %798 = vrot.lane.b32.xlu0 %v229, 32
    %v799 = vpop.permute.xlu0 %798
    %800 = vrot.lane.b32.xlu0 %v230, 32
    %v801 = vpop.permute.xlu0 %800
    %802 = vrot.lane.b32.xlu0 %v231, 32
    %v803 = vpop.permute.xlu0 %802
    %820 = vrot.lane.b32.xlu0 %v232, 64
    %v821 = vpop.permute.xlu0 %820
    %822 = vrot.lane.b32.xlu0 %v233, 64
    %v823 = vpop.permute.xlu0 %822
    %824 = vrot.lane.b32.xlu0 %v234, 64
    %v825 = vpop.permute.xlu0 %824
    %826 = vrot.lane.b32.xlu0 %v235, 64
    %v827 = vpop.permute.xlu0 %826
    %828 = vrot.lane.b32.xlu0 %v236, 64
    %v829 = vpop.permute.xlu0 %828
    %830 = vrot.lane.b32.xlu0 %v237, 64
    %v831 = vpop.permute.xlu0 %830
    %832 = vrot.lane.b32.xlu0 %v238, 64
    %v833 = vpop.permute.xlu0 %832
    %834 = vrot.lane.b32.xlu0 %v239, 64
    %v835 = vpop.permute.xlu0 %834
    %852 = vrot.lane.b32.xlu0 %v240, 96
    %v853 = vpop.permute.xlu0 %852
    %854 = vrot.lane.b32.xlu0 %v241, 96
    %v855 = vpop.permute.xlu0 %854
    %856 = vrot.lane.b32.xlu0 %v242, 96
    %v857 = vpop.permute.xlu0 %856
    %858 = vrot.lane.b32.xlu0 %v243, 96
    %v859 = vpop.permute.xlu0 %858
    %860 = vrot.lane.b32.xlu0 %v244, 96
    %v861 = vpop.permute.xlu0 %860
    %862 = vrot.lane.b32.xlu0 %v245, 96
    %v863 = vpop.permute.xlu0 %862
    %864 = vrot.lane.b32.xlu0 %v246, 96
    %v865 = vpop.permute.xlu0 %864
    %866 = vrot.lane.b32.xlu0 %v247, 96
    %v867 = vpop.permute.xlu0 %866
    %884 = vrot.lane.b32.xlu0 %v256, 32
    %v885 = vpop.permute.xlu0 %884
    %886 = vrot.lane.b32.xlu0 %v257, 32
    %v887 = vpop.permute.xlu0 %886
    %888 = vrot.lane.b32.xlu0 %v258, 32
    %v889 = vpop.permute.xlu0 %888
    %890 = vrot.lane.b32.xlu0 %v259, 32
    %v891 = vpop.permute.xlu0 %890
    %892 = vrot.lane.b32.xlu0 %v260, 32
    %v893 = vpop.permute.xlu0 %892
    %894 = vrot.lane.b32.xlu0 %v261, 32
    %v895 = vpop.permute.xlu0 %894
    %896 = vrot.lane.b32.xlu0 %v262, 32
    %v897 = vpop.permute.xlu0 %896
    %898 = vrot.lane.b32.xlu0 %v263, 32
    %v899 = vpop.permute.xlu0 %898
    %908 = vrot.lane.b32.xlu0 %v125, 64
    %v909 = vpop.permute.xlu0 %908
    %910 = vrot.lane.b32.xlu0 %v126, 64
    %v911 = vpop.permute.xlu0 %910
    %912 = vrot.lane.b32.xlu0 %v127, 64
    %v913 = vpop.permute.xlu0 %912
    %914 = vrot.lane.b32.xlu0 %v128, 64
    %v915 = vpop.permute.xlu0 %914
    %916 = vrot.lane.b32.xlu0 %v129, 64
    %v917 = vpop.permute.xlu0 %916
    %918 = vrot.lane.b32.xlu0 %v130, 64
    %v919 = vpop.permute.xlu0 %918
    %920 = vrot.lane.b32.xlu0 %v131, 64
    %v921 = vpop.permute.xlu0 %920
    %922 = vrot.lane.b32.xlu0 %v132, 64
    %v923 = vpop.permute.xlu0 %922
    %940 = vrot.lane.b32.xlu0 %v264, 96
    %v941 = vpop.permute.xlu0 %940
    %942 = vrot.lane.b32.xlu0 %v265, 96
    %v943 = vpop.permute.xlu0 %942
    %944 = vrot.lane.b32.xlu0 %v266, 96
    %v945 = vpop.permute.xlu0 %944
    %946 = vrot.lane.b32.xlu0 %v267, 96
    %v947 = vpop.permute.xlu0 %946
    %948 = vrot.lane.b32.xlu0 %v268, 96
    %v949 = vpop.permute.xlu0 %948
    %950 = vrot.lane.b32.xlu0 %v269, 96
    %v951 = vpop.permute.xlu0 %950
    %952 = vrot.lane.b32.xlu0 %v270, 96
    %v953 = vpop.permute.xlu0 %952
    %954 = vrot.lane.b32.xlu0 %v271, 96
    %v955 = vpop.permute.xlu0 %954
    %972 = vrot.lane.b32.xlu0 %v281, 32
    %v973 = vpop.permute.xlu0 %972
    %974 = vrot.lane.b32.xlu0 %v282, 32
    %v975 = vpop.permute.xlu0 %974
    %976 = vrot.lane.b32.xlu0 %v283, 32
    %v977 = vpop.permute.xlu0 %976
    %978 = vrot.lane.b32.xlu0 %v284, 32
    %v979 = vpop.permute.xlu0 %978
    %980 = vrot.lane.b32.xlu0 %v285, 32
    %v981 = vpop.permute.xlu0 %980
    %982 = vrot.lane.b32.xlu0 %v286, 32
    %v983 = vpop.permute.xlu0 %982
    %984 = vrot.lane.b32.xlu0 %v287, 32
    %v985 = vpop.permute.xlu0 %984
    %986 = vrot.lane.b32.xlu0 %v288, 32
    %v987 = vpop.permute.xlu0 %986
    %1004 = vrot.lane.b32.xlu0 %v289, 64
    %v1005 = vpop.permute.xlu0 %1004
    %1006 = vrot.lane.b32.xlu0 %v290, 64
    %v1007 = vpop.permute.xlu0 %1006
    %1008 = vrot.lane.b32.xlu0 %v291, 64
    %v1009 = vpop.permute.xlu0 %1008
    %1010 = vrot.lane.b32.xlu0 %v292, 64
    %v1011 = vpop.permute.xlu0 %1010
    %1012 = vrot.lane.b32.xlu0 %v293, 64
    %v1013 = vpop.permute.xlu0 %1012
    %1014 = vrot.lane.b32.xlu0 %v294, 64
    %v1015 = vpop.permute.xlu0 %1014
    %1016 = vrot.lane.b32.xlu0 %v295, 64
    %v1017 = vpop.permute.xlu0 %1016
    %1018 = vrot.lane.b32.xlu0 %v296, 64
    %v1019 = vpop.permute.xlu0 %1018
    %v1028 = vsel %vm681, %v216, %v789
    %v1029 = vsel %vm681, %v217, %v791
    %v1030 = vsel %vm681, %v218, %v793
    %v1031 = vsel %vm681, %v219, %v795
    %v1032 = vsel %vm681, %v220, %v797
    %v1033 = vsel %vm681, %v221, %v799
    %v1034 = vsel %vm681, %v222, %v801
    %v1035 = vsel %vm681, %v223, %v803
    %v1036 = vsel %vm690, %v1028, %v821
    %v1037 = vsel %vm690, %v1029, %v823
    %v1038 = vsel %vm690, %v1030, %v825
    %v1039 = vsel %vm690, %v1031, %v827
    %v1040 = vsel %vm690, %v1032, %v829
    %v1041 = vsel %vm690, %v1033, %v831
    %v1042 = vsel %vm690, %v1034, %v833
    %v1043 = vsel %vm690, %v1035, %v835
    %v1044 = vsel %vm699, %v1036, %v853
    %v1045 = vsel %vm699, %v1037, %v855
    %v1046 = vsel %vm699, %v1038, %v857
    %v1047 = vsel %vm699, %v1039, %v859
    %v1048 = vsel %vm699, %v1040, %v861
    %v1049 = vsel %vm699, %v1041, %v863
    %v1050 = vsel %vm699, %v1042, %v865
    %v1051 = vsel %vm699, %v1043, %v867
    %v1052 = vsel %vm681, %v248, %v885
    %v1053 = vsel %vm681, %v249, %v887
    %v1054 = vsel %vm681, %v250, %v889
    %v1055 = vsel %vm681, %v251, %v891
    %v1056 = vsel %vm681, %v252, %v893
    %v1057 = vsel %vm681, %v253, %v895
    %v1058 = vsel %vm681, %v254, %v897
    %v1059 = vsel %vm681, %v255, %v899
    %v1060 = vsel %vm690, %v1052, %v909
    %v1061 = vsel %vm690, %v1053, %v911
    %v1062 = vsel %vm690, %v1054, %v913
    %v1063 = vsel %vm690, %v1055, %v915
    %v1064 = vsel %vm690, %v1056, %v917
    %v1065 = vsel %vm690, %v1057, %v919
    %v1066 = vsel %vm690, %v1058, %v921
    %v1067 = vsel %vm690, %v1059, %v923
    %v1068 = vsel %vm699, %v1060, %v941
    %v1069 = vsel %vm699, %v1061, %v943
    %v1070 = vsel %vm699, %v1062, %v945
    %v1071 = vsel %vm699, %v1063, %v947
    %v1072 = vsel %vm699, %v1064, %v949
    %v1073 = vsel %vm699, %v1065, %v951
    %v1074 = vsel %vm699, %v1066, %v953
    %v1075 = vsel %vm699, %v1067, %v955
    %v1076 = vsel %vm681, %v273, %v973
    %v1077 = vsel %vm681, %v274, %v975
    %v1078 = vsel %vm681, %v275, %v977
    %v1079 = vsel %vm681, %v276, %v979
    %v1080 = vsel %vm681, %v277, %v981
    %v1081 = vsel %vm681, %v278, %v983
    %v1082 = vsel %vm681, %v279, %v985
    %v1083 = vsel %vm681, %v280, %v987
    %v1084 = vsel %vm690, %v1076, %v1005
    %v1085 = vsel %vm690, %v1077, %v1007
    %v1086 = vsel %vm690, %v1078, %v1009
    %v1087 = vsel %vm690, %v1079, %v1011
    %v1088 = vsel %vm690, %v1080, %v1013
    %v1089 = vsel %vm690, %v1081, %v1015
    %v1090 = vsel %vm690, %v1082, %v1017
    %v1091 = vsel %vm690, %v1083, %v1019
    %s1092 = scalar_lea.vmem %s0, 2688
    %v1093 = vld [vmem:[%s1092 + $0xc] sm:$0xff]
    %v1094 = vld [vmem:[%s1092 + $0x3c] sm:$0xff]
    %v1095 = vld [vmem:[%s1092 + $0x6c] sm:$0xff]
    %v1096 = vld [vmem:[%s1092 + $0x9c] sm:$0xff]
    %v1097 = vld [vmem:[%s1092 + $0xcc] sm:$0xff]
    %v1098 = vld [vmem:[%s1092 + $0xfc] sm:$0xff]
    %v1099 = vld [vmem:[%s1092 + $0x12c] sm:$0xff]
    %v1100 = vld [vmem:[%s1092 + $0x15c] sm:$0xff]
    %v1101 = vld [vmem:[%s1092 + $0x12] sm:$0xff]
    %v1102 = vld [vmem:[%s1092 + $0x42] sm:$0xff]
    %v1103 = vld [vmem:[%s1092 + $0x72] sm:$0xff]
    %v1104 = vld [vmem:[%s1092 + $0xa2] sm:$0xff]
    %v1105 = vld [vmem:[%s1092 + $0xd2] sm:$0xff]
    %v1106 = vld [vmem:[%s1092 + $0x102] sm:$0xff]
    %v1107 = vld [vmem:[%s1092 + $0x132] sm:$0xff]
    %v1108 = vld [vmem:[%s1092 + $0x162] sm:$0xff]
    %v1109 = vld [vmem:[%s1092 + $0x18] sm:$0xff]
    %v1110 = vld [vmem:[%s1092 + $0x48] sm:$0xff]
    %v1111 = vld [vmem:[%s1092 + $0x78] sm:$0xff]
    %v1112 = vld [vmem:[%s1092 + $0xa8] sm:$0xff]
    %v1113 = vld [vmem:[%s1092 + $0xd8] sm:$0xff]
    %v1114 = vld [vmem:[%s1092 + $0x108] sm:$0xff]
    %v1115 = vld [vmem:[%s1092 + $0x138] sm:$0xff]
    %v1116 = vld [vmem:[%s1092 + $0x168] sm:$0xff]
    %s1117 = scalar_lea.vmem %s0, 2976
    %v1118 = vld [vmem:[%s1117 + $0xc] sm:$0xff]
    %v1119 = vld [vmem:[%s1117 + $0x3c] sm:$0xff]
    %v1120 = vld [vmem:[%s1117 + $0x6c] sm:$0xff]
    %v1121 = vld [vmem:[%s1117 + $0x9c] sm:$0xff]
    %v1122 = vld [vmem:[%s1117 + $0xcc] sm:$0xff]
    %v1123 = vld [vmem:[%s1117 + $0xfc] sm:$0xff]
    %v1124 = vld [vmem:[%s1117 + $0x12c] sm:$0xff]
    %v1125 = vld [vmem:[%s1117 + $0x15c] sm:$0xff]
    %v1126 = vld [vmem:[%s1117 + $0x12] sm:$0xff]
    %v1127 = vld [vmem:[%s1117 + $0x42] sm:$0xff]
    %v1128 = vld [vmem:[%s1117 + $0x72] sm:$0xff]
    %v1129 = vld [vmem:[%s1117 + $0xa2] sm:$0xff]
    %v1130 = vld [vmem:[%s1117 + $0xd2] sm:$0xff]
    %v1131 = vld [vmem:[%s1117 + $0x102] sm:$0xff]
    %v1132 = vld [vmem:[%s1117 + $0x132] sm:$0xff]
    %v1133 = vld [vmem:[%s1117 + $0x162] sm:$0xff]
    %v1134 = vld [vmem:[%s1117 + $0x18] sm:$0xff]
    %v1135 = vld [vmem:[%s1117 + $0x48] sm:$0xff]
    %v1136 = vld [vmem:[%s1117 + $0x78] sm:$0xff]
    %v1137 = vld [vmem:[%s1117 + $0xa8] sm:$0xff]
    %v1138 = vld [vmem:[%s1117 + $0xd8] sm:$0xff]
    %v1139 = vld [vmem:[%s1117 + $0x108] sm:$0xff]
    %v1140 = vld [vmem:[%s1117 + $0x138] sm:$0xff]
    %v1141 = vld [vmem:[%s1117 + $0x168] sm:$0xff]
    %s1142 = scalar_lea.vmem %s0, 3264
    %v1143 = vld [vmem:[%s1142 + $0xc] sm:$0xff]
    %v1144 = vld [vmem:[%s1142 + $0x3c] sm:$0xff]
    %v1145 = vld [vmem:[%s1142 + $0x6c] sm:$0xff]
    %v1146 = vld [vmem:[%s1142 + $0x9c] sm:$0xff]
    %v1147 = vld [vmem:[%s1142 + $0xcc] sm:$0xff]
    %v1148 = vld [vmem:[%s1142 + $0xfc] sm:$0xff]
    %v1149 = vld [vmem:[%s1142 + $0x12c] sm:$0xff]
    %v1150 = vld [vmem:[%s1142 + $0x15c] sm:$0xff]
    %v1151 = vld [vmem:[%s1142 + $0x12] sm:$0xff]
    %v1152 = vld [vmem:[%s1142 + $0x42] sm:$0xff]
    %v1153 = vld [vmem:[%s1142 + $0x72] sm:$0xff]
    %v1154 = vld [vmem:[%s1142 + $0xa2] sm:$0xff]
    %v1155 = vld [vmem:[%s1142 + $0xd2] sm:$0xff]
    %v1156 = vld [vmem:[%s1142 + $0x102] sm:$0xff]
    %v1157 = vld [vmem:[%s1142 + $0x132] sm:$0xff]
    %v1158 = vld [vmem:[%s1142 + $0x162] sm:$0xff]
    %v1159 = vld [vmem:[%s1142 + $0x18] sm:$0xff]
    %v1160 = vld [vmem:[%s1142 + $0x48] sm:$0xff]
    %v1161 = vld [vmem:[%s1142 + $0x78] sm:$0xff]
    %v1162 = vld [vmem:[%s1142 + $0xa8] sm:$0xff]
    %v1163 = vld [vmem:[%s1142 + $0xd8] sm:$0xff]
    %v1164 = vld [vmem:[%s1142 + $0x108] sm:$0xff]
    %v1165 = vld [vmem:[%s1142 + $0x138] sm:$0xff]
    %v1166 = vld [vmem:[%s1142 + $0x168] sm:$0xff]
    %s1167 = scalar_lea.vmem %s0, 2400
    %v1168 = vld [vmem:[%s1167 + $0x6] sm:$0xff]
    %v1169 = vld [vmem:[%s1167 + $0x36] sm:$0xff]
    %v1170 = vld [vmem:[%s1167 + $0x66] sm:$0xff]
    %v1171 = vld [vmem:[%s1167 + $0x96] sm:$0xff]
    %v1172 = vld [vmem:[%s1167 + $0xc6] sm:$0xff]
    %v1173 = vld [vmem:[%s1167 + $0xf6] sm:$0xff]
    %v1174 = vld [vmem:[%s1167 + $0x126] sm:$0xff]
    %v1175 = vld [vmem:[%s1167 + $0x156] sm:$0xff]
    %v1176 = vld [vmem:[%s1167 + $0x12] sm:$0xff]
    %v1177 = vld [vmem:[%s1167 + $0x42] sm:$0xff]
    %v1178 = vld [vmem:[%s1167 + $0x72] sm:$0xff]
    %v1179 = vld [vmem:[%s1167 + $0xa2] sm:$0xff]
    %v1180 = vld [vmem:[%s1167 + $0xd2] sm:$0xff]
    %v1181 = vld [vmem:[%s1167 + $0x102] sm:$0xff]
    %v1182 = vld [vmem:[%s1167 + $0x132] sm:$0xff]
    %v1183 = vld [vmem:[%s1167 + $0x162] sm:$0xff]
    %v1184 = vld [vmem:[%s1167 + $0x1e] sm:$0xff]
    %v1185 = vld [vmem:[%s1167 + $0x4e] sm:$0xff]
    %v1186 = vld [vmem:[%s1167 + $0x7e] sm:$0xff]
    %v1187 = vld [vmem:[%s1167 + $0xae] sm:$0xff]
    %v1188 = vld [vmem:[%s1167 + $0xde] sm:$0xff]
    %v1189 = vld [vmem:[%s1167 + $0x10e] sm:$0xff]
    %v1190 = vld [vmem:[%s1167 + $0x13e] sm:$0xff]
    %v1191 = vld [vmem:[%s1167 + $0x16e] sm:$0xff]
    %v1192 = vld [vmem:[%s1117 + $0x6] sm:$0xff]
    %v1193 = vld [vmem:[%s1117 + $0x36] sm:$0xff]
    %v1194 = vld [vmem:[%s1117 + $0x66] sm:$0xff]
    %v1195 = vld [vmem:[%s1117 + $0x96] sm:$0xff]
    %v1196 = vld [vmem:[%s1117 + $0xc6] sm:$0xff]
    %v1197 = vld [vmem:[%s1117 + $0xf6] sm:$0xff]
    %v1198 = vld [vmem:[%s1117 + $0x126] sm:$0xff]
    %v1199 = vld [vmem:[%s1117 + $0x156] sm:$0xff]
    %v1200 = vld [vmem:[%s1117 + $0x1e] sm:$0xff]
    %v1201 = vld [vmem:[%s1117 + $0x4e] sm:$0xff]
    %v1202 = vld [vmem:[%s1117 + $0x7e] sm:$0xff]
    %v1203 = vld [vmem:[%s1117 + $0xae] sm:$0xff]
    %v1204 = vld [vmem:[%s1117 + $0xde] sm:$0xff]
    %v1205 = vld [vmem:[%s1117 + $0x10e] sm:$0xff]
    %v1206 = vld [vmem:[%s1117 + $0x13e] sm:$0xff]
    %v1207 = vld [vmem:[%s1117 + $0x16e] sm:$0xff]
    %s1208 = scalar_lea.vmem %s0, 3552
    %v1209 = vld [vmem:[%s1208 + $0x6] sm:$0xff]
    %v1210 = vld [vmem:[%s1208 + $0x36] sm:$0xff]
    %v1211 = vld [vmem:[%s1208 + $0x66] sm:$0xff]
    %v1212 = vld [vmem:[%s1208 + $0x96] sm:$0xff]
    %v1213 = vld [vmem:[%s1208 + $0xc6] sm:$0xff]
    %v1214 = vld [vmem:[%s1208 + $0xf6] sm:$0xff]
    %v1215 = vld [vmem:[%s1208 + $0x126] sm:$0xff]
    %v1216 = vld [vmem:[%s1208 + $0x156] sm:$0xff]
    %v1217 = vld [vmem:[%s1208 + $0x12] sm:$0xff]
    %v1218 = vld [vmem:[%s1208 + $0x42] sm:$0xff]
    %v1219 = vld [vmem:[%s1208 + $0x72] sm:$0xff]
    %v1220 = vld [vmem:[%s1208 + $0xa2] sm:$0xff]
    %v1221 = vld [vmem:[%s1208 + $0xd2] sm:$0xff]
    %v1222 = vld [vmem:[%s1208 + $0x102] sm:$0xff]
    %v1223 = vld [vmem:[%s1208 + $0x132] sm:$0xff]
    %v1224 = vld [vmem:[%s1208 + $0x162] sm:$0xff]
    %v1225 = vld [vmem:[%s1208 + $0x1e] sm:$0xff]
    %v1226 = vld [vmem:[%s1208 + $0x4e] sm:$0xff]
    %v1227 = vld [vmem:[%s1208 + $0x7e] sm:$0xff]
    %v1228 = vld [vmem:[%s1208 + $0xae] sm:$0xff]
    %v1229 = vld [vmem:[%s1208 + $0xde] sm:$0xff]
    %v1230 = vld [vmem:[%s1208 + $0x10e] sm:$0xff]
    %v1231 = vld [vmem:[%s1208 + $0x13e] sm:$0xff]
    %v1232 = vld [vmem:[%s1208 + $0x16e] sm:$0xff]
    %s1233 = scalar_lea.vmem %s0, 2112
    %v1234 = vld [vmem:[%s1233] sm:$0xff]
    %v1235 = vld [vmem:[%s1233 + $0x30] sm:$0xff]
    %v1236 = vld [vmem:[%s1233 + $0x60] sm:$0xff]
    %v1237 = vld [vmem:[%s1233 + $0x90] sm:$0xff]
    %v1238 = vld [vmem:[%s1233 + $0xc0] sm:$0xff]
    %v1239 = vld [vmem:[%s1233 + $0xf0] sm:$0xff]
    %v1240 = vld [vmem:[%s1233 + $0x120] sm:$0xff]
    %v1241 = vld [vmem:[%s1233 + $0x150] sm:$0xff]
    %v1242 = vld [vmem:[%s1233 + $0x12] sm:$0xff]
    %v1243 = vld [vmem:[%s1233 + $0x42] sm:$0xff]
    %v1244 = vld [vmem:[%s1233 + $0x72] sm:$0xff]
    %v1245 = vld [vmem:[%s1233 + $0xa2] sm:$0xff]
    %v1246 = vld [vmem:[%s1233 + $0xd2] sm:$0xff]
    %v1247 = vld [vmem:[%s1233 + $0x102] sm:$0xff]
    %v1248 = vld [vmem:[%s1233 + $0x132] sm:$0xff]
    %v1249 = vld [vmem:[%s1233 + $0x162] sm:$0xff]
    %v1250 = vld [vmem:[%s1233 + $0x24] sm:$0xff]
    %v1251 = vld [vmem:[%s1233 + $0x54] sm:$0xff]
    %v1252 = vld [vmem:[%s1233 + $0x84] sm:$0xff]
    %v1253 = vld [vmem:[%s1233 + $0xb4] sm:$0xff]
    %v1254 = vld [vmem:[%s1233 + $0xe4] sm:$0xff]
    %v1255 = vld [vmem:[%s1233 + $0x114] sm:$0xff]
    %v1256 = vld [vmem:[%s1233 + $0x144] sm:$0xff]
    %v1257 = vld [vmem:[%s1233 + $0x174] sm:$0xff]
    %v1258 = vld [vmem:[%s1117] sm:$0xff]
    %v1259 = vld [vmem:[%s1117 + $0x30] sm:$0xff]
    %v1260 = vld [vmem:[%s1117 + $0x60] sm:$0xff]
    %v1261 = vld [vmem:[%s1117 + $0x90] sm:$0xff]
    %v1262 = vld [vmem:[%s1117 + $0xc0] sm:$0xff]
    %v1263 = vld [vmem:[%s1117 + $0xf0] sm:$0xff]
    %v1264 = vld [vmem:[%s1117 + $0x120] sm:$0xff]
    %v1265 = vld [vmem:[%s1117 + $0x150] sm:$0xff]
    %v1266 = vld [vmem:[%s1117 + $0x24] sm:$0xff]
    %v1267 = vld [vmem:[%s1117 + $0x54] sm:$0xff]
    %v1268 = vld [vmem:[%s1117 + $0x84] sm:$0xff]
    %v1269 = vld [vmem:[%s1117 + $0xb4] sm:$0xff]
    %v1270 = vld [vmem:[%s1117 + $0xe4] sm:$0xff]
    %v1271 = vld [vmem:[%s1117 + $0x114] sm:$0xff]
    %v1272 = vld [vmem:[%s1117 + $0x144] sm:$0xff]
    %v1273 = vld [vmem:[%s1117 + $0x174] sm:$0xff]
    %s1274 = scalar_lea.vmem %s0, 3840
    %v1275 = vld [vmem:[%s1274] sm:$0xff]
    %v1276 = vld [vmem:[%s1274 + $0x30] sm:$0xff]
    %v1277 = vld [vmem:[%s1274 + $0x60] sm:$0xff]
    %v1278 = vld [vmem:[%s1274 + $0x90] sm:$0xff]
    %v1279 = vld [vmem:[%s1274 + $0xc0] sm:$0xff]
    %v1280 = vld [vmem:[%s1274 + $0xf0] sm:$0xff]
    %v1281 = vld [vmem:[%s1274 + $0x120] sm:$0xff]
    %v1282 = vld [vmem:[%s1274 + $0x150] sm:$0xff]
    %v1283 = vld [vmem:[%s1274 + $0x12] sm:$0xff]
    %v1284 = vld [vmem:[%s1274 + $0x42] sm:$0xff]
    %v1285 = vld [vmem:[%s1274 + $0x72] sm:$0xff]
    %v1286 = vld [vmem:[%s1274 + $0xa2] sm:$0xff]
    %v1287 = vld [vmem:[%s1274 + $0xd2] sm:$0xff]
    %v1288 = vld [vmem:[%s1274 + $0x102] sm:$0xff]
    %v1289 = vld [vmem:[%s1274 + $0x132] sm:$0xff]
    %v1290 = vld [vmem:[%s1274 + $0x162] sm:$0xff]
    %v1291 = vld [vmem:[%s1274 + $0x24] sm:$0xff]
    %v1292 = vld [vmem:[%s1274 + $0x54] sm:$0xff]
    %v1293 = vld [vmem:[%s1274 + $0x84] sm:$0xff]
    %v1294 = vld [vmem:[%s1274 + $0xb4] sm:$0xff]
    %v1295 = vld [vmem:[%s1274 + $0xe4] sm:$0xff]
    %v1296 = vld [vmem:[%s1274 + $0x114] sm:$0xff]
    %v1297 = vld [vmem:[%s1274 + $0x144] sm:$0xff]
    %v1298 = vld [vmem:[%s1274 + $0x174] sm:$0xff]
    %1307 = vrot.lane.b32.xlu0 %v1101, 32
    %v1308 = vpop.permute.xlu0 %1307
    %1309 = vrot.lane.b32.xlu0 %v1102, 32
    %v1310 = vpop.permute.xlu0 %1309
    %1311 = vrot.lane.b32.xlu0 %v1103, 32
    %v1312 = vpop.permute.xlu0 %1311
    %1313 = vrot.lane.b32.xlu0 %v1104, 32
    %v1314 = vpop.permute.xlu0 %1313
    %1315 = vrot.lane.b32.xlu0 %v1105, 32
    %v1316 = vpop.permute.xlu0 %1315
    %1317 = vrot.lane.b32.xlu0 %v1106, 32
    %v1318 = vpop.permute.xlu0 %1317
    %1319 = vrot.lane.b32.xlu0 %v1107, 32
    %v1320 = vpop.permute.xlu0 %1319
    %1321 = vrot.lane.b32.xlu0 %v1108, 32
    %v1322 = vpop.permute.xlu0 %1321
    %1339 = vrot.lane.b32.xlu0 %v1109, 64
    %v1340 = vpop.permute.xlu0 %1339
    %1341 = vrot.lane.b32.xlu0 %v1110, 64
    %v1342 = vpop.permute.xlu0 %1341
    %1343 = vrot.lane.b32.xlu0 %v1111, 64
    %v1344 = vpop.permute.xlu0 %1343
    %1345 = vrot.lane.b32.xlu0 %v1112, 64
    %v1346 = vpop.permute.xlu0 %1345
    %1347 = vrot.lane.b32.xlu0 %v1113, 64
    %v1348 = vpop.permute.xlu0 %1347
    %1349 = vrot.lane.b32.xlu0 %v1114, 64
    %v1350 = vpop.permute.xlu0 %1349
    %1351 = vrot.lane.b32.xlu0 %v1115, 64
    %v1352 = vpop.permute.xlu0 %1351
    %1353 = vrot.lane.b32.xlu0 %v1116, 64
    %v1354 = vpop.permute.xlu0 %1353
    %1371 = vrot.lane.b32.xlu0 %v1118, 96
    %v1372 = vpop.permute.xlu0 %1371
    %1373 = vrot.lane.b32.xlu0 %v1119, 96
    %v1374 = vpop.permute.xlu0 %1373
    %1375 = vrot.lane.b32.xlu0 %v1120, 96
    %v1376 = vpop.permute.xlu0 %1375
    %1377 = vrot.lane.b32.xlu0 %v1121, 96
    %v1378 = vpop.permute.xlu0 %1377
    %1379 = vrot.lane.b32.xlu0 %v1122, 96
    %v1380 = vpop.permute.xlu0 %1379
    %1381 = vrot.lane.b32.xlu0 %v1123, 96
    %v1382 = vpop.permute.xlu0 %1381
    %1383 = vrot.lane.b32.xlu0 %v1124, 96
    %v1384 = vpop.permute.xlu0 %1383
    %1385 = vrot.lane.b32.xlu0 %v1125, 96
    %v1386 = vpop.permute.xlu0 %1385
    %1403 = vrot.lane.b32.xlu0 %v1134, 32
    %v1404 = vpop.permute.xlu0 %1403
    %1405 = vrot.lane.b32.xlu0 %v1135, 32
    %v1406 = vpop.permute.xlu0 %1405
    %1407 = vrot.lane.b32.xlu0 %v1136, 32
    %v1408 = vpop.permute.xlu0 %1407
    %1409 = vrot.lane.b32.xlu0 %v1137, 32
    %v1410 = vpop.permute.xlu0 %1409
    %1411 = vrot.lane.b32.xlu0 %v1138, 32
    %v1412 = vpop.permute.xlu0 %1411
    %1413 = vrot.lane.b32.xlu0 %v1139, 32
    %v1414 = vpop.permute.xlu0 %1413
    %1415 = vrot.lane.b32.xlu0 %v1140, 32
    %v1416 = vpop.permute.xlu0 %1415
    %1417 = vrot.lane.b32.xlu0 %v1141, 32
    %v1418 = vpop.permute.xlu0 %1417
    %1435 = vrot.lane.b32.xlu0 %v1143, 64
    %v1436 = vpop.permute.xlu0 %1435
    %1437 = vrot.lane.b32.xlu0 %v1144, 64
    %v1438 = vpop.permute.xlu0 %1437
    %1439 = vrot.lane.b32.xlu0 %v1145, 64
    %v1440 = vpop.permute.xlu0 %1439
    %1441 = vrot.lane.b32.xlu0 %v1146, 64
    %v1442 = vpop.permute.xlu0 %1441
    %1443 = vrot.lane.b32.xlu0 %v1147, 64
    %v1444 = vpop.permute.xlu0 %1443
    %1445 = vrot.lane.b32.xlu0 %v1148, 64
    %v1446 = vpop.permute.xlu0 %1445
    %1447 = vrot.lane.b32.xlu0 %v1149, 64
    %v1448 = vpop.permute.xlu0 %1447
    %1449 = vrot.lane.b32.xlu0 %v1150, 64
    %v1450 = vpop.permute.xlu0 %1449
    %1467 = vrot.lane.b32.xlu0 %v1151, 96
    %v1468 = vpop.permute.xlu0 %1467
    %1469 = vrot.lane.b32.xlu0 %v1152, 96
    %v1470 = vpop.permute.xlu0 %1469
    %1471 = vrot.lane.b32.xlu0 %v1153, 96
    %v1472 = vpop.permute.xlu0 %1471
    %1473 = vrot.lane.b32.xlu0 %v1154, 96
    %v1474 = vpop.permute.xlu0 %1473
    %1475 = vrot.lane.b32.xlu0 %v1155, 96
    %v1476 = vpop.permute.xlu0 %1475
    %1477 = vrot.lane.b32.xlu0 %v1156, 96
    %v1478 = vpop.permute.xlu0 %1477
    %1479 = vrot.lane.b32.xlu0 %v1157, 96
    %v1480 = vpop.permute.xlu0 %1479
    %1481 = vrot.lane.b32.xlu0 %v1158, 96
    %v1482 = vpop.permute.xlu0 %1481
    %1499 = vrot.lane.b32.xlu0 %v1168, 32
    %v1500 = vpop.permute.xlu0 %1499
    %1501 = vrot.lane.b32.xlu0 %v1169, 32
    %v1502 = vpop.permute.xlu0 %1501
    %1503 = vrot.lane.b32.xlu0 %v1170, 32
    %v1504 = vpop.permute.xlu0 %1503
    %1505 = vrot.lane.b32.xlu0 %v1171, 32
    %v1506 = vpop.permute.xlu0 %1505
    %1507 = vrot.lane.b32.xlu0 %v1172, 32
    %v1508 = vpop.permute.xlu0 %1507
    %1509 = vrot.lane.b32.xlu0 %v1173, 32
    %v1510 = vpop.permute.xlu0 %1509
    %1511 = vrot.lane.b32.xlu0 %v1174, 32
    %v1512 = vpop.permute.xlu0 %1511
    %1513 = vrot.lane.b32.xlu0 %v1175, 32
    %v1514 = vpop.permute.xlu0 %1513
    %1531 = vrot.lane.b32.xlu0 %v1176, 64
    %v1532 = vpop.permute.xlu0 %1531
    %1533 = vrot.lane.b32.xlu0 %v1177, 64
    %v1534 = vpop.permute.xlu0 %1533
    %1535 = vrot.lane.b32.xlu0 %v1178, 64
    %v1536 = vpop.permute.xlu0 %1535
    %1537 = vrot.lane.b32.xlu0 %v1179, 64
    %v1538 = vpop.permute.xlu0 %1537
    %1539 = vrot.lane.b32.xlu0 %v1180, 64
    %v1540 = vpop.permute.xlu0 %1539
    %1541 = vrot.lane.b32.xlu0 %v1181, 64
    %v1542 = vpop.permute.xlu0 %1541
    %1543 = vrot.lane.b32.xlu0 %v1182, 64
    %v1544 = vpop.permute.xlu0 %1543
    %1545 = vrot.lane.b32.xlu0 %v1183, 64
    %v1546 = vpop.permute.xlu0 %1545
    %1563 = vrot.lane.b32.xlu0 %v1184, 96
    %v1564 = vpop.permute.xlu0 %1563
    %1565 = vrot.lane.b32.xlu0 %v1185, 96
    %v1566 = vpop.permute.xlu0 %1565
    %1567 = vrot.lane.b32.xlu0 %v1186, 96
    %v1568 = vpop.permute.xlu0 %1567
    %1569 = vrot.lane.b32.xlu0 %v1187, 96
    %v1570 = vpop.permute.xlu0 %1569
    %1571 = vrot.lane.b32.xlu0 %v1188, 96
    %v1572 = vpop.permute.xlu0 %1571
    %1573 = vrot.lane.b32.xlu0 %v1189, 96
    %v1574 = vpop.permute.xlu0 %1573
    %1575 = vrot.lane.b32.xlu0 %v1190, 96
    %v1576 = vpop.permute.xlu0 %1575
    %1577 = vrot.lane.b32.xlu0 %v1191, 96
    %v1578 = vpop.permute.xlu0 %1577
    %1595 = vrot.lane.b32.xlu0 %v1126, 32
    %v1596 = vpop.permute.xlu0 %1595
    %1597 = vrot.lane.b32.xlu0 %v1127, 32
    %v1598 = vpop.permute.xlu0 %1597
    %1599 = vrot.lane.b32.xlu0 %v1128, 32
    %v1600 = vpop.permute.xlu0 %1599
    %1601 = vrot.lane.b32.xlu0 %v1129, 32
    %v1602 = vpop.permute.xlu0 %1601
    %1603 = vrot.lane.b32.xlu0 %v1130, 32
    %v1604 = vpop.permute.xlu0 %1603
    %1605 = vrot.lane.b32.xlu0 %v1131, 32
    %v1606 = vpop.permute.xlu0 %1605
    %1607 = vrot.lane.b32.xlu0 %v1132, 32
    %v1608 = vpop.permute.xlu0 %1607
    %1609 = vrot.lane.b32.xlu0 %v1133, 32
    %v1610 = vpop.permute.xlu0 %1609
    %1627 = vrot.lane.b32.xlu0 %v1200, 64
    %v1628 = vpop.permute.xlu0 %1627
    %1629 = vrot.lane.b32.xlu0 %v1201, 64
    %v1630 = vpop.permute.xlu0 %1629
    %1631 = vrot.lane.b32.xlu0 %v1202, 64
    %v1632 = vpop.permute.xlu0 %1631
    %1633 = vrot.lane.b32.xlu0 %v1203, 64
    %v1634 = vpop.permute.xlu0 %1633
    %1635 = vrot.lane.b32.xlu0 %v1204, 64
    %v1636 = vpop.permute.xlu0 %1635
    %1637 = vrot.lane.b32.xlu0 %v1205, 64
    %v1638 = vpop.permute.xlu0 %1637
    %1639 = vrot.lane.b32.xlu0 %v1206, 64
    %v1640 = vpop.permute.xlu0 %1639
    %1641 = vrot.lane.b32.xlu0 %v1207, 64
    %v1642 = vpop.permute.xlu0 %1641
    %1659 = vrot.lane.b32.xlu0 %v1209, 96
    %v1660 = vpop.permute.xlu0 %1659
    %1661 = vrot.lane.b32.xlu0 %v1210, 96
    %v1662 = vpop.permute.xlu0 %1661
    %1663 = vrot.lane.b32.xlu0 %v1211, 96
    %v1664 = vpop.permute.xlu0 %1663
    %1665 = vrot.lane.b32.xlu0 %v1212, 96
    %v1666 = vpop.permute.xlu0 %1665
    %1667 = vrot.lane.b32.xlu0 %v1213, 96
    %v1668 = vpop.permute.xlu0 %1667
    %1669 = vrot.lane.b32.xlu0 %v1214, 96
    %v1670 = vpop.permute.xlu0 %1669
    %1671 = vrot.lane.b32.xlu0 %v1215, 96
    %v1672 = vpop.permute.xlu0 %1671
    %1673 = vrot.lane.b32.xlu0 %v1216, 96
    %v1674 = vpop.permute.xlu0 %1673
    %v1683 = vsel %vm681, %v1093, %v1308
    %v1684 = vsel %vm681, %v1094, %v1310
    %v1685 = vsel %vm681, %v1095, %v1312
    %v1686 = vsel %vm681, %v1096, %v1314
    %v1687 = vsel %vm681, %v1097, %v1316
    %v1688 = vsel %vm681, %v1098, %v1318
    %v1689 = vsel %vm681, %v1099, %v1320
    %v1690 = vsel %vm681, %v1100, %v1322
    %v1691 = vsel %vm690, %v1683, %v1340
    %v1692 = vsel %vm690, %v1684, %v1342
    %v1693 = vsel %vm690, %v1685, %v1344
    %v1694 = vsel %vm690, %v1686, %v1346
    %v1695 = vsel %vm690, %v1687, %v1348
    %v1696 = vsel %vm690, %v1688, %v1350
    %v1697 = vsel %vm690, %v1689, %v1352
    %v1698 = vsel %vm690, %v1690, %v1354
    %v1699 = vsel %vm699, %v1691, %v1372
    %v1700 = vsel %vm699, %v1692, %v1374
    %v1701 = vsel %vm699, %v1693, %v1376
    %v1702 = vsel %vm699, %v1694, %v1378
    %v1703 = vsel %vm699, %v1695, %v1380
    %v1704 = vsel %vm699, %v1696, %v1382
    %v1705 = vsel %vm699, %v1697, %v1384
    %v1706 = vsel %vm699, %v1698, %v1386
    %v1707 = vsel %vm681, %v1126, %v1404
    %v1708 = vsel %vm681, %v1127, %v1406
    %v1709 = vsel %vm681, %v1128, %v1408
    %v1710 = vsel %vm681, %v1129, %v1410
    %v1711 = vsel %vm681, %v1130, %v1412
    %v1712 = vsel %vm681, %v1131, %v1414
    %v1713 = vsel %vm681, %v1132, %v1416
    %v1714 = vsel %vm681, %v1133, %v1418
    %v1715 = vsel %vm690, %v1707, %v1436
    %v1716 = vsel %vm690, %v1708, %v1438
    %v1717 = vsel %vm690, %v1709, %v1440
    %v1718 = vsel %vm690, %v1710, %v1442
    %v1719 = vsel %vm690, %v1711, %v1444
    %v1720 = vsel %vm690, %v1712, %v1446
    %v1721 = vsel %vm690, %v1713, %v1448
    %v1722 = vsel %vm690, %v1714, %v1450
    %v1723 = vsel %vm699, %v1715, %v1468
    %v1724 = vsel %vm699, %v1716, %v1470
    %v1725 = vsel %vm699, %v1717, %v1472
    %v1726 = vsel %vm699, %v1718, %v1474
    %v1727 = vsel %vm699, %v1719, %v1476
    %v1728 = vsel %vm699, %v1720, %v1478
    %v1729 = vsel %vm699, %v1721, %v1480
    %v1730 = vsel %vm699, %v1722, %v1482
    %v1731 = vsel %vm681, %v1159, %v1500
    %v1732 = vsel %vm681, %v1160, %v1502
    %v1733 = vsel %vm681, %v1161, %v1504
    %v1734 = vsel %vm681, %v1162, %v1506
    %v1735 = vsel %vm681, %v1163, %v1508
    %v1736 = vsel %vm681, %v1164, %v1510
    %v1737 = vsel %vm681, %v1165, %v1512
    %v1738 = vsel %vm681, %v1166, %v1514
    %v1739 = vsel %vm690, %v1731, %v1532
    %v1740 = vsel %vm690, %v1732, %v1534
    %v1741 = vsel %vm690, %v1733, %v1536
    %v1742 = vsel %vm690, %v1734, %v1538
    %v1743 = vsel %vm690, %v1735, %v1540
    %v1744 = vsel %vm690, %v1736, %v1542
    %v1745 = vsel %vm690, %v1737, %v1544
    %v1746 = vsel %vm690, %v1738, %v1546
    %v1747 = vsel %vm699, %v1739, %v1564
    %v1748 = vsel %vm699, %v1740, %v1566
    %v1749 = vsel %vm699, %v1741, %v1568
    %v1750 = vsel %vm699, %v1742, %v1570
    %v1751 = vsel %vm699, %v1743, %v1572
    %v1752 = vsel %vm699, %v1744, %v1574
    %v1753 = vsel %vm699, %v1745, %v1576
    %v1754 = vsel %vm699, %v1746, %v1578
    %v1755 = vsel %vm681, %v1192, %v1596
    %v1756 = vsel %vm681, %v1193, %v1598
    %v1757 = vsel %vm681, %v1194, %v1600
    %v1758 = vsel %vm681, %v1195, %v1602
    %v1759 = vsel %vm681, %v1196, %v1604
    %v1760 = vsel %vm681, %v1197, %v1606
    %v1761 = vsel %vm681, %v1198, %v1608
    %v1762 = vsel %vm681, %v1199, %v1610
    %v1763 = vsel %vm690, %v1755, %v1628
    %v1764 = vsel %vm690, %v1756, %v1630
    %v1765 = vsel %vm690, %v1757, %v1632
    %v1766 = vsel %vm690, %v1758, %v1634
    %v1767 = vsel %vm690, %v1759, %v1636
    %v1768 = vsel %vm690, %v1760, %v1638
    %v1769 = vsel %vm690, %v1761, %v1640
    %v1770 = vsel %vm690, %v1762, %v1642
    %v1771 = vsel %vm699, %v1763, %v1660
    %v1772 = vsel %vm699, %v1764, %v1662
    %v1773 = vsel %vm699, %v1765, %v1664
    %v1774 = vsel %vm699, %v1766, %v1666
    %v1775 = vsel %vm699, %v1767, %v1668
    %v1776 = vsel %vm699, %v1768, %v1670
    %v1777 = vsel %vm699, %v1769, %v1672
    %v1778 = vsel %vm699, %v1770, %v1674
    %1787 = vrot.lane.b32.xlu0 %v1225, 32
    %v1788 = vpop.permute.xlu0 %1787
    %1789 = vrot.lane.b32.xlu0 %v1226, 32
    %v1790 = vpop.permute.xlu0 %1789
    %1791 = vrot.lane.b32.xlu0 %v1227, 32
    %v1792 = vpop.permute.xlu0 %1791
    %1793 = vrot.lane.b32.xlu0 %v1228, 32
    %v1794 = vpop.permute.xlu0 %1793
    %1795 = vrot.lane.b32.xlu0 %v1229, 32
    %v1796 = vpop.permute.xlu0 %1795
    %1797 = vrot.lane.b32.xlu0 %v1230, 32
    %v1798 = vpop.permute.xlu0 %1797
    %1799 = vrot.lane.b32.xlu0 %v1231, 32
    %v1800 = vpop.permute.xlu0 %1799
    %1801 = vrot.lane.b32.xlu0 %v1232, 32
    %v1802 = vpop.permute.xlu0 %1801
    %1819 = vrot.lane.b32.xlu0 %v1234, 64
    %v1820 = vpop.permute.xlu0 %1819
    %1821 = vrot.lane.b32.xlu0 %v1235, 64
    %v1822 = vpop.permute.xlu0 %1821
    %1823 = vrot.lane.b32.xlu0 %v1236, 64
    %v1824 = vpop.permute.xlu0 %1823
    %1825 = vrot.lane.b32.xlu0 %v1237, 64
    %v1826 = vpop.permute.xlu0 %1825
    %1827 = vrot.lane.b32.xlu0 %v1238, 64
    %v1828 = vpop.permute.xlu0 %1827
    %1829 = vrot.lane.b32.xlu0 %v1239, 64
    %v1830 = vpop.permute.xlu0 %1829
    %1831 = vrot.lane.b32.xlu0 %v1240, 64
    %v1832 = vpop.permute.xlu0 %1831
    %1833 = vrot.lane.b32.xlu0 %v1241, 64
    %v1834 = vpop.permute.xlu0 %1833
    %1851 = vrot.lane.b32.xlu0 %v1242, 96
    %v1852 = vpop.permute.xlu0 %1851
    %1853 = vrot.lane.b32.xlu0 %v1243, 96
    %v1854 = vpop.permute.xlu0 %1853
    %1855 = vrot.lane.b32.xlu0 %v1244, 96
    %v1856 = vpop.permute.xlu0 %1855
    %1857 = vrot.lane.b32.xlu0 %v1245, 96
    %v1858 = vpop.permute.xlu0 %1857
    %1859 = vrot.lane.b32.xlu0 %v1246, 96
    %v1860 = vpop.permute.xlu0 %1859
    %1861 = vrot.lane.b32.xlu0 %v1247, 96
    %v1862 = vpop.permute.xlu0 %1861
    %1863 = vrot.lane.b32.xlu0 %v1248, 96
    %v1864 = vpop.permute.xlu0 %1863
    %1865 = vrot.lane.b32.xlu0 %v1249, 96
    %v1866 = vpop.permute.xlu0 %1865
    %1883 = vrot.lane.b32.xlu0 %v1258, 32
    %v1884 = vpop.permute.xlu0 %1883
    %1885 = vrot.lane.b32.xlu0 %v1259, 32
    %v1886 = vpop.permute.xlu0 %1885
    %1887 = vrot.lane.b32.xlu0 %v1260, 32
    %v1888 = vpop.permute.xlu0 %1887
    %1889 = vrot.lane.b32.xlu0 %v1261, 32
    %v1890 = vpop.permute.xlu0 %1889
    %1891 = vrot.lane.b32.xlu0 %v1262, 32
    %v1892 = vpop.permute.xlu0 %1891
    %1893 = vrot.lane.b32.xlu0 %v1263, 32
    %v1894 = vpop.permute.xlu0 %1893
    %1895 = vrot.lane.b32.xlu0 %v1264, 32
    %v1896 = vpop.permute.xlu0 %1895
    %1897 = vrot.lane.b32.xlu0 %v1265, 32
    %v1898 = vpop.permute.xlu0 %1897
    %1907 = vrot.lane.b32.xlu0 %v1126, 64
    %v1908 = vpop.permute.xlu0 %1907
    %1909 = vrot.lane.b32.xlu0 %v1127, 64
    %v1910 = vpop.permute.xlu0 %1909
    %1911 = vrot.lane.b32.xlu0 %v1128, 64
    %v1912 = vpop.permute.xlu0 %1911
    %1913 = vrot.lane.b32.xlu0 %v1129, 64
    %v1914 = vpop.permute.xlu0 %1913
    %1915 = vrot.lane.b32.xlu0 %v1130, 64
    %v1916 = vpop.permute.xlu0 %1915
    %1917 = vrot.lane.b32.xlu0 %v1131, 64
    %v1918 = vpop.permute.xlu0 %1917
    %1919 = vrot.lane.b32.xlu0 %v1132, 64
    %v1920 = vpop.permute.xlu0 %1919
    %1921 = vrot.lane.b32.xlu0 %v1133, 64
    %v1922 = vpop.permute.xlu0 %1921
    %1939 = vrot.lane.b32.xlu0 %v1266, 96
    %v1940 = vpop.permute.xlu0 %1939
    %1941 = vrot.lane.b32.xlu0 %v1267, 96
    %v1942 = vpop.permute.xlu0 %1941
    %1943 = vrot.lane.b32.xlu0 %v1268, 96
    %v1944 = vpop.permute.xlu0 %1943
    %1945 = vrot.lane.b32.xlu0 %v1269, 96
    %v1946 = vpop.permute.xlu0 %1945
    %1947 = vrot.lane.b32.xlu0 %v1270, 96
    %v1948 = vpop.permute.xlu0 %1947
    %1949 = vrot.lane.b32.xlu0 %v1271, 96
    %v1950 = vpop.permute.xlu0 %1949
    %1951 = vrot.lane.b32.xlu0 %v1272, 96
    %v1952 = vpop.permute.xlu0 %1951
    %1953 = vrot.lane.b32.xlu0 %v1273, 96
    %v1954 = vpop.permute.xlu0 %1953
    %1971 = vrot.lane.b32.xlu0 %v1283, 32
    %v1972 = vpop.permute.xlu0 %1971
    %1973 = vrot.lane.b32.xlu0 %v1284, 32
    %v1974 = vpop.permute.xlu0 %1973
    %1975 = vrot.lane.b32.xlu0 %v1285, 32
    %v1976 = vpop.permute.xlu0 %1975
    %1977 = vrot.lane.b32.xlu0 %v1286, 32
    %v1978 = vpop.permute.xlu0 %1977
    %1979 = vrot.lane.b32.xlu0 %v1287, 32
    %v1980 = vpop.permute.xlu0 %1979
    %1981 = vrot.lane.b32.xlu0 %v1288, 32
    %v1982 = vpop.permute.xlu0 %1981
    %1983 = vrot.lane.b32.xlu0 %v1289, 32
    %v1984 = vpop.permute.xlu0 %1983
    %1985 = vrot.lane.b32.xlu0 %v1290, 32
    %v1986 = vpop.permute.xlu0 %1985
    %2003 = vrot.lane.b32.xlu0 %v1291, 64
    %v2004 = vpop.permute.xlu0 %2003
    %2005 = vrot.lane.b32.xlu0 %v1292, 64
    %v2006 = vpop.permute.xlu0 %2005
    %2007 = vrot.lane.b32.xlu0 %v1293, 64
    %v2008 = vpop.permute.xlu0 %2007
    %2009 = vrot.lane.b32.xlu0 %v1294, 64
    %v2010 = vpop.permute.xlu0 %2009
    %2011 = vrot.lane.b32.xlu0 %v1295, 64
    %v2012 = vpop.permute.xlu0 %2011
    %2013 = vrot.lane.b32.xlu0 %v1296, 64
    %v2014 = vpop.permute.xlu0 %2013
    %2015 = vrot.lane.b32.xlu0 %v1297, 64
    %v2016 = vpop.permute.xlu0 %2015
    %2017 = vrot.lane.b32.xlu0 %v1298, 64
    %v2018 = vpop.permute.xlu0 %2017
    %v2027 = vsel %vm681, %v1217, %v1788
    %v2028 = vsel %vm681, %v1218, %v1790
    %v2029 = vsel %vm681, %v1219, %v1792
    %v2030 = vsel %vm681, %v1220, %v1794
    %v2031 = vsel %vm681, %v1221, %v1796
    %v2032 = vsel %vm681, %v1222, %v1798
    %v2033 = vsel %vm681, %v1223, %v1800
    %v2034 = vsel %vm681, %v1224, %v1802
    %v2035 = vsel %vm690, %v2027, %v1820
    %v2036 = vsel %vm690, %v2028, %v1822
    %v2037 = vsel %vm690, %v2029, %v1824
    %v2038 = vsel %vm690, %v2030, %v1826
    %v2039 = vsel %vm690, %v2031, %v1828
    %v2040 = vsel %vm690, %v2032, %v1830
    %v2041 = vsel %vm690, %v2033, %v1832
    %v2042 = vsel %vm690, %v2034, %v1834
    %v2043 = vsel %vm699, %v2035, %v1852
    %v2044 = vsel %vm699, %v2036, %v1854
    %v2045 = vsel %vm699, %v2037, %v1856
    %v2046 = vsel %vm699, %v2038, %v1858
    %v2047 = vsel %vm699, %v2039, %v1860
    %v2048 = vsel %vm699, %v2040, %v1862
    %v2049 = vsel %vm699, %v2041, %v1864
    %v2050 = vsel %vm699, %v2042, %v1866
    %v2051 = vsel %vm681, %v1250, %v1884
    %v2052 = vsel %vm681, %v1251, %v1886
    %v2053 = vsel %vm681, %v1252, %v1888
    %v2054 = vsel %vm681, %v1253, %v1890
    %v2055 = vsel %vm681, %v1254, %v1892
    %v2056 = vsel %vm681, %v1255, %v1894
    %v2057 = vsel %vm681, %v1256, %v1896
    %v2058 = vsel %vm681, %v1257, %v1898
    %v2059 = vsel %vm690, %v2051, %v1908
    %v2060 = vsel %vm690, %v2052, %v1910
    %v2061 = vsel %vm690, %v2053, %v1912
    %v2062 = vsel %vm690, %v2054, %v1914
    %v2063 = vsel %vm690, %v2055, %v1916
    %v2064 = vsel %vm690, %v2056, %v1918
    %v2065 = vsel %vm690, %v2057, %v1920
    %v2066 = vsel %vm690, %v2058, %v1922
    %v2067 = vsel %vm699, %v2059, %v1940
    %v2068 = vsel %vm699, %v2060, %v1942
    %v2069 = vsel %vm699, %v2061, %v1944
    %v2070 = vsel %vm699, %v2062, %v1946
    %v2071 = vsel %vm699, %v2063, %v1948
    %v2072 = vsel %vm699, %v2064, %v1950
    %v2073 = vsel %vm699, %v2065, %v1952
    %v2074 = vsel %vm699, %v2066, %v1954
    %v2075 = vsel %vm681, %v1275, %v1972
    %v2076 = vsel %vm681, %v1276, %v1974
    %v2077 = vsel %vm681, %v1277, %v1976
    %v2078 = vsel %vm681, %v1278, %v1978
    %v2079 = vsel %vm681, %v1279, %v1980
    %v2080 = vsel %vm681, %v1280, %v1982
    %v2081 = vsel %vm681, %v1281, %v1984
    %v2082 = vsel %vm681, %v1282, %v1986
    %v2083 = vsel %vm690, %v2075, %v2004
    %v2084 = vsel %vm690, %v2076, %v2006
    %v2085 = vsel %vm690, %v2077, %v2008
    %v2086 = vsel %vm690, %v2078, %v2010
    %v2087 = vsel %vm690, %v2079, %v2012
    %v2088 = vsel %vm690, %v2080, %v2014
    %v2089 = vsel %vm690, %v2081, %v2016
    %v2090 = vsel %vm690, %v2082, %v2018
    %v2091 = vld [vmem:[%s2] sm:$0xff]
    %v2092 = vld [vmem:[%s2 + $0x8] sm:$0xff]
    %v2093 = vld [vmem:[%s2 + $0x10] sm:$0xff]
    %v2094 = vld [vmem:[%s2 + $0x18] sm:$0xff]
    %v2095 = vld [vmem:[%s2 + $0x20] sm:$0xff]
    %v2096 = vld [vmem:[%s2 + $0x28] sm:$0xff]
    %v2097 = vld [vmem:[%s2 + $0x30] sm:$0xff]
    %v2098 = vld [vmem:[%s2 + $0x38] sm:$0xff]
    %v2099 = vld [vmem:[%s2 + $0x40] sm:$0xff]
    %v2100 = vld [vmem:[%s2 + $0x48] sm:$0xff]
    %v2101 = vld [vmem:[%s2 + $0x50] sm:$0xff]
    %v2102 = vld [vmem:[%s2 + $0x58] sm:$0xff]
    %v2103 = vld [vmem:[%s2 + $0x60] sm:$0xff]
    %v2104 = vld [vmem:[%s2 + $0x68] sm:$0xff]
    %v2105 = vld [vmem:[%s2 + $0x70] sm:$0xff]
    %v2106 = vld [vmem:[%s2 + $0x78] sm:$0xff]
    %v2107 = vld [vmem:[%s2 + $0x80] sm:$0xff]
    %v2108 = vld [vmem:[%s2 + $0x88] sm:$0xff]
    %v2109 = vld [vmem:[%s2 + $0x90] sm:$0xff]
    %v2110 = vld [vmem:[%s2 + $0x98] sm:$0xff]
    %v2111 = vld [vmem:[%s2 + $0xa0] sm:$0xff]
    %v2112 = vld [vmem:[%s2 + $0xa8] sm:$0xff]
    %v2113 = vld [vmem:[%s2 + $0xb0] sm:$0xff]
    %v2114 = vld [vmem:[%s2 + $0xb8] sm:$0xff]
    %v2115 = vld [vmem:[%s2 + $0xc0] sm:$0xff]
    %v2116 = vld [vmem:[%s2 + $0xc8] sm:$0xff]
    %v2117 = vld [vmem:[%s2 + $0xd0] sm:$0xff]
    %v2118 = vld [vmem:[%s2 + $0xd8] sm:$0xff]
    %v2119 = vld [vmem:[%s2 + $0xe0] sm:$0xff]
    %v2120 = vld [vmem:[%s2 + $0xe8] sm:$0xff]
    %v2121 = vld [vmem:[%s2 + $0xf0] sm:$0xff]
    %v2122 = vld [vmem:[%s2 + $0xf8] sm:$0xff]
    %v2123 = vld [vmem:[%s2 + $0x100] sm:$0xff]
    %v2124 = vld [vmem:[%s2 + $0x108] sm:$0xff]
    %v2125 = vld [vmem:[%s2 + $0x110] sm:$0xff]
    %v2126 = vld [vmem:[%s2 + $0x118] sm:$0xff]
    %v2127 = vld [vmem:[%s2 + $0x120] sm:$0xff]
    %v2128 = vld [vmem:[%s2 + $0x128] sm:$0xff]
    %v2129 = vld [vmem:[%s2 + $0x130] sm:$0xff]
    %v2130 = vld [vmem:[%s2 + $0x138] sm:$0xff]
    %v2131 = vld [vmem:[%s2 + $0x140] sm:$0xff]
    %v2132 = vld [vmem:[%s2 + $0x148] sm:$0xff]
    %v2133 = vld [vmem:[%s2 + $0x150] sm:$0xff]
    %v2134 = vld [vmem:[%s2 + $0x158] sm:$0xff]
    %v2135 = vld [vmem:[%s2 + $0x160] sm:$0xff]
    %v2136 = vld [vmem:[%s2 + $0x168] sm:$0xff]
    %v2137 = vld [vmem:[%s2 + $0x170] sm:$0xff]
    %v2138 = vld [vmem:[%s2 + $0x178] sm:$0xff]
    %v2139 = vld [vmem:[%s2 + $0x180] sm:$0xff]
    %v2140 = vld [vmem:[%s2 + $0x188] sm:$0xff]
    %v2141 = vld [vmem:[%s2 + $0x190] sm:$0xff]
    %v2142 = vld [vmem:[%s2 + $0x198] sm:$0xff]
    %v2143 = vld [vmem:[%s2 + $0x1a0] sm:$0xff]
    %v2144 = vld [vmem:[%s2 + $0x1a8] sm:$0xff]
    %v2145 = vld [vmem:[%s2 + $0x1b0] sm:$0xff]
    %v2146 = vld [vmem:[%s2 + $0x1b8] sm:$0xff]
    %v2147 = vld [vmem:[%s2 + $0x1c0] sm:$0xff]
    %v2148 = vld [vmem:[%s2 + $0x1c8] sm:$0xff]
    %v2149 = vld [vmem:[%s2 + $0x1d0] sm:$0xff]
    %v2150 = vld [vmem:[%s2 + $0x1d8] sm:$0xff]
    %v2151 = vld [vmem:[%s2 + $0x1e0] sm:$0xff]
    %v2152 = vld [vmem:[%s2 + $0x1e8] sm:$0xff]
    %v2153 = vld [vmem:[%s2 + $0x1f0] sm:$0xff]
    %v2154 = vld [vmem:[%s2 + $0x1f8] sm:$0xff]
    %v2155 = vld [vmem:[%s2 + $0x200] sm:$0xff]
    %v2156 = vld [vmem:[%s2 + $0x208] sm:$0xff]
    %v2157 = vld [vmem:[%s2 + $0x210] sm:$0xff]
    %v2158 = vld [vmem:[%s2 + $0x218] sm:$0xff]
    %v2159 = vld [vmem:[%s2 + $0x220] sm:$0xff]
    %v2160 = vld [vmem:[%s2 + $0x228] sm:$0xff]
    %v2161 = vld [vmem:[%s2 + $0x230] sm:$0xff]
    %v2162 = vld [vmem:[%s2 + $0x238] sm:$0xff]
    %v2163 = vld [vmem:[%s2 + $0x240] sm:$0xff]
    %v2164 = vld [vmem:[%s2 + $0x248] sm:$0xff]
    %v2165 = vld [vmem:[%s2 + $0x250] sm:$0xff]
    %v2166 = vld [vmem:[%s2 + $0x258] sm:$0xff]
    %v2167 = vld [vmem:[%s2 + $0x260] sm:$0xff]
    %v2168 = vld [vmem:[%s2 + $0x268] sm:$0xff]
    %v2169 = vld [vmem:[%s2 + $0x270] sm:$0xff]
    %v2170 = vld [vmem:[%s2 + $0x278] sm:$0xff]
    %v2171 = vld [vmem:[%s2 + $0x280] sm:$0xff]
    %v2172 = vld [vmem:[%s2 + $0x288] sm:$0xff]
    %v2173 = vld [vmem:[%s2 + $0x290] sm:$0xff]
    %v2174 = vld [vmem:[%s2 + $0x298] sm:$0xff]
    %v2175 = vld [vmem:[%s2 + $0x2a0] sm:$0xff]
    %v2176 = vld [vmem:[%s2 + $0x2a8] sm:$0xff]
    %v2177 = vld [vmem:[%s2 + $0x2b0] sm:$0xff]
    %v2178 = vld [vmem:[%s2 + $0x2b8] sm:$0xff]
    %v2179 = vld [vmem:[%s2 + $0x2c0] sm:$0xff]
    %v2180 = vld [vmem:[%s2 + $0x2c8] sm:$0xff]
    %v2181 = vld [vmem:[%s2 + $0x2d0] sm:$0xff]
    %v2182 = vld [vmem:[%s2 + $0x2d8] sm:$0xff]
    %v2183 = vld [vmem:[%s2 + $0x2e0] sm:$0xff]
    %v2184 = vld [vmem:[%s2 + $0x2e8] sm:$0xff]
    %v2185 = vld [vmem:[%s2 + $0x2f0] sm:$0xff]
    %v2186 = vld [vmem:[%s2 + $0x2f8] sm:$0xff]
    %v2187 = vld [vmem:[%s2 + $0x300] sm:$0xff]
    %v2188 = vld [vmem:[%s2 + $0x308] sm:$0xff]
    %v2189 = vld [vmem:[%s2 + $0x310] sm:$0xff]
    %v2190 = vld [vmem:[%s2 + $0x318] sm:$0xff]
    %v2191 = vld [vmem:[%s2 + $0x320] sm:$0xff]
    %v2192 = vld [vmem:[%s2 + $0x328] sm:$0xff]
    %v2193 = vld [vmem:[%s2 + $0x330] sm:$0xff]
    %v2194 = vld [vmem:[%s2 + $0x338] sm:$0xff]
    %v2195 = vld [vmem:[%s2 + $0x340] sm:$0xff]
    %v2196 = vld [vmem:[%s2 + $0x348] sm:$0xff]
    %v2197 = vld [vmem:[%s2 + $0x350] sm:$0xff]
    %v2198 = vld [vmem:[%s2 + $0x358] sm:$0xff]
    %v2199 = vld [vmem:[%s3] sm:$0x1]
    %v2201 = vperm.slane %v2199, 0
    %v2204 = vsel %vm699, %v1084, 0
    %v2207 = vsel %vm699, %v1085, 0
    %v2210 = vsel %vm699, %v1086, 0
    %v2213 = vsel %vm699, %v1087, 0
    %v2216 = vsel %vm699, %v1088, 0
    %v2219 = vsel %vm699, %v1089, 0
    %v2222 = vsel %vm699, %v1090, 0
    %v2225 = vsel %vm699, %v1091, 0
    %v2228 = vsel %vm699, %v2083, 0
    %v2231 = vsel %vm699, %v2084, 0
    %v2234 = vsel %vm699, %v2085, 0
    %v2237 = vsel %vm699, %v2086, 0
    %v2240 = vsel %vm699, %v2087, 0
    %v2243 = vsel %vm699, %v2088, 0
    %v2246 = vsel %vm699, %v2089, 0
    %v2249 = vsel %vm699, %v2090, 0
    %2251 = vmatpush.msra.mxu0 %v2106
    %2252 = vmatpush.msra.mxu0 %v2105
    %2253 = vmatpush.msra.mxu0 %v2104
    %2254 = vmatpush.msra.mxu0 %v2103
    %2255 = vmatpush.msra.mxu0 %v2102
    %2256 = vmatpush.msra.mxu0 %v2101
    %2257 = vmatpush.msra.mxu0 %v2100
    %2258 = vmatpush.msra.mxu0 %v2099
    %2259 = vmatpush.msra.mxu0 %v2098
    %2260 = vmatpush.msra.mxu0 %v2097
    %2261 = vmatpush.msra.mxu0 %v2096
    %2262 = vmatpush.msra.mxu0 %v2095
    %2263 = vmatpush.msra.mxu0 %v2094
    %2264 = vmatpush.msra.mxu0 %v2093
    %2265 = vmatpush.msra.mxu0 %v2092
    %2266 = vmatpush.msra.mxu0 %v2091
    %2267 = vmatmul.f32.gmra.mxu0 %v700
    %v2268 = vpop.f32.mrf.mxu0
    %v2269 = vadd.f32 %v2201, %v2268
    %2270 = vmatmul.f32.gmra.mxu0 %v701
    %v2271 = vpop.f32.mrf.mxu0
    %v2272 = vadd.f32 %v2201, %v2271
    %2273 = vmatmul.f32.gmra.mxu0 %v702
    %v2274 = vpop.f32.mrf.mxu0
    %v2275 = vadd.f32 %v2201, %v2274
    %2276 = vmatmul.f32.gmra.mxu0 %v703
    %v2277 = vpop.f32.mrf.mxu0
    %v2278 = vadd.f32 %v2201, %v2277
    %2279 = vmatmul.f32.gmra.mxu0 %v704
    %v2280 = vpop.f32.mrf.mxu0
    %v2281 = vadd.f32 %v2201, %v2280
    %2282 = vmatmul.f32.gmra.mxu0 %v705
    %v2283 = vpop.f32.mrf.mxu0
    %v2284 = vadd.f32 %v2201, %v2283
    %2285 = vmatmul.f32.gmra.mxu0 %v706
    %v2286 = vpop.f32.mrf.mxu0
    %v2287 = vadd.f32 %v2201, %v2286
    %2288 = vmatmul.f32.gmra.mxu0 %v707
    %v2289 = vpop.f32.mrf.mxu0
    %v2290 = vadd.f32 %v2201, %v2289
    %2291 = vmatmul.f32.gmra.mxu0 %v1699
    %v2292 = vpop.f32.mrf.mxu0
    %v2293 = vadd.f32 %v2201, %v2292
    %2294 = vmatmul.f32.gmra.mxu0 %v1700
    %v2295 = vpop.f32.mrf.mxu0
    %v2296 = vadd.f32 %v2201, %v2295
    %2297 = vmatmul.f32.gmra.mxu0 %v1701
    %v2298 = vpop.f32.mrf.mxu0
    %v2299 = vadd.f32 %v2201, %v2298
    %2300 = vmatmul.f32.gmra.mxu0 %v1702
    %v2301 = vpop.f32.mrf.mxu0
    %v2302 = vadd.f32 %v2201, %v2301
    %2303 = vmatmul.f32.gmra.mxu0 %v1703
    %v2304 = vpop.f32.mrf.mxu0
    %v2305 = vadd.f32 %v2201, %v2304
    %2306 = vmatmul.f32.gmra.mxu0 %v1704
    %v2307 = vpop.f32.mrf.mxu0
    %v2308 = vadd.f32 %v2201, %v2307
    %2309 = vmatmul.f32.gmra.mxu0 %v1705
    %v2310 = vpop.f32.mrf.mxu0
    %v2311 = vadd.f32 %v2201, %v2310
    %2312 = vmatmul.f32.gmra.mxu0 %v1706
    %v2313 = vpop.f32.mrf.mxu0
    %v2314 = vadd.f32 %v2201, %v2313
    %2315 = vdwg.mxu0
    %2316 = vmatpush.msra.mxu0 %v2122
    %2317 = vmatpush.msra.mxu0 %v2121
    %2318 = vmatpush.msra.mxu0 %v2120
    %2319 = vmatpush.msra.mxu0 %v2119
    %2320 = vmatpush.msra.mxu0 %v2118
    %2321 = vmatpush.msra.mxu0 %v2117
    %2322 = vmatpush.msra.mxu0 %v2116
    %2323 = vmatpush.msra.mxu0 %v2115
    %2324 = vmatpush.msra.mxu0 %v2114
    %2325 = vmatpush.msra.mxu0 %v2113
    %2326 = vmatpush.msra.mxu0 %v2112
    %2327 = vmatpush.msra.mxu0 %v2111
    %2328 = vmatpush.msra.mxu0 %v2110
    %2329 = vmatpush.msra.mxu0 %v2109
    %2330 = vmatpush.msra.mxu0 %v2108
    %2331 = vmatpush.msra.mxu0 %v2107
    %2332 = vmatmul.f32.gmra.mxu0 %v724
    %v2333 = vpop.f32.mrf.mxu0
    %v2334 = vadd.f32 %v2269, %v2333
    %2335 = vmatmul.f32.gmra.mxu0 %v725
    %v2336 = vpop.f32.mrf.mxu0
    %v2337 = vadd.f32 %v2272, %v2336
    %2338 = vmatmul.f32.gmra.mxu0 %v726
    %v2339 = vpop.f32.mrf.mxu0
    %v2340 = vadd.f32 %v2275, %v2339
    %2341 = vmatmul.f32.gmra.mxu0 %v727
    %v2342 = vpop.f32.mrf.mxu0
    %v2343 = vadd.f32 %v2278, %v2342
    %2344 = vmatmul.f32.gmra.mxu0 %v728
    %v2345 = vpop.f32.mrf.mxu0
    %v2346 = vadd.f32 %v2281, %v2345
    %2347 = vmatmul.f32.gmra.mxu0 %v729
    %v2348 = vpop.f32.mrf.mxu0
    %v2349 = vadd.f32 %v2284, %v2348
    %2350 = vmatmul.f32.gmra.mxu0 %v730
    %v2351 = vpop.f32.mrf.mxu0
    %v2352 = vadd.f32 %v2287, %v2351
    %2353 = vmatmul.f32.gmra.mxu0 %v731
    %v2354 = vpop.f32.mrf.mxu0
    %v2355 = vadd.f32 %v2290, %v2354
    %2356 = vmatmul.f32.gmra.mxu0 %v1723
    %v2357 = vpop.f32.mrf.mxu0
    %v2358 = vadd.f32 %v2293, %v2357
    %2359 = vmatmul.f32.gmra.mxu0 %v1724
    %v2360 = vpop.f32.mrf.mxu0
    %v2361 = vadd.f32 %v2296, %v2360
    %2362 = vmatmul.f32.gmra.mxu0 %v1725
    %v2363 = vpop.f32.mrf.mxu0
    %v2364 = vadd.f32 %v2299, %v2363
    %2365 = vmatmul.f32.gmra.mxu0 %v1726
    %v2366 = vpop.f32.mrf.mxu0
    %v2367 = vadd.f32 %v2302, %v2366
    %2368 = vmatmul.f32.gmra.mxu0 %v1727
    %v2369 = vpop.f32.mrf.mxu0
    %v2370 = vadd.f32 %v2305, %v2369
    %2371 = vmatmul.f32.gmra.mxu0 %v1728
    %v2372 = vpop.f32.mrf.mxu0
    %v2373 = vadd.f32 %v2308, %v2372
    %2374 = vmatmul.f32.gmra.mxu0 %v1729
    %v2375 = vpop.f32.mrf.mxu0
    %v2376 = vadd.f32 %v2311, %v2375
    %2377 = vmatmul.f32.gmra.mxu0 %v1730
    %v2378 = vpop.f32.mrf.mxu0
    %v2379 = vadd.f32 %v2314, %v2378
    %2380 = vdwg.mxu0
    %2381 = vmatpush.msra.mxu0 %v2138
    %2382 = vmatpush.msra.mxu0 %v2137
    %2383 = vmatpush.msra.mxu0 %v2136
    %2384 = vmatpush.msra.mxu0 %v2135
    %2385 = vmatpush.msra.mxu0 %v2134
    %2386 = vmatpush.msra.mxu0 %v2133
    %2387 = vmatpush.msra.mxu0 %v2132
    %2388 = vmatpush.msra.mxu0 %v2131
    %2389 = vmatpush.msra.mxu0 %v2130
    %2390 = vmatpush.msra.mxu0 %v2129
    %2391 = vmatpush.msra.mxu0 %v2128
    %2392 = vmatpush.msra.mxu0 %v2127
    %2393 = vmatpush.msra.mxu0 %v2126
    %2394 = vmatpush.msra.mxu0 %v2125
    %2395 = vmatpush.msra.mxu0 %v2124
    %2396 = vmatpush.msra.mxu0 %v2123
    %2397 = vmatmul.f32.gmra.mxu0 %v748
    %v2398 = vpop.f32.mrf.mxu0
    %v2399 = vadd.f32 %v2334, %v2398
    %2400 = vmatmul.f32.gmra.mxu0 %v749
    %v2401 = vpop.f32.mrf.mxu0
    %v2402 = vadd.f32 %v2337, %v2401
    %2403 = vmatmul.f32.gmra.mxu0 %v750
    %v2404 = vpop.f32.mrf.mxu0
    %v2405 = vadd.f32 %v2340, %v2404
    %2406 = vmatmul.f32.gmra.mxu0 %v751
    %v2407 = vpop.f32.mrf.mxu0
    %v2408 = vadd.f32 %v2343, %v2407
    %2409 = vmatmul.f32.gmra.mxu0 %v752
    %v2410 = vpop.f32.mrf.mxu0
    %v2411 = vadd.f32 %v2346, %v2410
    %2412 = vmatmul.f32.gmra.mxu0 %v753
    %v2413 = vpop.f32.mrf.mxu0
    %v2414 = vadd.f32 %v2349, %v2413
    %2415 = vmatmul.f32.gmra.mxu0 %v754
    %v2416 = vpop.f32.mrf.mxu0
    %v2417 = vadd.f32 %v2352, %v2416
    %2418 = vmatmul.f32.gmra.mxu0 %v755
    %v2419 = vpop.f32.mrf.mxu0
    %v2420 = vadd.f32 %v2355, %v2419
    %2421 = vmatmul.f32.gmra.mxu0 %v1747
    %v2422 = vpop.f32.mrf.mxu0
    %v2423 = vadd.f32 %v2358, %v2422
    %2424 = vmatmul.f32.gmra.mxu0 %v1748
    %v2425 = vpop.f32.mrf.mxu0
    %v2426 = vadd.f32 %v2361, %v2425
    %2427 = vmatmul.f32.gmra.mxu0 %v1749
    %v2428 = vpop.f32.mrf.mxu0
    %v2429 = vadd.f32 %v2364, %v2428
    %2430 = vmatmul.f32.gmra.mxu0 %v1750
    %v2431 = vpop.f32.mrf.mxu0
    %v2432 = vadd.f32 %v2367, %v2431
    %2433 = vmatmul.f32.gmra.mxu0 %v1751
    %v2434 = vpop.f32.mrf.mxu0
    %v2435 = vadd.f32 %v2370, %v2434
    %2436 = vmatmul.f32.gmra.mxu0 %v1752
    %v2437 = vpop.f32.mrf.mxu0
    %v2438 = vadd.f32 %v2373, %v2437
    %2439 = vmatmul.f32.gmra.mxu0 %v1753
    %v2440 = vpop.f32.mrf.mxu0
    %v2441 = vadd.f32 %v2376, %v2440
    %2442 = vmatmul.f32.gmra.mxu0 %v1754
    %v2443 = vpop.f32.mrf.mxu0
    %v2444 = vadd.f32 %v2379, %v2443
    %2445 = vdwg.mxu0
    %2446 = vmatpush.msra.mxu0 %v2154
    %2447 = vmatpush.msra.mxu0 %v2153
    %2448 = vmatpush.msra.mxu0 %v2152
    %2449 = vmatpush.msra.mxu0 %v2151
    %2450 = vmatpush.msra.mxu0 %v2150
    %2451 = vmatpush.msra.mxu0 %v2149
    %2452 = vmatpush.msra.mxu0 %v2148
    %2453 = vmatpush.msra.mxu0 %v2147
    %2454 = vmatpush.msra.mxu0 %v2146
    %2455 = vmatpush.msra.mxu0 %v2145
    %2456 = vmatpush.msra.mxu0 %v2144
    %2457 = vmatpush.msra.mxu0 %v2143
    %2458 = vmatpush.msra.mxu0 %v2142
    %2459 = vmatpush.msra.mxu0 %v2141
    %2460 = vmatpush.msra.mxu0 %v2140
    %2461 = vmatpush.msra.mxu0 %v2139
    %2462 = vmatmul.f32.gmra.mxu0 %v772
    %v2463 = vpop.f32.mrf.mxu0
    %v2464 = vadd.f32 %v2399, %v2463
    %2465 = vmatmul.f32.gmra.mxu0 %v773
    %v2466 = vpop.f32.mrf.mxu0
    %v2467 = vadd.f32 %v2402, %v2466
    %2468 = vmatmul.f32.gmra.mxu0 %v774
    %v2469 = vpop.f32.mrf.mxu0
    %v2470 = vadd.f32 %v2405, %v2469
    %2471 = vmatmul.f32.gmra.mxu0 %v775
    %v2472 = vpop.f32.mrf.mxu0
    %v2473 = vadd.f32 %v2408, %v2472
    %2474 = vmatmul.f32.gmra.mxu0 %v776
    %v2475 = vpop.f32.mrf.mxu0
    %v2476 = vadd.f32 %v2411, %v2475
    %2477 = vmatmul.f32.gmra.mxu0 %v777
    %v2478 = vpop.f32.mrf.mxu0
    %v2479 = vadd.f32 %v2414, %v2478
    %2480 = vmatmul.f32.gmra.mxu0 %v778
    %v2481 = vpop.f32.mrf.mxu0
    %v2482 = vadd.f32 %v2417, %v2481
    %2483 = vmatmul.f32.gmra.mxu0 %v779
    %v2484 = vpop.f32.mrf.mxu0
    %v2485 = vadd.f32 %v2420, %v2484
    %2486 = vmatmul.f32.gmra.mxu0 %v1771
    %v2487 = vpop.f32.mrf.mxu0
    %v2488 = vadd.f32 %v2423, %v2487
    %2489 = vmatmul.f32.gmra.mxu0 %v1772
    %v2490 = vpop.f32.mrf.mxu0
    %v2491 = vadd.f32 %v2426, %v2490
    %2492 = vmatmul.f32.gmra.mxu0 %v1773
    %v2493 = vpop.f32.mrf.mxu0
    %v2494 = vadd.f32 %v2429, %v2493
    %2495 = vmatmul.f32.gmra.mxu0 %v1774
    %v2496 = vpop.f32.mrf.mxu0
    %v2497 = vadd.f32 %v2432, %v2496
    %2498 = vmatmul.f32.gmra.mxu0 %v1775
    %v2499 = vpop.f32.mrf.mxu0
    %v2500 = vadd.f32 %v2435, %v2499
    %2501 = vmatmul.f32.gmra.mxu0 %v1776
    %v2502 = vpop.f32.mrf.mxu0
    %v2503 = vadd.f32 %v2438, %v2502
    %2504 = vmatmul.f32.gmra.mxu0 %v1777
    %v2505 = vpop.f32.mrf.mxu0
    %v2506 = vadd.f32 %v2441, %v2505
    %2507 = vmatmul.f32.gmra.mxu0 %v1778
    %v2508 = vpop.f32.mrf.mxu0
    %v2509 = vadd.f32 %v2444, %v2508
    %2510 = vdwg.mxu0
    %2511 = vmatpush.msra.mxu0 %v2170
    %2512 = vmatpush.msra.mxu0 %v2169
    %2513 = vmatpush.msra.mxu0 %v2168
    %2514 = vmatpush.msra.mxu0 %v2167
    %2515 = vmatpush.msra.mxu0 %v2166
    %2516 = vmatpush.msra.mxu0 %v2165
    %2517 = vmatpush.msra.mxu0 %v2164
    %2518 = vmatpush.msra.mxu0 %v2163
    %2519 = vmatpush.msra.mxu0 %v2162
    %2520 = vmatpush.msra.mxu0 %v2161
    %2521 = vmatpush.msra.mxu0 %v2160
    %2522 = vmatpush.msra.mxu0 %v2159
    %2523 = vmatpush.msra.mxu0 %v2158
    %2524 = vmatpush.msra.mxu0 %v2157
    %2525 = vmatpush.msra.mxu0 %v2156
    %2526 = vmatpush.msra.mxu0 %v2155
    %2527 = vmatmul.f32.gmra.mxu0 %v1044
    %v2528 = vpop.f32.mrf.mxu0
    %v2529 = vadd.f32 %v2464, %v2528
    %2530 = vmatmul.f32.gmra.mxu0 %v1045
    %v2531 = vpop.f32.mrf.mxu0
    %v2532 = vadd.f32 %v2467, %v2531
    %2533 = vmatmul.f32.gmra.mxu0 %v1046
    %v2534 = vpop.f32.mrf.mxu0
    %v2535 = vadd.f32 %v2470, %v2534
    %2536 = vmatmul.f32.gmra.mxu0 %v1047
    %v2537 = vpop.f32.mrf.mxu0
    %v2538 = vadd.f32 %v2473, %v2537
    %2539 = vmatmul.f32.gmra.mxu0 %v1048
    %v2540 = vpop.f32.mrf.mxu0
    %v2541 = vadd.f32 %v2476, %v2540
    %2542 = vmatmul.f32.gmra.mxu0 %v1049
    %v2543 = vpop.f32.mrf.mxu0
    %v2544 = vadd.f32 %v2479, %v2543
    %2545 = vmatmul.f32.gmra.mxu0 %v1050
    %v2546 = vpop.f32.mrf.mxu0
    %v2547 = vadd.f32 %v2482, %v2546
    %2548 = vmatmul.f32.gmra.mxu0 %v1051
    %v2549 = vpop.f32.mrf.mxu0
    %v2550 = vadd.f32 %v2485, %v2549
    %2551 = vmatmul.f32.gmra.mxu0 %v2043
    %v2552 = vpop.f32.mrf.mxu0
    %v2553 = vadd.f32 %v2488, %v2552
    %2554 = vmatmul.f32.gmra.mxu0 %v2044
    %v2555 = vpop.f32.mrf.mxu0
    %v2556 = vadd.f32 %v2491, %v2555
    %2557 = vmatmul.f32.gmra.mxu0 %v2045
    %v2558 = vpop.f32.mrf.mxu0
    %v2559 = vadd.f32 %v2494, %v2558
    %2560 = vmatmul.f32.gmra.mxu0 %v2046
    %v2561 = vpop.f32.mrf.mxu0
    %v2562 = vadd.f32 %v2497, %v2561
    %2563 = vmatmul.f32.gmra.mxu0 %v2047
    %v2564 = vpop.f32.mrf.mxu0
    %v2565 = vadd.f32 %v2500, %v2564
    %2566 = vmatmul.f32.gmra.mxu0 %v2048
    %v2567 = vpop.f32.mrf.mxu0
    %v2568 = vadd.f32 %v2503, %v2567
    %2569 = vmatmul.f32.gmra.mxu0 %v2049
    %v2570 = vpop.f32.mrf.mxu0
    %v2571 = vadd.f32 %v2506, %v2570
    %2572 = vmatmul.f32.gmra.mxu0 %v2050
    %v2573 = vpop.f32.mrf.mxu0
    %v2574 = vadd.f32 %v2509, %v2573
    %2575 = vdwg.mxu0
    %2576 = vmatpush.msra.mxu0 %v2186
    %2577 = vmatpush.msra.mxu0 %v2185
    %2578 = vmatpush.msra.mxu0 %v2184
    %2579 = vmatpush.msra.mxu0 %v2183
    %2580 = vmatpush.msra.mxu0 %v2182
    %2581 = vmatpush.msra.mxu0 %v2181
    %2582 = vmatpush.msra.mxu0 %v2180
    %2583 = vmatpush.msra.mxu0 %v2179
    %2584 = vmatpush.msra.mxu0 %v2178
    %2585 = vmatpush.msra.mxu0 %v2177
    %2586 = vmatpush.msra.mxu0 %v2176
    %2587 = vmatpush.msra.mxu0 %v2175
    %2588 = vmatpush.msra.mxu0 %v2174
    %2589 = vmatpush.msra.mxu0 %v2173
    %2590 = vmatpush.msra.mxu0 %v2172
    %2591 = vmatpush.msra.mxu0 %v2171
    %2592 = vmatmul.f32.gmra.mxu0 %v1068
    %v2593 = vpop.f32.mrf.mxu0
    %v2594 = vadd.f32 %v2529, %v2593
    %2595 = vmatmul.f32.gmra.mxu0 %v1069
    %v2596 = vpop.f32.mrf.mxu0
    %v2597 = vadd.f32 %v2532, %v2596
    %2598 = vmatmul.f32.gmra.mxu0 %v1070
    %v2599 = vpop.f32.mrf.mxu0
    %v2600 = vadd.f32 %v2535, %v2599
    %2601 = vmatmul.f32.gmra.mxu0 %v1071
    %v2602 = vpop.f32.mrf.mxu0
    %v2603 = vadd.f32 %v2538, %v2602
    %2604 = vmatmul.f32.gmra.mxu0 %v1072
    %v2605 = vpop.f32.mrf.mxu0
    %v2606 = vadd.f32 %v2541, %v2605
    %2607 = vmatmul.f32.gmra.mxu0 %v1073
    %v2608 = vpop.f32.mrf.mxu0
    %v2609 = vadd.f32 %v2544, %v2608
    %2610 = vmatmul.f32.gmra.mxu0 %v1074
    %v2611 = vpop.f32.mrf.mxu0
    %v2612 = vadd.f32 %v2547, %v2611
    %2613 = vmatmul.f32.gmra.mxu0 %v1075
    %v2614 = vpop.f32.mrf.mxu0
    %v2615 = vadd.f32 %v2550, %v2614
    %2616 = vmatmul.f32.gmra.mxu0 %v2067
    %v2617 = vpop.f32.mrf.mxu0
    %v2618 = vadd.f32 %v2553, %v2617
    %2619 = vmatmul.f32.gmra.mxu0 %v2068
    %v2620 = vpop.f32.mrf.mxu0
    %v2621 = vadd.f32 %v2556, %v2620
    %2622 = vmatmul.f32.gmra.mxu0 %v2069
    %v2623 = vpop.f32.mrf.mxu0
    %v2624 = vadd.f32 %v2559, %v2623
    %2625 = vmatmul.f32.gmra.mxu0 %v2070
    %v2626 = vpop.f32.mrf.mxu0
    %v2627 = vadd.f32 %v2562, %v2626
    %2628 = vmatmul.f32.gmra.mxu0 %v2071
    %v2629 = vpop.f32.mrf.mxu0
    %v2630 = vadd.f32 %v2565, %v2629
    %2631 = vmatmul.f32.gmra.mxu0 %v2072
    %v2632 = vpop.f32.mrf.mxu0
    %v2633 = vadd.f32 %v2568, %v2632
    %2634 = vmatmul.f32.gmra.mxu0 %v2073
    %v2635 = vpop.f32.mrf.mxu0
    %v2636 = vadd.f32 %v2571, %v2635
    %2637 = vmatmul.f32.gmra.mxu0 %v2074
    %v2638 = vpop.f32.mrf.mxu0
    %v2639 = vadd.f32 %v2574, %v2638
    %2640 = vdwg.mxu0
    %2641 = vmatpush.msra.mxu0 0.0
    %2642 = vmatpush.msra.mxu0 0.0
    %2643 = vmatpush.msra.mxu0 0.0
    %2644 = vmatpush.msra.mxu0 0.0
    %2645 = vmatpush.msra.mxu0 %v2198
    %2646 = vmatpush.msra.mxu0 %v2197
    %2647 = vmatpush.msra.mxu0 %v2196
    %2648 = vmatpush.msra.mxu0 %v2195
    %2649 = vmatpush.msra.mxu0 %v2194
    %2650 = vmatpush.msra.mxu0 %v2193
    %2651 = vmatpush.msra.mxu0 %v2192
    %2652 = vmatpush.msra.mxu0 %v2191
    %2653 = vmatpush.msra.mxu0 %v2190
    %2654 = vmatpush.msra.mxu0 %v2189
    %2655 = vmatpush.msra.mxu0 %v2188
    %2656 = vmatpush.msra.mxu0 %v2187
    %2657 = vmatmul.f32.gmra.mxu0 %v2204
    %v2658 = vpop.f32.mrf.mxu0
    %v2659 = vadd.f32 %v2594, %v2658
    %2660 = vmatmul.f32.gmra.mxu0 %v2207
    %v2661 = vpop.f32.mrf.mxu0
    %v2662 = vadd.f32 %v2597, %v2661
    %2663 = vmatmul.f32.gmra.mxu0 %v2210
    %v2664 = vpop.f32.mrf.mxu0
    %v2665 = vadd.f32 %v2600, %v2664
    %2666 = vmatmul.f32.gmra.mxu0 %v2213
    %v2667 = vpop.f32.mrf.mxu0
    %v2668 = vadd.f32 %v2603, %v2667
    %2669 = vmatmul.f32.gmra.mxu0 %v2216
    %v2670 = vpop.f32.mrf.mxu0
    %v2671 = vadd.f32 %v2606, %v2670
    %2672 = vmatmul.f32.gmra.mxu0 %v2219
    %v2673 = vpop.f32.mrf.mxu0
    %v2674 = vadd.f32 %v2609, %v2673
    %2675 = vmatmul.f32.gmra.mxu0 %v2222
    %v2676 = vpop.f32.mrf.mxu0
    %v2677 = vadd.f32 %v2612, %v2676
    %2678 = vmatmul.f32.gmra.mxu0 %v2225
    %v2679 = vpop.f32.mrf.mxu0
    %v2680 = vadd.f32 %v2615, %v2679
    %2681 = vmatmul.f32.gmra.mxu0 %v2228
    %v2682 = vpop.f32.mrf.mxu0
    %v2683 = vadd.f32 %v2618, %v2682
    %2684 = vmatmul.f32.gmra.mxu0 %v2231
    %v2685 = vpop.f32.mrf.mxu0
    %v2686 = vadd.f32 %v2621, %v2685
    %2687 = vmatmul.f32.gmra.mxu0 %v2234
    %v2688 = vpop.f32.mrf.mxu0
    %v2689 = vadd.f32 %v2624, %v2688
    %2690 = vmatmul.f32.gmra.mxu0 %v2237
    %v2691 = vpop.f32.mrf.mxu0
    %v2692 = vadd.f32 %v2627, %v2691
    %2693 = vmatmul.f32.gmra.mxu0 %v2240
    %v2694 = vpop.f32.mrf.mxu0
    %v2695 = vadd.f32 %v2630, %v2694
    %2696 = vmatmul.f32.gmra.mxu0 %v2243
    %v2697 = vpop.f32.mrf.mxu0
    %v2698 = vadd.f32 %v2633, %v2697
    %2699 = vmatmul.f32.gmra.mxu0 %v2246
    %v2700 = vpop.f32.mrf.mxu0
    %v2701 = vadd.f32 %v2636, %v2700
    %2702 = vmatmul.f32.gmra.mxu0 %v2249
    %v2703 = vpop.f32.mrf.mxu0
    %v2704 = vadd.f32 %v2639, %v2703
    %2705 = vdwg.mxu0
    %v2706 = vmax.f32 %v2659, 0.0
    %v2707 = vmax.f32 %v2662, 0.0
    %v2708 = vmax.f32 %v2665, 0.0
    %v2709 = vmax.f32 %v2668, 0.0
    %v2710 = vmax.f32 %v2671, 0.0
    %v2711 = vmax.f32 %v2674, 0.0
    %v2712 = vmax.f32 %v2677, 0.0
    %v2713 = vmax.f32 %v2680, 0.0
    %v2714 = vmax.f32 %v2683, 0.0
    %v2715 = vmax.f32 %v2686, 0.0
    %v2716 = vmax.f32 %v2689, 0.0
    %v2717 = vmax.f32 %v2692, 0.0
    %v2718 = vmax.f32 %v2695, 0.0
    %v2719 = vmax.f32 %v2698, 0.0
    %v2720 = vmax.f32 %v2701, 0.0
    %v2721 = vmax.f32 %v2704, 0.0
    %v2722 = vld [vmem:[%s4] sm:$0xff]
    %v2723 = vld [vmem:[%s4 + $0x8] sm:$0xff]
    %v2724 = vld [vmem:[%s4 + $0x10] sm:$0xff]
    %v2725 = vld [vmem:[%s4 + $0x18] sm:$0xff]
    %v2726 = vld [vmem:[%s4 + $0x20] sm:$0xff]
    %v2727 = vld [vmem:[%s4 + $0x28] sm:$0xff]
    %v2728 = vld [vmem:[%s4 + $0x30] sm:$0xff]
    %v2729 = vld [vmem:[%s4 + $0x38] sm:$0xff]
    %v2730 = vld [vmem:[%s4 + $0x40] sm:$0xff]
    %v2731 = vld [vmem:[%s4 + $0x48] sm:$0xff]
    %v2732 = vld [vmem:[%s4 + $0x50] sm:$0xff]
    %v2733 = vld [vmem:[%s4 + $0x58] sm:$0xff]
    %v2734 = vld [vmem:[%s4 + $0x60] sm:$0xff]
    %v2735 = vld [vmem:[%s4 + $0x68] sm:$0xff]
    %v2736 = vld [vmem:[%s4 + $0x70] sm:$0xff]
    %v2737 = vld [vmem:[%s4 + $0x78] sm:$0xff]
    %v2738 = vld [vmem:[%s5] sm:$0x1]
    %v2740 = vperm.slane %v2738, 0
    %2742 = vmatpush.msra.mxu0 %v2737
    %2743 = vmatpush.msra.mxu0 %v2736
    %2744 = vmatpush.msra.mxu0 %v2735
    %2745 = vmatpush.msra.mxu0 %v2734
    %2746 = vmatpush.msra.mxu0 %v2733
    %2747 = vmatpush.msra.mxu0 %v2732
    %2748 = vmatpush.msra.mxu0 %v2731
    %2749 = vmatpush.msra.mxu0 %v2730
    %2750 = vmatpush.msra.mxu0 %v2729
    %2751 = vmatpush.msra.mxu0 %v2728
    %2752 = vmatpush.msra.mxu0 %v2727
    %2753 = vmatpush.msra.mxu0 %v2726
    %2754 = vmatpush.msra.mxu0 %v2725
    %2755 = vmatpush.msra.mxu0 %v2724
    %2756 = vmatpush.msra.mxu0 %v2723
    %2757 = vmatpush.msra.mxu0 %v2722
    %2758 = vmatmul.f32.gmra.mxu0 %v2706
    %v2759 = vpop.f32.mrf.mxu0
    %v2760 = vadd.f32 %v2740, %v2759
    %2761 = vmatmul.f32.gmra.mxu0 %v2707
    %v2762 = vpop.f32.mrf.mxu0
    %v2763 = vadd.f32 %v2740, %v2762
    %2764 = vmatmul.f32.gmra.mxu0 %v2708
    %v2765 = vpop.f32.mrf.mxu0
    %v2766 = vadd.f32 %v2740, %v2765
    %2767 = vmatmul.f32.gmra.mxu0 %v2709
    %v2768 = vpop.f32.mrf.mxu0
    %v2769 = vadd.f32 %v2740, %v2768
    %2770 = vmatmul.f32.gmra.mxu0 %v2710
    %v2771 = vpop.f32.mrf.mxu0
    %v2772 = vadd.f32 %v2740, %v2771
    %2773 = vmatmul.f32.gmra.mxu0 %v2711
    %v2774 = vpop.f32.mrf.mxu0
    %v2775 = vadd.f32 %v2740, %v2774
    %2776 = vmatmul.f32.gmra.mxu0 %v2712
    %v2777 = vpop.f32.mrf.mxu0
    %v2778 = vadd.f32 %v2740, %v2777
    %2779 = vmatmul.f32.gmra.mxu0 %v2713
    %v2780 = vpop.f32.mrf.mxu0
    %v2781 = vadd.f32 %v2740, %v2780
    %2782 = vmatmul.f32.gmra.mxu0 %v2714
    %v2783 = vpop.f32.mrf.mxu0
    %v2784 = vadd.f32 %v2740, %v2783
    %2785 = vmatmul.f32.gmra.mxu0 %v2715
    %v2786 = vpop.f32.mrf.mxu0
    %v2787 = vadd.f32 %v2740, %v2786
    %2788 = vmatmul.f32.gmra.mxu0 %v2716
    %v2789 = vpop.f32.mrf.mxu0
    %v2790 = vadd.f32 %v2740, %v2789
    %2791 = vmatmul.f32.gmra.mxu0 %v2717
    %v2792 = vpop.f32.mrf.mxu0
    %v2793 = vadd.f32 %v2740, %v2792
    %2794 = vmatmul.f32.gmra.mxu0 %v2718
    %v2795 = vpop.f32.mrf.mxu0
    %v2796 = vadd.f32 %v2740, %v2795
    %2797 = vmatmul.f32.gmra.mxu0 %v2719
    %v2798 = vpop.f32.mrf.mxu0
    %v2799 = vadd.f32 %v2740, %v2798
    %2800 = vmatmul.f32.gmra.mxu0 %v2720
    %v2801 = vpop.f32.mrf.mxu0
    %v2802 = vadd.f32 %v2740, %v2801
    %2803 = vmatmul.f32.gmra.mxu0 %v2721
    %v2804 = vpop.f32.mrf.mxu0
    %v2805 = vadd.f32 %v2740, %v2804
    %2806 = vdwg.mxu0
    %v2807 = vld [vmem:[%s8] sm:$0x1]
    %v2809 = vperm.slane %v2807, 0
    %v2811 = vsub.f32 %v2760, %v2809
    %v2812 = vsub.f32 %v2763, %v2809
    %v2813 = vsub.f32 %v2766, %v2809
    %v2814 = vsub.f32 %v2769, %v2809
    %v2815 = vsub.f32 %v2772, %v2809
    %v2816 = vsub.f32 %v2775, %v2809
    %v2817 = vsub.f32 %v2778, %v2809
    %v2818 = vsub.f32 %v2781, %v2809
    %v2819 = vsub.f32 %v2784, %v2809
    %v2820 = vsub.f32 %v2787, %v2809
    %v2821 = vsub.f32 %v2790, %v2809
    %v2822 = vsub.f32 %v2793, %v2809
    %v2823 = vsub.f32 %v2796, %v2809
    %v2824 = vsub.f32 %v2799, %v2809
    %v2825 = vsub.f32 %v2802, %v2809
    %v2826 = vsub.f32 %v2805, %v2809
    %v2827 = vld [vmem:[%s9] sm:$0x1]
    %v2828 = vadd.f32 %v2827, 1e-05
    %v2829 = vrsqrt.pop %v2828
    %v2830 = vmul.f32 %v2829, %v2828
    %v2831 = vmul.f32 %v2830, %v2829
    %v2832 = vmul.f32 0.5, %v2831
    %v2833 = vsub.f32 1.5, %v2832
    %v2834 = vmul.f32 %v2829, %v2833
    %vm2835 = vweird.f32 %v2828
    %vm2836 = vweird.f32 %v2829
    %vm2837 = vmor %vm2835, %vm2836
    %v2838 = vsel %vm2837, %v2829, %v2834
    %v2840 = vperm.slane %v2838, 0
    %v2842 = vmul.f32 %v2811, %v2840
    %v2843 = vmul.f32 %v2812, %v2840
    %v2844 = vmul.f32 %v2813, %v2840
    %v2845 = vmul.f32 %v2814, %v2840
    %v2846 = vmul.f32 %v2815, %v2840
    %v2847 = vmul.f32 %v2816, %v2840
    %v2848 = vmul.f32 %v2817, %v2840
    %v2849 = vmul.f32 %v2818, %v2840
    %v2850 = vmul.f32 %v2819, %v2840
    %v2851 = vmul.f32 %v2820, %v2840
    %v2852 = vmul.f32 %v2821, %v2840
    %v2853 = vmul.f32 %v2822, %v2840
    %v2854 = vmul.f32 %v2823, %v2840
    %v2855 = vmul.f32 %v2824, %v2840
    %v2856 = vmul.f32 %v2825, %v2840
    %v2857 = vmul.f32 %v2826, %v2840
    %v2858 = vld [vmem:[%s6] sm:$0x1]
    %v2860 = vperm.slane %v2858, 0
    %v2862 = vmul.f32 %v2842, %v2860
    %v2863 = vmul.f32 %v2843, %v2860
    %v2864 = vmul.f32 %v2844, %v2860
    %v2865 = vmul.f32 %v2845, %v2860
    %v2866 = vmul.f32 %v2846, %v2860
    %v2867 = vmul.f32 %v2847, %v2860
    %v2868 = vmul.f32 %v2848, %v2860
    %v2869 = vmul.f32 %v2849, %v2860
    %v2870 = vmul.f32 %v2850, %v2860
    %v2871 = vmul.f32 %v2851, %v2860
    %v2872 = vmul.f32 %v2852, %v2860
    %v2873 = vmul.f32 %v2853, %v2860
    %v2874 = vmul.f32 %v2854, %v2860
    %v2875 = vmul.f32 %v2855, %v2860
    %v2876 = vmul.f32 %v2856, %v2860
    %v2877 = vmul.f32 %v2857, %v2860
    %v2878 = vld [vmem:[%s7] sm:$0x1]
    %v2880 = vperm.slane %v2878, 0
    %v2882 = vadd.f32 %v2862, %v2880
    %v2883 = vadd.f32 %v2863, %v2880
    %v2884 = vadd.f32 %v2864, %v2880
    %v2885 = vadd.f32 %v2865, %v2880
    %v2886 = vadd.f32 %v2866, %v2880
    %v2887 = vadd.f32 %v2867, %v2880
    %v2888 = vadd.f32 %v2868, %v2880
    %v2889 = vadd.f32 %v2869, %v2880
    %v2890 = vadd.f32 %v2870, %v2880
    %v2891 = vadd.f32 %v2871, %v2880
    %v2892 = vadd.f32 %v2872, %v2880
    %v2893 = vadd.f32 %v2873, %v2880
    %v2894 = vadd.f32 %v2874, %v2880
    %v2895 = vadd.f32 %v2875, %v2880
    %v2896 = vadd.f32 %v2876, %v2880
    %v2897 = vadd.f32 %v2877, %v2880
    %v2898 = vmul.f32 %v2882, %v2882
    %v2899 = vmul.f32 %v2883, %v2883
    %v2900 = vmul.f32 %v2884, %v2884
    %v2901 = vmul.f32 %v2885, %v2885
    %v2902 = vmul.f32 %v2886, %v2886
    %v2903 = vmul.f32 %v2887, %v2887
    %v2904 = vmul.f32 %v2888, %v2888
    %v2905 = vmul.f32 %v2889, %v2889
    %v2906 = vmul.f32 %v2890, %v2890
    %v2907 = vmul.f32 %v2891, %v2891
    %v2908 = vmul.f32 %v2892, %v2892
    %v2909 = vmul.f32 %v2893, %v2893
    %v2910 = vmul.f32 %v2894, %v2894
    %v2911 = vmul.f32 %v2895, %v2895
    %v2912 = vmul.f32 %v2896, %v2896
    %v2913 = vmul.f32 %v2897, %v2897
    %2914 = vadd.xlane.f32.xlu0 %v2898
    %v2915 = vpop.xlane.xlu0 %2914
    %2916 = vadd.xlane.f32.xlu0 %v2899
    %v2917 = vpop.xlane.xlu0 %2916
    %2918 = vadd.xlane.f32.xlu0 %v2900
    %v2919 = vpop.xlane.xlu0 %2918
    %2920 = vadd.xlane.f32.xlu0 %v2901
    %v2921 = vpop.xlane.xlu0 %2920
    %2922 = vadd.xlane.f32.xlu0 %v2902
    %v2923 = vpop.xlane.xlu0 %2922
    %2924 = vadd.xlane.f32.xlu0 %v2903
    %v2925 = vpop.xlane.xlu0 %2924
    %2926 = vadd.xlane.f32.xlu0 %v2904
    %v2927 = vpop.xlane.xlu0 %2926
    %2928 = vadd.xlane.f32.xlu0 %v2905
    %v2929 = vpop.xlane.xlu0 %2928
    %2930 = vadd.xlane.f32.xlu0 %v2906
    %v2931 = vpop.xlane.xlu0 %2930
    %2932 = vadd.xlane.f32.xlu0 %v2907
    %v2933 = vpop.xlane.xlu0 %2932
    %2934 = vadd.xlane.f32.xlu0 %v2908
    %v2935 = vpop.xlane.xlu0 %2934
    %2936 = vadd.xlane.f32.xlu0 %v2909
    %v2937 = vpop.xlane.xlu0 %2936
    %2938 = vadd.xlane.f32.xlu0 %v2910
    %v2939 = vpop.xlane.xlu0 %2938
    %2940 = vadd.xlane.f32.xlu0 %v2911
    %v2941 = vpop.xlane.xlu0 %2940
    %2942 = vadd.xlane.f32.xlu0 %v2912
    %v2943 = vpop.xlane.xlu0 %2942
    %2944 = vadd.xlane.f32.xlu0 %v2913
    %v2945 = vpop.xlane.xlu0 %2944
    %v2946 = vmax.f32 %v2915, 1e-24
    %v2947 = vmax.f32 %v2917, 1e-24
    %v2948 = vmax.f32 %v2919, 1e-24
    %v2949 = vmax.f32 %v2921, 1e-24
    %v2950 = vmax.f32 %v2923, 1e-24
    %v2951 = vmax.f32 %v2925, 1e-24
    %v2952 = vmax.f32 %v2927, 1e-24
    %v2953 = vmax.f32 %v2929, 1e-24
    %v2954 = vmax.f32 %v2931, 1e-24
    %v2955 = vmax.f32 %v2933, 1e-24
    %v2956 = vmax.f32 %v2935, 1e-24
    %v2957 = vmax.f32 %v2937, 1e-24
    %v2958 = vmax.f32 %v2939, 1e-24
    %v2959 = vmax.f32 %v2941, 1e-24
    %v2960 = vmax.f32 %v2943, 1e-24
    %v2961 = vmax.f32 %v2945, 1e-24
    %v2962 = vrsqrt.pop %v2946
    %v2963 = vmul.f32 %v2962, %v2946
    %v2964 = vmul.f32 %v2963, %v2962
    %v2965 = vmul.f32 0.5, %v2964
    %v2966 = vsub.f32 1.5, %v2965
    %v2967 = vmul.f32 %v2962, %v2966
    %vm2968 = vweird.f32 %v2946
    %vm2969 = vweird.f32 %v2962
    %vm2970 = vmor %vm2968, %vm2969
    %v2971 = vsel %vm2970, %v2962, %v2967
    %v2972 = vrsqrt.pop %v2947
    %v2973 = vmul.f32 %v2972, %v2947
    %v2974 = vmul.f32 %v2973, %v2972
    %v2975 = vmul.f32 0.5, %v2974
    %v2976 = vsub.f32 1.5, %v2975
    %v2977 = vmul.f32 %v2972, %v2976
    %vm2978 = vweird.f32 %v2947
    %vm2979 = vweird.f32 %v2972
    %vm2980 = vmor %vm2978, %vm2979
    %v2981 = vsel %vm2980, %v2972, %v2977
    %v2982 = vrsqrt.pop %v2948
    %v2983 = vmul.f32 %v2982, %v2948
    %v2984 = vmul.f32 %v2983, %v2982
    %v2985 = vmul.f32 0.5, %v2984
    %v2986 = vsub.f32 1.5, %v2985
    %v2987 = vmul.f32 %v2982, %v2986
    %vm2988 = vweird.f32 %v2948
    %vm2989 = vweird.f32 %v2982
    %vm2990 = vmor %vm2988, %vm2989
    %v2991 = vsel %vm2990, %v2982, %v2987
    %v2992 = vrsqrt.pop %v2949
    %v2993 = vmul.f32 %v2992, %v2949
    %v2994 = vmul.f32 %v2993, %v2992
    %v2995 = vmul.f32 0.5, %v2994
    %v2996 = vsub.f32 1.5, %v2995
    %v2997 = vmul.f32 %v2992, %v2996
    %vm2998 = vweird.f32 %v2949
    %vm2999 = vweird.f32 %v2992
    %vm3000 = vmor %vm2998, %vm2999
    %v3001 = vsel %vm3000, %v2992, %v2997
    %v3002 = vrsqrt.pop %v2950
    %v3003 = vmul.f32 %v3002, %v2950
    %v3004 = vmul.f32 %v3003, %v3002
    %v3005 = vmul.f32 0.5, %v3004
    %v3006 = vsub.f32 1.5, %v3005
    %v3007 = vmul.f32 %v3002, %v3006
    %vm3008 = vweird.f32 %v2950
    %vm3009 = vweird.f32 %v3002
    %vm3010 = vmor %vm3008, %vm3009
    %v3011 = vsel %vm3010, %v3002, %v3007
    %v3012 = vrsqrt.pop %v2951
    %v3013 = vmul.f32 %v3012, %v2951
    %v3014 = vmul.f32 %v3013, %v3012
    %v3015 = vmul.f32 0.5, %v3014
    %v3016 = vsub.f32 1.5, %v3015
    %v3017 = vmul.f32 %v3012, %v3016
    %vm3018 = vweird.f32 %v2951
    %vm3019 = vweird.f32 %v3012
    %vm3020 = vmor %vm3018, %vm3019
    %v3021 = vsel %vm3020, %v3012, %v3017
    %v3022 = vrsqrt.pop %v2952
    %v3023 = vmul.f32 %v3022, %v2952
    %v3024 = vmul.f32 %v3023, %v3022
    %v3025 = vmul.f32 0.5, %v3024
    %v3026 = vsub.f32 1.5, %v3025
    %v3027 = vmul.f32 %v3022, %v3026
    %vm3028 = vweird.f32 %v2952
    %vm3029 = vweird.f32 %v3022
    %vm3030 = vmor %vm3028, %vm3029
    %v3031 = vsel %vm3030, %v3022, %v3027
    %v3032 = vrsqrt.pop %v2953
    %v3033 = vmul.f32 %v3032, %v2953
    %v3034 = vmul.f32 %v3033, %v3032
    %v3035 = vmul.f32 0.5, %v3034
    %v3036 = vsub.f32 1.5, %v3035
    %v3037 = vmul.f32 %v3032, %v3036
    %vm3038 = vweird.f32 %v2953
    %vm3039 = vweird.f32 %v3032
    %vm3040 = vmor %vm3038, %vm3039
    %v3041 = vsel %vm3040, %v3032, %v3037
    %v3042 = vrsqrt.pop %v2954
    %v3043 = vmul.f32 %v3042, %v2954
    %v3044 = vmul.f32 %v3043, %v3042
    %v3045 = vmul.f32 0.5, %v3044
    %v3046 = vsub.f32 1.5, %v3045
    %v3047 = vmul.f32 %v3042, %v3046
    %vm3048 = vweird.f32 %v2954
    %vm3049 = vweird.f32 %v3042
    %vm3050 = vmor %vm3048, %vm3049
    %v3051 = vsel %vm3050, %v3042, %v3047
    %v3052 = vrsqrt.pop %v2955
    %v3053 = vmul.f32 %v3052, %v2955
    %v3054 = vmul.f32 %v3053, %v3052
    %v3055 = vmul.f32 0.5, %v3054
    %v3056 = vsub.f32 1.5, %v3055
    %v3057 = vmul.f32 %v3052, %v3056
    %vm3058 = vweird.f32 %v2955
    %vm3059 = vweird.f32 %v3052
    %vm3060 = vmor %vm3058, %vm3059
    %v3061 = vsel %vm3060, %v3052, %v3057
    %v3062 = vrsqrt.pop %v2956
    %v3063 = vmul.f32 %v3062, %v2956
    %v3064 = vmul.f32 %v3063, %v3062
    %v3065 = vmul.f32 0.5, %v3064
    %v3066 = vsub.f32 1.5, %v3065
    %v3067 = vmul.f32 %v3062, %v3066
    %vm3068 = vweird.f32 %v2956
    %vm3069 = vweird.f32 %v3062
    %vm3070 = vmor %vm3068, %vm3069
    %v3071 = vsel %vm3070, %v3062, %v3067
    %v3072 = vrsqrt.pop %v2957
    %v3073 = vmul.f32 %v3072, %v2957
    %v3074 = vmul.f32 %v3073, %v3072
    %v3075 = vmul.f32 0.5, %v3074
    %v3076 = vsub.f32 1.5, %v3075
    %v3077 = vmul.f32 %v3072, %v3076
    %vm3078 = vweird.f32 %v2957
    %vm3079 = vweird.f32 %v3072
    %vm3080 = vmor %vm3078, %vm3079
    %v3081 = vsel %vm3080, %v3072, %v3077
    %v3082 = vrsqrt.pop %v2958
    %v3083 = vmul.f32 %v3082, %v2958
    %v3084 = vmul.f32 %v3083, %v3082
    %v3085 = vmul.f32 0.5, %v3084
    %v3086 = vsub.f32 1.5, %v3085
    %v3087 = vmul.f32 %v3082, %v3086
    %vm3088 = vweird.f32 %v2958
    %vm3089 = vweird.f32 %v3082
    %vm3090 = vmor %vm3088, %vm3089
    %v3091 = vsel %vm3090, %v3082, %v3087
    %v3092 = vrsqrt.pop %v2959
    %v3093 = vmul.f32 %v3092, %v2959
    %v3094 = vmul.f32 %v3093, %v3092
    %v3095 = vmul.f32 0.5, %v3094
    %v3096 = vsub.f32 1.5, %v3095
    %v3097 = vmul.f32 %v3092, %v3096
    %vm3098 = vweird.f32 %v2959
    %vm3099 = vweird.f32 %v3092
    %vm3100 = vmor %vm3098, %vm3099
    %v3101 = vsel %vm3100, %v3092, %v3097
    %v3102 = vrsqrt.pop %v2960
    %v3103 = vmul.f32 %v3102, %v2960
    %v3104 = vmul.f32 %v3103, %v3102
    %v3105 = vmul.f32 0.5, %v3104
    %v3106 = vsub.f32 1.5, %v3105
    %v3107 = vmul.f32 %v3102, %v3106
    %vm3108 = vweird.f32 %v2960
    %vm3109 = vweird.f32 %v3102
    %vm3110 = vmor %vm3108, %vm3109
    %v3111 = vsel %vm3110, %v3102, %v3107
    %v3112 = vrsqrt.pop %v2961
    %v3113 = vmul.f32 %v3112, %v2961
    %v3114 = vmul.f32 %v3113, %v3112
    %v3115 = vmul.f32 0.5, %v3114
    %v3116 = vsub.f32 1.5, %v3115
    %v3117 = vmul.f32 %v3112, %v3116
    %vm3118 = vweird.f32 %v2961
    %vm3119 = vweird.f32 %v3112
    %vm3120 = vmor %vm3118, %vm3119
    %v3121 = vsel %vm3120, %v3112, %v3117
    %v3122 = vmul.f32 %v2882, %v2971
    %v3123 = vmul.f32 %v2883, %v2981
    %v3124 = vmul.f32 %v2884, %v2991
    %v3125 = vmul.f32 %v2885, %v3001
    %v3126 = vmul.f32 %v2886, %v3011
    %v3127 = vmul.f32 %v2887, %v3021
    %v3128 = vmul.f32 %v2888, %v3031
    %v3129 = vmul.f32 %v2889, %v3041
    %v3130 = vmul.f32 %v2890, %v3051
    %v3131 = vmul.f32 %v2891, %v3061
    %v3132 = vmul.f32 %v2892, %v3071
    %v3133 = vmul.f32 %v2893, %v3081
    %v3134 = vmul.f32 %v2894, %v3091
    %v3135 = vmul.f32 %v2895, %v3101
    %v3136 = vmul.f32 %v2896, %v3111
    %v3137 = vmul.f32 %v2897, %v3121
    %v3138 = vmax.f32 %v2882, 0.0
    %v3139 = vmax.f32 %v2883, 0.0
    %v3140 = vmax.f32 %v2884, 0.0
    %v3141 = vmax.f32 %v2885, 0.0
    %v3142 = vmax.f32 %v2886, 0.0
    %v3143 = vmax.f32 %v2887, 0.0
    %v3144 = vmax.f32 %v2888, 0.0
    %v3145 = vmax.f32 %v2889, 0.0
    %v3146 = vmax.f32 %v2890, 0.0
    %v3147 = vmax.f32 %v2891, 0.0
    %v3148 = vmax.f32 %v2892, 0.0
    %v3149 = vmax.f32 %v2893, 0.0
    %v3150 = vmax.f32 %v2894, 0.0
    %v3151 = vmax.f32 %v2895, 0.0
    %v3152 = vmax.f32 %v2896, 0.0
    %v3153 = vmax.f32 %v2897, 0.0
    %v3154 = vld [vmem:[%s10] sm:$0x1]
    %v3156 = vperm.slane %v3154, 0
    %v3158 = vmul.f32 %v3138, %v3156
    %v3159 = vmul.f32 %v3139, %v3156
    %v3160 = vmul.f32 %v3140, %v3156
    %v3161 = vmul.f32 %v3141, %v3156
    %v3162 = vmul.f32 %v3142, %v3156
    %v3163 = vmul.f32 %v3143, %v3156
    %v3164 = vmul.f32 %v3144, %v3156
    %v3165 = vmul.f32 %v3145, %v3156
    %v3166 = vmul.f32 %v3146, %v3156
    %v3167 = vmul.f32 %v3147, %v3156
    %v3168 = vmul.f32 %v3148, %v3156
    %v3169 = vmul.f32 %v3149, %v3156
    %v3170 = vmul.f32 %v3150, %v3156
    %v3171 = vmul.f32 %v3151, %v3156
    %v3172 = vmul.f32 %v3152, %v3156
    %v3173 = vmul.f32 %v3153, %v3156
    %3174 = vadd.xlane.f32.xlu0 %v3158
    %v3175 = vpop.xlane.xlu0 %3174
    %3176 = vadd.xlane.f32.xlu0 %v3159
    %v3177 = vpop.xlane.xlu0 %3176
    %3178 = vadd.xlane.f32.xlu0 %v3160
    %v3179 = vpop.xlane.xlu0 %3178
    %3180 = vadd.xlane.f32.xlu0 %v3161
    %v3181 = vpop.xlane.xlu0 %3180
    %3182 = vadd.xlane.f32.xlu0 %v3162
    %v3183 = vpop.xlane.xlu0 %3182
    %3184 = vadd.xlane.f32.xlu0 %v3163
    %v3185 = vpop.xlane.xlu0 %3184
    %3186 = vadd.xlane.f32.xlu0 %v3164
    %v3187 = vpop.xlane.xlu0 %3186
    %3188 = vadd.xlane.f32.xlu0 %v3165
    %v3189 = vpop.xlane.xlu0 %3188
    %3190 = vadd.xlane.f32.xlu0 %v3166
    %v3191 = vpop.xlane.xlu0 %3190
    %3192 = vadd.xlane.f32.xlu0 %v3167
    %v3193 = vpop.xlane.xlu0 %3192
    %3194 = vadd.xlane.f32.xlu0 %v3168
    %v3195 = vpop.xlane.xlu0 %3194
    %3196 = vadd.xlane.f32.xlu0 %v3169
    %v3197 = vpop.xlane.xlu0 %3196
    %3198 = vadd.xlane.f32.xlu0 %v3170
    %v3199 = vpop.xlane.xlu0 %3198
    %3200 = vadd.xlane.f32.xlu0 %v3171
    %v3201 = vpop.xlane.xlu0 %3200
    %3202 = vadd.xlane.f32.xlu0 %v3172
    %v3203 = vpop.xlane.xlu0 %3202
    %3204 = vadd.xlane.f32.xlu0 %v3173
    %v3205 = vpop.xlane.xlu0 %3204
    %v3206 = vld [vmem:[#allocation3] sm:$0x1]
    %v3208 = vperm.slane %v3206, 0
    %v3210 = vadd.f32 %v3175, %v3208
    %v3211 = vadd.f32 %v3177, %v3208
    %v3212 = vadd.f32 %v3179, %v3208
    %v3213 = vadd.f32 %v3181, %v3208
    %v3214 = vadd.f32 %v3183, %v3208
    %v3215 = vadd.f32 %v3185, %v3208
    %v3216 = vadd.f32 %v3187, %v3208
    %v3217 = vadd.f32 %v3189, %v3208
    %v3218 = vadd.f32 %v3191, %v3208
    %v3219 = vadd.f32 %v3193, %v3208
    %v3220 = vadd.f32 %v3195, %v3208
    %v3221 = vadd.f32 %v3197, %v3208
    %v3222 = vadd.f32 %v3199, %v3208
    %v3223 = vadd.f32 %v3201, %v3208
    %v3224 = vadd.f32 %v3203, %v3208
    %v3225 = vadd.f32 %v3205, %v3208
    %vm3226 = vcmp.gt.f32.partialorder %v3210, 20.0
    %vm3227 = vcmp.gt.f32.partialorder %v3211, 20.0
    %vm3228 = vcmp.gt.f32.partialorder %v3212, 20.0
    %vm3229 = vcmp.gt.f32.partialorder %v3213, 20.0
    %vm3230 = vcmp.gt.f32.partialorder %v3214, 20.0
    %vm3231 = vcmp.gt.f32.partialorder %v3215, 20.0
    %vm3232 = vcmp.gt.f32.partialorder %v3216, 20.0
    %vm3233 = vcmp.gt.f32.partialorder %v3217, 20.0
    %vm3234 = vcmp.gt.f32.partialorder %v3218, 20.0
    %vm3235 = vcmp.gt.f32.partialorder %v3219, 20.0
    %vm3236 = vcmp.gt.f32.partialorder %v3220, 20.0
    %vm3237 = vcmp.gt.f32.partialorder %v3221, 20.0
    %vm3238 = vcmp.gt.f32.partialorder %v3222, 20.0
    %vm3239 = vcmp.gt.f32.partialorder %v3223, 20.0
    %vm3240 = vcmp.gt.f32.partialorder %v3224, 20.0
    %vm3241 = vcmp.gt.f32.partialorder %v3225, 20.0
    %v3242 = vmin.f32 %v3210, 20.0
    %v3243 = vmin.f32 %v3211, 20.0
    %v3244 = vmin.f32 %v3212, 20.0
    %v3245 = vmin.f32 %v3213, 20.0
    %v3246 = vmin.f32 %v3214, 20.0
    %v3247 = vmin.f32 %v3215, 20.0
    %v3248 = vmin.f32 %v3216, 20.0
    %v3249 = vmin.f32 %v3217, 20.0
    %v3250 = vmin.f32 %v3218, 20.0
    %v3251 = vmin.f32 %v3219, 20.0
    %v3252 = vmin.f32 %v3220, 20.0
    %v3253 = vmin.f32 %v3221, 20.0
    %v3254 = vmin.f32 %v3222, 20.0
    %v3255 = vmin.f32 %v3223, 20.0
    %v3256 = vmin.f32 %v3224, 20.0
    %v3257 = vmin.f32 %v3225, 20.0
    %v3258 = vmul.f32 %v3242, 1.442695
    %v3259 = vpow.pop %v3258
    %v3260 = vmul.f32 %v3243, 1.442695
    %v3261 = vpow.pop %v3260
    %v3262 = vmul.f32 %v3244, 1.442695
    %v3263 = vpow.pop %v3262
    %v3264 = vmul.f32 %v3245, 1.442695
    %v3265 = vpow.pop %v3264
    %v3266 = vmul.f32 %v3246, 1.442695
    %v3267 = vpow.pop %v3266
    %v3268 = vmul.f32 %v3247, 1.442695
    %v3269 = vpow.pop %v3268
    %v3270 = vmul.f32 %v3248, 1.442695
    %v3271 = vpow.pop %v3270
    %v3272 = vmul.f32 %v3249, 1.442695
    %v3273 = vpow.pop %v3272
    %v3274 = vmul.f32 %v3250, 1.442695
    %v3275 = vpow.pop %v3274
    %v3276 = vmul.f32 %v3251, 1.442695
    %v3277 = vpow.pop %v3276
    %v3278 = vmul.f32 %v3252, 1.442695
    %v3279 = vpow.pop %v3278
    %v3280 = vmul.f32 %v3253, 1.442695
    %v3281 = vpow.pop %v3280
    %v3282 = vmul.f32 %v3254, 1.442695
    %v3283 = vpow.pop %v3282
    %v3284 = vmul.f32 %v3255, 1.442695
    %v3285 = vpow.pop %v3284
    %v3286 = vmul.f32 %v3256, 1.442695
    %v3287 = vpow.pop %v3286
    %v3288 = vmul.f32 %v3257, 1.442695
    %v3289 = vpow.pop %v3288
    %v3290 = vadd.f32 %v3259, 1.0
    %v3291 = vadd.f32 %v3261, 1.0
    %v3292 = vadd.f32 %v3263, 1.0
    %v3293 = vadd.f32 %v3265, 1.0
    %v3294 = vadd.f32 %v3267, 1.0
    %v3295 = vadd.f32 %v3269, 1.0
    %v3296 = vadd.f32 %v3271, 1.0
    %v3297 = vadd.f32 %v3273, 1.0
    %v3298 = vadd.f32 %v3275, 1.0
    %v3299 = vadd.f32 %v3277, 1.0
    %v3300 = vadd.f32 %v3279, 1.0
    %v3301 = vadd.f32 %v3281, 1.0
    %v3302 = vadd.f32 %v3283, 1.0
    %v3303 = vadd.f32 %v3285, 1.0
    %v3304 = vadd.f32 %v3287, 1.0
    %v3305 = vadd.f32 %v3289, 1.0
    %v3306 = vlog2.pop %v3290
    %v3307 = vmul.f32 %v3306, 0.6931472
    %v3308 = vlog2.pop %v3291
    %v3309 = vmul.f32 %v3308, 0.6931472
    %v3310 = vlog2.pop %v3292
    %v3311 = vmul.f32 %v3310, 0.6931472
    %v3312 = vlog2.pop %v3293
    %v3313 = vmul.f32 %v3312, 0.6931472
    %v3314 = vlog2.pop %v3294
    %v3315 = vmul.f32 %v3314, 0.6931472
    %v3316 = vlog2.pop %v3295
    %v3317 = vmul.f32 %v3316, 0.6931472
    %v3318 = vlog2.pop %v3296
    %v3319 = vmul.f32 %v3318, 0.6931472
    %v3320 = vlog2.pop %v3297
    %v3321 = vmul.f32 %v3320, 0.6931472
    %v3322 = vlog2.pop %v3298
    %v3323 = vmul.f32 %v3322, 0.6931472
    %v3324 = vlog2.pop %v3299
    %v3325 = vmul.f32 %v3324, 0.6931472
    %v3326 = vlog2.pop %v3300
    %v3327 = vmul.f32 %v3326, 0.6931472
    %v3328 = vlog2.pop %v3301
    %v3329 = vmul.f32 %v3328, 0.6931472
    %v3330 = vlog2.pop %v3302
    %v3331 = vmul.f32 %v3330, 0.6931472
    %v3332 = vlog2.pop %v3303
    %v3333 = vmul.f32 %v3332, 0.6931472
    %v3334 = vlog2.pop %v3304
    %v3335 = vmul.f32 %v3334, 0.6931472
    %v3336 = vlog2.pop %v3305
    %v3337 = vmul.f32 %v3336, 0.6931472
    %v3338 = vsel %vm3226, %v3210, %v3307
    %v3339 = vsel %vm3227, %v3211, %v3309
    %v3340 = vsel %vm3228, %v3212, %v3311
    %v3341 = vsel %vm3229, %v3213, %v3313
    %v3342 = vsel %vm3230, %v3214, %v3315
    %v3343 = vsel %vm3231, %v3215, %v3317
    %v3344 = vsel %vm3232, %v3216, %v3319
    %v3345 = vsel %vm3233, %v3217, %v3321
    %v3346 = vsel %vm3234, %v3218, %v3323
    %v3347 = vsel %vm3235, %v3219, %v3325
    %v3348 = vsel %vm3236, %v3220, %v3327
    %v3349 = vsel %vm3237, %v3221, %v3329
    %v3350 = vsel %vm3238, %v3222, %v3331
    %v3351 = vsel %vm3239, %v3223, %v3333
    %v3352 = vsel %vm3240, %v3224, %v3335
    %v3353 = vsel %vm3241, %v3225, %v3337
    %3355 = vset.pattern.permute.xlu0 0
    %3356 = vperm.xlu0 %3355, %v3338
    %v3357 = vpop.permute.xlu0 %3356
    %3360 = vset.pattern.permute.xlu0 0
    %3361 = vperm.xlu0 %3360, %v3339
    %v3362 = vpop.permute.xlu0 %3361
    %3365 = vset.pattern.permute.xlu0 0
    %3366 = vperm.xlu0 %3365, %v3340
    %v3367 = vpop.permute.xlu0 %3366
    %3370 = vset.pattern.permute.xlu0 0
    %3371 = vperm.xlu0 %3370, %v3341
    %v3372 = vpop.permute.xlu0 %3371
    %3375 = vset.pattern.permute.xlu0 0
    %3376 = vperm.xlu0 %3375, %v3342
    %v3377 = vpop.permute.xlu0 %3376
    %3380 = vset.pattern.permute.xlu0 0
    %3381 = vperm.xlu0 %3380, %v3343
    %v3382 = vpop.permute.xlu0 %3381
    %3385 = vset.pattern.permute.xlu0 0
    %3386 = vperm.xlu0 %3385, %v3344
    %v3387 = vpop.permute.xlu0 %3386
    %3390 = vset.pattern.permute.xlu0 0
    %3391 = vperm.xlu0 %3390, %v3345
    %v3392 = vpop.permute.xlu0 %3391
    %3395 = vset.pattern.permute.xlu0 0
    %3396 = vperm.xlu0 %3395, %v3346
    %v3397 = vpop.permute.xlu0 %3396
    %3400 = vset.pattern.permute.xlu0 0
    %3401 = vperm.xlu0 %3400, %v3347
    %v3402 = vpop.permute.xlu0 %3401
    %3405 = vset.pattern.permute.xlu0 0
    %3406 = vperm.xlu0 %3405, %v3348
    %v3407 = vpop.permute.xlu0 %3406
    %3410 = vset.pattern.permute.xlu0 0
    %3411 = vperm.xlu0 %3410, %v3349
    %v3412 = vpop.permute.xlu0 %3411
    %3415 = vset.pattern.permute.xlu0 0
    %3416 = vperm.xlu0 %3415, %v3350
    %v3417 = vpop.permute.xlu0 %3416
    %3420 = vset.pattern.permute.xlu0 0
    %3421 = vperm.xlu0 %3420, %v3351
    %v3422 = vpop.permute.xlu0 %3421
    %3425 = vset.pattern.permute.xlu0 0
    %3426 = vperm.xlu0 %3425, %v3352
    %v3427 = vpop.permute.xlu0 %3426
    %3430 = vset.pattern.permute.xlu0 0
    %3431 = vperm.xlu0 %3430, %v3353
    %v3432 = vpop.permute.xlu0 %3431
    %v3434 = vmul.f32 %v3357, %v3122
    %v3435 = vmul.f32 %v3362, %v3123
    %v3436 = vmul.f32 %v3367, %v3124
    %v3437 = vmul.f32 %v3372, %v3125
    %v3438 = vmul.f32 %v3377, %v3126
    %v3439 = vmul.f32 %v3382, %v3127
    %v3440 = vmul.f32 %v3387, %v3128
    %v3441 = vmul.f32 %v3392, %v3129
    %v3442 = vmul.f32 %v3397, %v3130
    %v3443 = vmul.f32 %v3402, %v3131
    %v3444 = vmul.f32 %v3407, %v3132
    %v3445 = vmul.f32 %v3412, %v3133
    %v3446 = vmul.f32 %v3417, %v3134
    %v3447 = vmul.f32 %v3422, %v3135
    %v3448 = vmul.f32 %v3427, %v3136
    %v3449 = vmul.f32 %v3432, %v3137
    %v3450 = vld [vmem:[%s1] sm:$0xff]
    %v3451 = vld [vmem:[%s1 + $0x8] sm:$0xff]
    %v3452 = vld [vmem:[%s1 + $0x10] sm:$0xff]
    %v3453 = vld [vmem:[%s1 + $0x18] sm:$0xff]
    %v3454 = vld [vmem:[%s12] sm:$0xff]
    %v3455 = vld [vmem:[%s12 + $0x8] sm:$0xff]
    %v3456 = vld [vmem:[%s12 + $0x10] sm:$0xff]
    %v3457 = vld [vmem:[%s12 + $0x18] sm:$0xff]
    %v3458 = vld [vmem:[%s13] sm:$0x1]
    %v3460 = vperm.slane %v3458, 0
    %v3463 = vsel %vm681, %v3450, 0
    %v3466 = vsel %vm681, %v3451, 0
    %v3469 = vsel %vm681, %v3452, 0
    %v3472 = vsel %vm681, %v3453, 0
    %3474 = vmatpush.msra.mxu0 0.0
    %3475 = vmatpush.msra.mxu0 0.0
    %3476 = vmatpush.msra.mxu0 0.0
    %3477 = vmatpush.msra.mxu0 0.0
    %3478 = vmatpush.msra.mxu0 0.0
    %3479 = vmatpush.msra.mxu0 0.0
    %3480 = vmatpush.msra.mxu0 0.0
    %3481 = vmatpush.msra.mxu0 0.0
    %3482 = vmatpush.msra.mxu0 0.0
    %3483 = vmatpush.msra.mxu0 0.0
    %3484 = vmatpush.msra.mxu0 0.0
    %3485 = vmatpush.msra.mxu0 0.0
    %3486 = vmatpush.msra.mxu0 %v3457
    %3487 = vmatpush.msra.mxu0 %v3456
    %3488 = vmatpush.msra.mxu0 %v3455
    %3489 = vmatpush.msra.mxu0 %v3454
    %3490 = vmatmul.f32.gmra.mxu0 %v3463
    %v3491 = vpop.f32.mrf.mxu0
    %v3492 = vadd.f32 %v3460, %v3491
    %3493 = vmatmul.f32.gmra.mxu0 %v3466
    %v3494 = vpop.f32.mrf.mxu0
    %v3495 = vadd.f32 %v3460, %v3494
    %3496 = vmatmul.f32.gmra.mxu0 %v3469
    %v3497 = vpop.f32.mrf.mxu0
    %v3498 = vadd.f32 %v3460, %v3497
    %3499 = vmatmul.f32.gmra.mxu0 %v3472
    %v3500 = vpop.f32.mrf.mxu0
    %v3501 = vadd.f32 %v3460, %v3500
    %3502 = vdwg.mxu0
    %v3503 = vld [vmem:[%s16] sm:$0x1]
    %v3505 = vperm.slane %v3503, 0
    %v3507 = vsub.f32 %v3492, %v3505
    %v3508 = vsub.f32 %v3495, %v3505
    %v3509 = vsub.f32 %v3498, %v3505
    %v3510 = vsub.f32 %v3501, %v3505
    %v3511 = vld [vmem:[%s17] sm:$0x1]
    %v3512 = vadd.f32 %v3511, 0.001
    %v3513 = vrsqrt.pop %v3512
    %v3514 = vmul.f32 %v3513, %v3512
    %v3515 = vmul.f32 %v3514, %v3513
    %v3516 = vmul.f32 0.5, %v3515
    %v3517 = vsub.f32 1.5, %v3516
    %v3518 = vmul.f32 %v3513, %v3517
    %vm3519 = vweird.f32 %v3512
    %vm3520 = vweird.f32 %v3513
    %vm3521 = vmor %vm3519, %vm3520
    %v3522 = vsel %vm3521, %v3513, %v3518
    %v3524 = vperm.slane %v3522, 0
    %v3526 = vmul.f32 %v3507, %v3524
    %v3527 = vmul.f32 %v3508, %v3524
    %v3528 = vmul.f32 %v3509, %v3524
    %v3529 = vmul.f32 %v3510, %v3524
    %v3530 = vld [vmem:[%s14] sm:$0x1]
    %v3532 = vperm.slane %v3530, 0
    %v3534 = vmul.f32 %v3526, %v3532
    %v3535 = vmul.f32 %v3527, %v3532
    %v3536 = vmul.f32 %v3528, %v3532
    %v3537 = vmul.f32 %v3529, %v3532
    %v3538 = vld [vmem:[%s15] sm:$0x1]
    %v3540 = vperm.slane %v3538, 0
    %v3542 = vadd.f32 %v3534, %v3540
    %v3543 = vadd.f32 %v3535, %v3540
    %v3544 = vadd.f32 %v3536, %v3540
    %v3545 = vadd.f32 %v3537, %v3540
    %v3546 = vxor.u32 %v3542, 2147483648
    %v3547 = vxor.u32 %v3543, 2147483648
    %v3548 = vxor.u32 %v3544, 2147483648
    %v3549 = vxor.u32 %v3545, 2147483648
    %v3550 = vmul.f32 %v3546, 1.442695
    %v3551 = vpow.pop %v3550
    %v3552 = vmul.f32 %v3547, 1.442695
    %v3553 = vpow.pop %v3552
    %v3554 = vmul.f32 %v3548, 1.442695
    %v3555 = vpow.pop %v3554
    %v3556 = vmul.f32 %v3549, 1.442695
    %v3557 = vpow.pop %v3556
    %v3558 = vadd.f32 %v3551, 1.0
    %v3559 = vadd.f32 %v3553, 1.0
    %v3560 = vadd.f32 %v3555, 1.0
    %v3561 = vadd.f32 %v3557, 1.0
    %v3562 = vrcp.pop %v3558
    %v3563 = vmul.f32 %v3558, %v3562
    %v3564 = vsub.f32 1.0, %v3563
    %v3565 = vmul.f32 %v3562, %v3564
    %v3566 = vadd.f32 %v3562, %v3565
    %vm3567 = vweird.f32 %v3558
    %vm3568 = vweird.f32 %v3562
    %vm3569 = vmor %vm3567, %vm3568
    %v3570 = vsel %vm3569, %v3562, %v3566
    %v3571 = vand.u32 2147483647, %v3558
    %vm3572 = vcmp.eq.f32.partialorder %v3571, 8.507059e+37
    %v3573 = vand.u32 %v3558, 2147483648
    %v3574 = vor.u32 1.1754944e-38, %v3573
    %v3575 = vsel %vm3572, %v3574, %v3570
    %v3576 = vmul.f32 1.0, %v3575
    %v3577 = vrcp.pop %v3559
    %v3578 = vmul.f32 %v3559, %v3577
    %v3579 = vsub.f32 1.0, %v3578
    %v3580 = vmul.f32 %v3577, %v3579
    %v3581 = vadd.f32 %v3577, %v3580
    %vm3582 = vweird.f32 %v3559
    %vm3583 = vweird.f32 %v3577
    %vm3584 = vmor %vm3582, %vm3583
    %v3585 = vsel %vm3584, %v3577, %v3581
    %v3586 = vand.u32 2147483647, %v3559
    %vm3587 = vcmp.eq.f32.partialorder %v3586, 8.507059e+37
    %v3588 = vand.u32 %v3559, 2147483648
    %v3589 = vor.u32 1.1754944e-38, %v3588
    %v3590 = vsel %vm3587, %v3589, %v3585
    %v3591 = vmul.f32 1.0, %v3590
    %v3592 = vrcp.pop %v3560
    %v3593 = vmul.f32 %v3560, %v3592
    %v3594 = vsub.f32 1.0, %v3593
    %v3595 = vmul.f32 %v3592, %v3594
    %v3596 = vadd.f32 %v3592, %v3595
    %vm3597 = vweird.f32 %v3560
    %vm3598 = vweird.f32 %v3592
    %vm3599 = vmor %vm3597, %vm3598
    %v3600 = vsel %vm3599, %v3592, %v3596
    %v3601 = vand.u32 2147483647, %v3560
    %vm3602 = vcmp.eq.f32.partialorder %v3601, 8.507059e+37
    %v3603 = vand.u32 %v3560, 2147483648
    %v3604 = vor.u32 1.1754944e-38, %v3603
    %v3605 = vsel %vm3602, %v3604, %v3600
    %v3606 = vmul.f32 1.0, %v3605
    %v3607 = vrcp.pop %v3561
    %v3608 = vmul.f32 %v3561, %v3607
    %v3609 = vsub.f32 1.0, %v3608
    %v3610 = vmul.f32 %v3607, %v3609
    %v3611 = vadd.f32 %v3607, %v3610
    %vm3612 = vweird.f32 %v3561
    %vm3613 = vweird.f32 %v3607
    %vm3614 = vmor %vm3612, %vm3613
    %v3615 = vsel %vm3614, %v3607, %v3611
    %v3616 = vand.u32 2147483647, %v3561
    %vm3617 = vcmp.eq.f32.partialorder %v3616, 8.507059e+37
    %v3618 = vand.u32 %v3561, 2147483648
    %v3619 = vor.u32 1.1754944e-38, %v3618
    %v3620 = vsel %vm3617, %v3619, %v3615
    %v3621 = vmul.f32 1.0, %v3620
    %v3622 = vmul.f32 %v3542, %v3576
    %v3623 = vmul.f32 %v3543, %v3591
    %v3624 = vmul.f32 %v3544, %v3606
    %v3625 = vmul.f32 %v3545, %v3621
    %v3626 = vmax.f32 %v3622, 1e-06
    %v3627 = vmax.f32 %v3623, 1e-06
    %v3628 = vmax.f32 %v3624, 1e-06
    %v3629 = vmax.f32 %v3625, 1e-06
    %v3630 = vmul.f32 %v3626, %v3626
    %v3631 = vmul.f32 %v3627, %v3627
    %v3632 = vmul.f32 %v3628, %v3628
    %v3633 = vmul.f32 %v3629, %v3629
    %v3634 = vmul.f32 %v3630, %v3626
    %v3635 = vmul.f32 %v3631, %v3627
    %v3636 = vmul.f32 %v3632, %v3628
    %v3637 = vmul.f32 %v3633, %v3629
    %v3638 = vadd.f32 %v3634, %v3635
    %v3639 = vrot.slane %v3638, 4
    %v3640 = vadd.f32 %v3638, %v3639
    %v3641 = vrot.slane %v3640, 2
    %v3642 = vadd.f32 %v3640, %v3641
    %v3643 = vrot.slane %v3642, 1
    %v3644 = vadd.f32 %v3642, %v3643
    %v3645 = vrcp.pop 16.0
    %v3646 = vmul.f32 16.0, %v3645
    %v3647 = vsub.f32 1.0, %v3646
    %v3648 = vmul.f32 %v3645, %v3647
    %v3649 = vadd.f32 %v3645, %v3648
    %vm3650 = vweird.f32 %v3645
    %v3651 = vsel %vm3650, %v3645, %v3649
    %v3652 = vmul.f32 %v3644, %v3651
    %v3653 = vlog2.pop %v3652
    %v3654 = vmul.f32 %v3653, 0.6931472
    %v3655 = vrcp.pop 3.0
    %v3656 = vmul.f32 3.0, %v3655
    %v3657 = vsub.f32 1.0, %v3656
    %v3658 = vmul.f32 %v3655, %v3657
    %v3659 = vadd.f32 %v3655, %v3658
    %vm3660 = vweird.f32 %v3655
    %v3661 = vsel %vm3660, %v3655, %v3659
    %v3662 = vmul.f32 %v3654, %v3661
    %v3663 = vmul.f32 %v3662, 1.442695
    %v3664 = vpow.pop %v3663
    %v3665 = vmul.f32 %v3434, %v3664
    %v3666 = vmul.f32 %v3435, %v3664
    %v3667 = vmul.f32 %v3436, %v3664
    %v3668 = vmul.f32 %v3437, %v3664
    %v3669 = vmul.f32 %v3438, %v3664
    %v3670 = vmul.f32 %v3439, %v3664
    %v3671 = vmul.f32 %v3440, %v3664
    %v3672 = vmul.f32 %v3441, %v3664
    %3673 = vadd.xlane.f32.xlu0 %v3665
    %v3674 = vpop.xlane.xlu0 %3673
    %3675 = vadd.xlane.f32.xlu0 %v3666
    %v3676 = vpop.xlane.xlu0 %3675
    %3677 = vadd.xlane.f32.xlu0 %v3667
    %v3678 = vpop.xlane.xlu0 %3677
    %3679 = vadd.xlane.f32.xlu0 %v3668
    %v3680 = vpop.xlane.xlu0 %3679
    %3681 = vadd.xlane.f32.xlu0 %v3669
    %v3682 = vpop.xlane.xlu0 %3681
    %3683 = vadd.xlane.f32.xlu0 %v3670
    %v3684 = vpop.xlane.xlu0 %3683
    %3685 = vadd.xlane.f32.xlu0 %v3671
    %v3686 = vpop.xlane.xlu0 %3685
    %3687 = vadd.xlane.f32.xlu0 %v3672
    %v3688 = vpop.xlane.xlu0 %3687
    %v3689 = vmul.f32 %v3664, %v3664
    %3690 = vadd.xlane.f32.xlu0 %v3689
    %v3691 = vpop.xlane.xlu0 %3690
    %v3692 = vrsqrt.pop %v3691
    %v3693 = vmul.f32 %v3692, %v3691
    %v3694 = vmul.f32 %v3693, %v3692
    %v3695 = vmul.f32 0.5, %v3694
    %v3696 = vsub.f32 1.5, %v3695
    %v3697 = vmul.f32 %v3692, %v3696
    %v3698 = vmul.f32 %v3691, %v3697
    %vm3699 = vcmp.eq.f32.partialorder %v3691, inf
    %v3700 = vsel %vm3699, %v3691, %v3698
    %vm3701 = vcmp.eq.f32.partialorder %v3691, 0.0
    %v3702 = vand.u32 %v3691, 2147483648
    %v3703 = vsel %vm3701, %v3702, %v3700
    %v3704 = vrcp.pop %v3703
    %v3705 = vmul.f32 %v3703, %v3704
    %v3706 = vsub.f32 1.0, %v3705
    %v3707 = vmul.f32 %v3704, %v3706
    %v3708 = vadd.f32 %v3704, %v3707
    %vm3709 = vweird.f32 %v3703
    %vm3710 = vweird.f32 %v3704
    %vm3711 = vmor %vm3709, %vm3710
    %v3712 = vsel %vm3711, %v3704, %v3708
    %v3713 = vand.u32 2147483647, %v3703
    %vm3714 = vcmp.eq.f32.partialorder %v3713, 8.507059e+37
    %v3715 = vand.u32 %v3703, 2147483648
    %v3716 = vor.u32 1.1754944e-38, %v3715
    %v3717 = vsel %vm3714, %v3716, %v3712
    %v3718 = vmul.f32 %v3664, %v3717
    %v3719 = vmul.f32 %v3674, %v3718
    %v3720 = vmul.f32 %v3676, %v3718
    %v3721 = vmul.f32 %v3678, %v3718
    %v3722 = vmul.f32 %v3680, %v3718
    %v3723 = vmul.f32 %v3682, %v3718
    %v3724 = vmul.f32 %v3684, %v3718
    %v3725 = vmul.f32 %v3686, %v3718
    %v3726 = vmul.f32 %v3688, %v3718
    %v3727 = vsub.f32 %v3434, %v3719
    %v3728 = vsub.f32 %v3435, %v3720
    %v3729 = vsub.f32 %v3436, %v3721
    %v3730 = vsub.f32 %v3437, %v3722
    %v3731 = vsub.f32 %v3438, %v3723
    %v3732 = vsub.f32 %v3439, %v3724
    %v3733 = vsub.f32 %v3440, %v3725
    %v3734 = vsub.f32 %v3441, %v3726
    %v3735 = vadd.f32 %v3727, %v3728
    %v3736 = vadd.f32 %v3735, %v3729
    %v3737 = vadd.f32 %v3736, %v3730
    %v3738 = vadd.f32 %v3737, %v3731
    %v3739 = vadd.f32 %v3738, %v3732
    %v3740 = vadd.f32 %v3739, %v3733
    %v3741 = vadd.f32 %v3740, %v3734
    %v3742 = vrot.slane %v3741, 4
    %v3743 = vadd.f32 %v3741, %v3742
    %v3744 = vrot.slane %v3743, 2
    %v3745 = vadd.f32 %v3743, %v3744
    %v3746 = vrot.slane %v3745, 1
    %v3747 = vadd.f32 %v3745, %v3746
    %v3748 = vrcp.pop 64.0
    %v3749 = vmul.f32 64.0, %v3748
    %v3750 = vsub.f32 1.0, %v3749
    %v3751 = vmul.f32 %v3748, %v3750
    %v3752 = vadd.f32 %v3748, %v3751
    %vm3753 = vweird.f32 %v3748
    %v3754 = vsel %vm3753, %v3748, %v3752
    %v3755 = vmul.f32 %v3747, %v3754
    %3756 = vst [vmem:[#allocation2] sm:$0x1] %v3755
    %3757 = vst [vmem:[#allocation2 + $0x2] sm:$0x1] %v3664
    %v3758 = vadd.f32 %v3636, %v3637
    %v3759 = vrot.slane %v3758, 4
    %v3760 = vadd.f32 %v3758, %v3759
    %v3761 = vrot.slane %v3760, 2
    %v3762 = vadd.f32 %v3760, %v3761
    %v3763 = vrot.slane %v3762, 1
    %v3764 = vadd.f32 %v3762, %v3763
    %v3765 = vmul.f32 %v3764, %v3651
    %v3766 = vlog2.pop %v3765
    %v3767 = vmul.f32 %v3766, 0.6931472
    %v3768 = vmul.f32 %v3767, %v3661
    %v3769 = vmul.f32 %v3768, 1.442695
    %v3770 = vpow.pop %v3769
    %v3771 = vmul.f32 %v3442, %v3770
    %v3772 = vmul.f32 %v3443, %v3770
    %v3773 = vmul.f32 %v3444, %v3770
    %v3774 = vmul.f32 %v3445, %v3770
    %v3775 = vmul.f32 %v3446, %v3770
    %v3776 = vmul.f32 %v3447, %v3770
    %v3777 = vmul.f32 %v3448, %v3770
    %v3778 = vmul.f32 %v3449, %v3770
    %3779 = vadd.xlane.f32.xlu0 %v3771
    %v3780 = vpop.xlane.xlu0 %3779
    %3781 = vadd.xlane.f32.xlu0 %v3772
    %v3782 = vpop.xlane.xlu0 %3781
    %3783 = vadd.xlane.f32.xlu0 %v3773
    %v3784 = vpop.xlane.xlu0 %3783
    %3785 = vadd.xlane.f32.xlu0 %v3774
    %v3786 = vpop.xlane.xlu0 %3785
    %3787 = vadd.xlane.f32.xlu0 %v3775
    %v3788 = vpop.xlane.xlu0 %3787
    %3789 = vadd.xlane.f32.xlu0 %v3776
    %v3790 = vpop.xlane.xlu0 %3789
    %3791 = vadd.xlane.f32.xlu0 %v3777
    %v3792 = vpop.xlane.xlu0 %3791
    %3793 = vadd.xlane.f32.xlu0 %v3778
    %v3794 = vpop.xlane.xlu0 %3793
    %v3795 = vmul.f32 %v3770, %v3770
    %3796 = vadd.xlane.f32.xlu0 %v3795
    %v3797 = vpop.xlane.xlu0 %3796
    %v3798 = vrsqrt.pop %v3797
    %v3799 = vmul.f32 %v3798, %v3797
    %v3800 = vmul.f32 %v3799, %v3798
    %v3801 = vmul.f32 0.5, %v3800
    %v3802 = vsub.f32 1.5, %v3801
    %v3803 = vmul.f32 %v3798, %v3802
    %v3804 = vmul.f32 %v3797, %v3803
    %vm3805 = vcmp.eq.f32.partialorder %v3797, inf
    %v3806 = vsel %vm3805, %v3797, %v3804
    %vm3807 = vcmp.eq.f32.partialorder %v3797, 0.0
    %v3808 = vand.u32 %v3797, 2147483648
    %v3809 = vsel %vm3807, %v3808, %v3806
    %v3810 = vrcp.pop %v3809
    %v3811 = vmul.f32 %v3809, %v3810
    %v3812 = vsub.f32 1.0, %v3811
    %v3813 = vmul.f32 %v3810, %v3812
    %v3814 = vadd.f32 %v3810, %v3813
    %vm3815 = vweird.f32 %v3809
    %vm3816 = vweird.f32 %v3810
    %vm3817 = vmor %vm3815, %vm3816
    %v3818 = vsel %vm3817, %v3810, %v3814
    %v3819 = vand.u32 2147483647, %v3809
    %vm3820 = vcmp.eq.f32.partialorder %v3819, 8.507059e+37
    %v3821 = vand.u32 %v3809, 2147483648
    %v3822 = vor.u32 1.1754944e-38, %v3821
    %v3823 = vsel %vm3820, %v3822, %v3818
    %v3824 = vmul.f32 %v3770, %v3823
    %v3825 = vmul.f32 %v3780, %v3824
    %v3826 = vmul.f32 %v3782, %v3824
    %v3827 = vmul.f32 %v3784, %v3824
    %v3828 = vmul.f32 %v3786, %v3824
    %v3829 = vmul.f32 %v3788, %v3824
    %v3830 = vmul.f32 %v3790, %v3824
    %v3831 = vmul.f32 %v3792, %v3824
    %v3832 = vmul.f32 %v3794, %v3824
    %v3833 = vsub.f32 %v3442, %v3825
    %v3834 = vsub.f32 %v3443, %v3826
    %v3835 = vsub.f32 %v3444, %v3827
    %v3836 = vsub.f32 %v3445, %v3828
    %v3837 = vsub.f32 %v3446, %v3829
    %v3838 = vsub.f32 %v3447, %v3830
    %v3839 = vsub.f32 %v3448, %v3831
    %v3840 = vsub.f32 %v3449, %v3832
    %v3841 = vadd.f32 %v3833, %v3834
    %v3842 = vadd.f32 %v3841, %v3835
    %v3843 = vadd.f32 %v3842, %v3836
    %v3844 = vadd.f32 %v3843, %v3837
    %v3845 = vadd.f32 %v3844, %v3838
    %v3846 = vadd.f32 %v3845, %v3839
    %v3847 = vadd.f32 %v3846, %v3840
    %v3848 = vrot.slane %v3847, 4
    %v3849 = vadd.f32 %v3847, %v3848
    %v3850 = vrot.slane %v3849, 2
    %v3851 = vadd.f32 %v3849, %v3850
    %v3852 = vrot.slane %v3851, 1
    %v3853 = vadd.f32 %v3851, %v3852
    %v3854 = vmul.f32 %v3853, %v3754
    %3855 = vst [vmem:[#allocation2 + $0x1] sm:$0x1] %v3854
    %3856 = vst [vmem:[#allocation2 + $0x3] sm:$0x1] %v3770
    %v3857 = vld [vmem:[#allocation2] sm:$0xf]
    %v3858 = vld [vmem:[%s18] sm:$0xff]
    %v3859 = vld [vmem:[%s18 + $0x8] sm:$0xff]
    %v3860 = vld [vmem:[%s18 + $0x10] sm:$0xff]
    %v3861 = vld [vmem:[%s18 + $0x18] sm:$0xff]
    %v3862 = vld [vmem:[%s18 + $0x20] sm:$0xff]
    %v3863 = vld [vmem:[%s18 + $0x28] sm:$0xff]
    %v3864 = vld [vmem:[%s18 + $0x30] sm:$0xff]
    %v3865 = vld [vmem:[%s18 + $0x38] sm:$0xff]
    %v3866 = vld [vmem:[%s18 + $0x40] sm:$0xff]
    %v3867 = vld [vmem:[%s18 + $0x48] sm:$0xff]
    %v3868 = vld [vmem:[%s18 + $0x50] sm:$0xff]
    %v3869 = vld [vmem:[%s18 + $0x58] sm:$0xff]
    %v3870 = vld [vmem:[%s18 + $0x60] sm:$0xff]
    %v3871 = vld [vmem:[%s18 + $0x68] sm:$0xff]
    %v3872 = vld [vmem:[%s18 + $0x70] sm:$0xff]
    %v3873 = vld [vmem:[%s18 + $0x78] sm:$0xff]
    %v3874 = vld [vmem:[%s18 + $0x80] sm:$0xff]
    %v3875 = vld [vmem:[%s18 + $0x88] sm:$0xff]
    %v3876 = vld [vmem:[%s18 + $0x90] sm:$0xff]
    %v3877 = vld [vmem:[%s18 + $0x98] sm:$0xff]
    %v3878 = vld [vmem:[%s18 + $0xa0] sm:$0xff]
    %v3879 = vld [vmem:[%s18 + $0xa8] sm:$0xff]
    %v3880 = vld [vmem:[%s18 + $0xb0] sm:$0xff]
    %v3881 = vld [vmem:[%s18 + $0xb8] sm:$0xff]
    %v3882 = vld [vmem:[%s18 + $0xc0] sm:$0xff]
    %v3883 = vld [vmem:[%s18 + $0xc8] sm:$0xff]
    %v3884 = vld [vmem:[%s18 + $0xd0] sm:$0xff]
    %v3885 = vld [vmem:[%s18 + $0xd8] sm:$0xff]
    %v3886 = vld [vmem:[%s18 + $0xe0] sm:$0xff]
    %v3887 = vld [vmem:[%s18 + $0xe8] sm:$0xff]
    %v3888 = vld [vmem:[%s18 + $0xf0] sm:$0xff]
    %v3889 = vld [vmem:[%s18 + $0xf8] sm:$0xff]
    %v3890 = vld [vmem:[%s19] sm:$0x1]
    %v3892 = vperm.slane %v3890, 0
    %3895 = vst [vmem:[#allocation1] ss:$4 sm:$0xff] %v3857
    %v3896 = vld.sshfl [vmem:[#allocation1] sm:$0xff pattern:$0x73625140]
    %v3897 = vld.sshfl [vmem:[#allocation1 + $0x8] sm:$0xff pattern:$0x73625140]
    %3900 = vmatpush.msra.mxu0 %v3873
    %3901 = vmatpush.msra.mxu0 %v3872
    %3902 = vmatpush.msra.mxu0 %v3871
    %3903 = vmatpush.msra.mxu0 %v3870
    %3904 = vmatpush.msra.mxu0 %v3869
    %3905 = vmatpush.msra.mxu0 %v3868
    %3906 = vmatpush.msra.mxu0 %v3867
    %3907 = vmatpush.msra.mxu0 %v3866
    %3908 = vmatpush.msra.mxu0 %v3865
    %3909 = vmatpush.msra.mxu0 %v3864
    %3910 = vmatpush.msra.mxu0 %v3863
    %3911 = vmatpush.msra.mxu0 %v3862
    %3912 = vmatpush.msra.mxu0 %v3861
    %3913 = vmatpush.msra.mxu0 %v3860
    %3914 = vmatpush.msra.mxu0 %v3859
    %3915 = vmatpush.msra.mxu0 %v3858
    %3916 = vmatmul.f32.gmra.mxu0 %v3896
    %v3917 = vpop.f32.mrf.mxu0
    %v3918 = vadd.f32 %v3892, %v3917
    %3919 = vdwg.mxu0
    %3920 = vmatpush.msra.mxu0 %v3889
    %3921 = vmatpush.msra.mxu0 %v3888
    %3922 = vmatpush.msra.mxu0 %v3887
    %3923 = vmatpush.msra.mxu0 %v3886
    %3924 = vmatpush.msra.mxu0 %v3885
    %3925 = vmatpush.msra.mxu0 %v3884
    %3926 = vmatpush.msra.mxu0 %v3883
    %3927 = vmatpush.msra.mxu0 %v3882
    %3928 = vmatpush.msra.mxu0 %v3881
    %3929 = vmatpush.msra.mxu0 %v3880
    %3930 = vmatpush.msra.mxu0 %v3879
    %3931 = vmatpush.msra.mxu0 %v3878
    %3932 = vmatpush.msra.mxu0 %v3877
    %3933 = vmatpush.msra.mxu0 %v3876
    %3934 = vmatpush.msra.mxu0 %v3875
    %3935 = vmatpush.msra.mxu0 %v3874
    %3936 = vmatmul.f32.gmra.mxu0 %v3897
    %v3937 = vpop.f32.mrf.mxu0
    %v3938 = vadd.f32 %v3918, %v3937
    %3939 = vdwg.mxu0
    %v3940 = vld [vmem:[%s22] sm:$0x1]
    %v3942 = vperm.slane %v3940, 0
    %v3944 = vsub.f32 %v3938, %v3942
    %v3945 = vld [vmem:[%s23] sm:$0x1]
    %v3946 = vadd.f32 %v3945, 1e-05
    %v3947 = vrsqrt.pop %v3946
    %v3948 = vmul.f32 %v3947, %v3946
    %v3949 = vmul.f32 %v3948, %v3947
    %v3950 = vmul.f32 0.5, %v3949
    %v3951 = vsub.f32 1.5, %v3950
    %v3952 = vmul.f32 %v3947, %v3951
    %vm3953 = vweird.f32 %v3946
    %vm3954 = vweird.f32 %v3947
    %vm3955 = vmor %vm3953, %vm3954
    %v3956 = vsel %vm3955, %v3947, %v3952
    %v3958 = vperm.slane %v3956, 0
    %v3960 = vmul.f32 %v3944, %v3958
    %v3961 = vld [vmem:[%s20] sm:$0x1]
    %v3963 = vperm.slane %v3961, 0
    %v3965 = vmul.f32 %v3960, %v3963
    %v3966 = vld [vmem:[%s21] sm:$0x1]
    %v3968 = vperm.slane %v3966, 0
    %v3970 = vadd.f32 %v3965, %v3968
    %vm3971 = vcmp.ge.f32.partialorder %v3970, 0.0
    %v3972 = vld [vmem:[#allocation4] sm:$0x1]
    %v3974 = vperm.slane %v3972, 0
    %3975 = vset.pattern.permute.xlu0 0
    %3976 = vperm.xlu0 %3975, %v3974
    %v3977 = vpop.permute.xlu0 %3976
    %v3979 = vmul.f32 %v3977, %v3970
    %v3980 = vsel %vm3971, %v3970, %v3979
    %vm3981 = vcmask 517120
    %3982 = vst.msk [vmem:[#allocation5] sm:$0x3] %vm3981, %v3980
    %v3983 = vmul.f32 %v3980, %v3980
    %v3984 = vsel %vm3981, %v3983, 0.0
    %3985 = vadd.xlane.f32.xlu0 %v3984
    %v3986 = vpop.xlane.xlu0 %3985
    %v3987 = vrsqrt.pop %v3986
    %v3988 = vmul.f32 %v3987, %v3986
    %v3989 = vmul.f32 %v3988, %v3987
    %v3990 = vmul.f32 0.5, %v3989
    %v3991 = vsub.f32 1.5, %v3990
    %v3992 = vmul.f32 %v3987, %v3991
    %v3993 = vmul.f32 %v3986, %v3992
    %vm3994 = vcmp.eq.f32.partialorder %v3986, inf
    %v3995 = vsel %vm3994, %v3986, %v3993
    %vm3996 = vcmp.eq.f32.partialorder %v3986, 0.0
    %v3997 = vand.u32 %v3986, 2147483648
    %v3998 = vsel %vm3996, %v3997, %v3995
    %v3999 = vmax.f32 %v3998, 1e-12
    %v4000 = vrcp.pop %v3999
    %v4001 = vmul.f32 %v3999, %v4000
    %v4002 = vsub.f32 1.0, %v4001
    %v4003 = vmul.f32 %v4000, %v4002
    %v4004 = vadd.f32 %v4000, %v4003
    %vm4005 = vweird.f32 %v3999
    %vm4006 = vweird.f32 %v4000
    %vm4007 = vmor %vm4005, %vm4006
    %v4008 = vsel %vm4007, %v4000, %v4004
    %v4009 = vand.u32 2147483647, %v3999
    %vm4010 = vcmp.eq.f32.partialorder %v4009, 8.507059e+37
    %v4011 = vand.u32 %v3999, 2147483648
    %v4012 = vor.u32 1.1754944e-38, %v4011
    %v4013 = vsel %vm4010, %v4012, %v4008
    %v4014 = vmul.f32 %v3980, %v4013
    %v4015 = vld [vmem:[%s25] sm:$0xff]
    %v4016 = vld [vmem:[%s25 + $0x8] sm:$0xff]
    %v4017 = vld [vmem:[%s25 + $0x10] sm:$0xff]
    %v4018 = vld [vmem:[%s25 + $0x18] sm:$0xff]
    %v4019 = vld [vmem:[%s25 + $0x20] sm:$0xff]
    %v4020 = vld [vmem:[%s25 + $0x28] sm:$0xff]
    %v4021 = vld [vmem:[%s25 + $0x30] sm:$0xff]
    %v4022 = vld [vmem:[%s25 + $0x38] sm:$0xff]
    %v4023 = vld [vmem:[%s25 + $0x40] sm:$0xff]
    %v4024 = vld [vmem:[%s25 + $0x48] sm:$0xff]
    %v4025 = vld [vmem:[%s25 + $0x50] sm:$0xff]
    %v4026 = vld [vmem:[%s25 + $0x58] sm:$0xff]
    %v4027 = vld [vmem:[%s25 + $0x60] sm:$0xff]
    %v4028 = vld [vmem:[%s25 + $0x68] sm:$0xff]
    %v4029 = vld [vmem:[%s25 + $0x70] sm:$0xff]
    %v4030 = vld [vmem:[%s25 + $0x78] sm:$0xff]
    %v4032 = vsel %vm690, %v4014, 0
    %4034 = vmatpush.msra.mxu0 0.0
    %4035 = vmatpush.msra.mxu0 0.0
    %4036 = vmatpush.msra.mxu0 0.0
    %4037 = vmatpush.msra.mxu0 0.0
    %4038 = vmatpush.msra.mxu0 0.0
    %4039 = vmatpush.msra.mxu0 0.0
    %4040 = vmatpush.msra.mxu0 0.0
    %4041 = vmatpush.msra.mxu0 0.0
    %4042 = vmatpush.msra.mxu0 %v4029
    %4043 = vmatpush.msra.mxu0 %v4027
    %4044 = vmatpush.msra.mxu0 %v4025
    %4045 = vmatpush.msra.mxu0 %v4023
    %4046 = vmatpush.msra.mxu0 %v4021
    %4047 = vmatpush.msra.mxu0 %v4019
    %4048 = vmatpush.msra.mxu0 %v4017
    %4049 = vmatpush.msra.mxu0 %v4015
    %4050 = vmatmul.f32.gmra.mxu0 %v4032
    %v4051 = vpop.f32.mrf.mxu0
    %v4052 = vadd.f32 0.0, %v4051
    %4053 = vdwg.mxu0
    %4054 = vmatpush.msra.mxu0 0.0
    %4055 = vmatpush.msra.mxu0 0.0
    %4056 = vmatpush.msra.mxu0 0.0
    %4057 = vmatpush.msra.mxu0 0.0
    %4058 = vmatpush.msra.mxu0 0.0
    %4059 = vmatpush.msra.mxu0 0.0
    %4060 = vmatpush.msra.mxu0 0.0
    %4061 = vmatpush.msra.mxu0 0.0
    %4062 = vmatpush.msra.mxu0 %v4030
    %4063 = vmatpush.msra.mxu0 %v4028
    %4064 = vmatpush.msra.mxu0 %v4026
    %4065 = vmatpush.msra.mxu0 %v4024
    %4066 = vmatpush.msra.mxu0 %v4022
    %4067 = vmatpush.msra.mxu0 %v4020
    %4068 = vmatpush.msra.mxu0 %v4018
    %4069 = vmatpush.msra.mxu0 %v4016
    %4070 = vmatmul.f32.gmra.mxu0 %v4032
    %v4071 = vpop.f32.mrf.mxu0
    %v4072 = vadd.f32 0.0, %v4071
    %4073 = vdwg.mxu0
    %vm4074 = vcmask 1041408
    %v4075 = vsel %vm4074, %v4052, -inf
    %v4076 = vsel %vm4074, %v4072, -inf
    %v4077 = vmax.f32 %v4075, %v4076
    %4078 = vmax.xlane.f32.xlu0 %v4077
    %v4079 = vpop.xlane.xlu0 %4078
    %v4080 = vsub.f32 %v4052, %v4079
    %v4081 = vsub.f32 %v4072, %v4079
    %v4082 = vmul.f32 %v4080, 1.442695
    %v4083 = vpow.pop %v4082
    %v4084 = vmul.f32 %v4081, 1.442695
    %v4085 = vpow.pop %v4084
    %v4086 = vsel %vm4074, %v4083, 0.0
    %v4087 = vsel %vm4074, %v4085, 0.0
    %v4088 = vadd.f32 %v4086, %v4087
    %4089 = vadd.xlane.f32.xlu0 %v4088
    %v4090 = vpop.xlane.xlu0 %4089
    %v4091 = vrcp.pop %v4090
    %v4092 = vmul.f32 %v4090, %v4091
    %v4093 = vsub.f32 1.0, %v4092
    %v4094 = vmul.f32 %v4091, %v4093
    %v4095 = vadd.f32 %v4091, %v4094
    %vm4096 = vweird.f32 %v4090
    %vm4097 = vweird.f32 %v4091
    %vm4098 = vmor %vm4096, %vm4097
    %v4099 = vsel %vm4098, %v4091, %v4095
    %v4100 = vand.u32 2147483647, %v4090
    %vm4101 = vcmp.eq.f32.partialorder %v4100, 8.507059e+37
    %v4102 = vand.u32 %v4090, 2147483648
    %v4103 = vor.u32 1.1754944e-38, %v4102
    %v4104 = vsel %vm4101, %v4103, %v4099
    %v4105 = vmul.f32 1.0, %v4104
    %vm4106 = vcmask 1024
    %4107 = vst.msk [vmem:[%s27] sm:$0x3] %vm4106, %v4105
    %v4108 = vlaneseq
    %v4109 = vand.u32 %v4108, 127
    %v4110 = vadd.s32 %v4109, 128
    %v4111 = vcvt.s32.f32 %v4109
    %v4112 = vcvt.s32.f32 %v4110
    %vm4113 = vcmp.ge.f32.partialorder %v4052, %v4079
    %vm4114 = vcmp.ge.f32.partialorder %v4072, %v4079
    %v4115 = vsel %vm4113, %v4111, 256.0
    %v4116 = vsel %vm4114, %v4112, 256.0
    %v4117 = vsel %vm4074, %v4115, inf
    %v4118 = vsel %vm4074, %v4116, inf
    %v4119 = vmin.f32 %v4117, %v4118
    %4120 = vmin.xlane.f32.xlu0 %v4119
    %v4121 = vpop.xlane.xlu0 %4120
    %v4122 = vcvt.f32.s32.to.zero.pseudo %v4121
    %4123 = vst.msk [vmem:[%s28] sm:$0x3] %vm4106, %v4122
    // Predicated region
    $region106: #{dolg_forward.1} parent=1 // pred_check
      _
    $region107: #{dolg_forward.1} parent=1 // pred_check_branch
      %4125 = sbr.rel (0) target = $region109
    $region108: #{dolg_forward.1} parent=1 // pred_region
      %4127 = vsyncadd [#allocation6], 0
      %s4129 = sshll.u32 [#allocation5], 4
      %s4130 = int_to_ptr.vmem [resolvable:$true] %s4129
      %s4131 = sshll.u32 %s26, 4
      %s4132 = int_to_ptr.hbm [resolvable:$true] %s4131
      %4134 = dma.vmem_to_hbm [thread:$0]  %s4130, 32, %s4132, [#allocation6]
    $region109: #{dolg_forward.1} parent=1 // pred_fallthru
      _
    // Predicated region
    $region110: #{dolg_forward.1} parent=1 // pred_check
      _
    $region111: #{dolg_forward.1} parent=1 // pred_check_branch
      %4136 = sbr.rel (0) target = $region113
    $region112: #{dolg_forward.1} parent=1 // pred_region
      _
    $region113: #{dolg_forward.1} parent=1 // pred_fallthru
      _
    // Predicated region
    $region114: #{dolg_forward.1} parent=1 // pred_check
      _
    $region115: #{dolg_forward.1} parent=1 // pred_check_branch
      %4138 = sbr.rel (0) target = $region117
    $region116: #{dolg_forward.1} parent=1 // pred_region
      _
    $region117: #{dolg_forward.1} parent=1 // pred_fallthru
      _
    // Predicated region
    $region118: #{dolg_forward.1} parent=1 // pred_check
      _
    $region119: #{dolg_forward.1} parent=1 // pred_check_branch
      %4140 = sbr.rel (0) target = $region121
    $region120: #{dolg_forward.1} parent=1 // pred_region
      %4142 = dma.done [#allocation6], 32
    $region121: #{dolg_forward.1} parent=1 // pred_fallthru
      _
    // Predicated region
    $region122: #{dolg_forward.1} parent=1 // pred_check
      _
    $region123: #{dolg_forward.1} parent=1 // pred_check_branch
      %4144 = sbr.rel (0) target = $region125
    $region124: #{dolg_forward.1} parent=1 // pred_region
      _
    $region125: #{dolg_forward.1} parent=1 // pred_fallthru
      _
    // Predicated region
    $region126: #{dolg_forward.1} parent=1 // pred_check
      _
    $region127: #{dolg_forward.1} parent=1 // pred_check_branch
      %4146 = sbr.rel (0) target = $region129
    $region128: #{dolg_forward.1} parent=1 // pred_region
      _
    $region129: #{dolg_forward.1} parent=1 // pred_fallthru
      _
    %4147 = vsyncpa [#allocation6], 1

</llo_original>
